<compile_context>
chip_gen: v5e
topology: v5e:2x2
jax: 0.10.0
libtpu: 0.0.40
codegen_flags: <defaults>
</compile_context>

<pallas_src>
import numpy as np
import jax
import jax.numpy as jnp
from jax.experimental import pallas as pl
from jax.experimental.pallas import tpu as pltpu


# --------------------------------------------------------------------------
# Fused Pallas kernel: embedding slab -> stacked biLSTM -> Linear+log_softmax
# --------------------------------------------------------------------------
def _make_stack_kernel(num_layers, T, B, E, H, TAGP):
    """Build the fused kernel for static (num_layers, T, B, E, H, TAGP)."""
    G = 4 * H  # gate width per direction (i|f|g|o)

    def kernel(*refs):
        # inputs: x, mask, [w_ih, bias, w_hh_f, w_hh_b] * L, w_line, b_line
        x_ref, mask_ref = refs[0], refs[1]
        lw = refs[2:2 + 4 * num_layers]
        w_line_ref = refs[2 + 4 * num_layers]
        b_line_ref = refs[3 + 4 * num_layers]
        out_ref = refs[4 + 4 * num_layers]          # (T*B, TAGP)
        xg_ref = refs[5 + 4 * num_layers]           # VMEM scratch (T*B, 8H)
        act_ref = refs[6 + 4 * num_layers]          # VMEM scratch (T*B, 2H)

        for layer in range(num_layers):
            wih_ref = lw[4 * layer + 0]             # (in_dim, 8H)  fwd|bwd
            b_ref = lw[4 * layer + 1]               # (1, 8H)       b_ih+b_hh
            whh_refs = (lw[4 * layer + 2], lw[4 * layer + 3])   # (H, 4H) each

            # Fused fwd+bwd input projection over the whole (T*B, in) slab.
            xin = x_ref[...] if layer == 0 else act_ref[...]
            xg_ref[...] = (jnp.dot(xin, wih_ref[...],
                                   preferred_element_type=jnp.float32)
                           + b_ref[...])

            for d in range(2):                      # 0 = forward, 1 = backward
                whh = whh_refs[d][...]              # vreg-resident across steps
                goff = d * G
                hoff = d * H
                tseq = range(T) if d == 0 else range(T - 1, -1, -1)

                h = jnp.zeros((B, H), jnp.float32)  # init_hidden() is zeros
                c = jnp.zeros((B, H), jnp.float32)
                for t in tseq:                      # fully unrolled recurrence
                    r0 = t * B                      # sublane-aligned (B == 8k)
                    gates = (xg_ref[r0:r0 + B, goff:goff + G]
                             + jnp.dot(h, whh,
                                       preferred_element_type=jnp.float32))
                    # PyTorch gate order i, f, g, o; one sigmoid over the slab.
                    sig = jax.nn.sigmoid(gates)
                    g_g = jnp.tanh(gates[:, 2 * H:3 * H])
                    c_new = sig[:, H:2 * H] * c + sig[:, 0:H] * g_g
                    h_new = sig[:, 3 * H:4 * H] * jnp.tanh(c_new)

                    # packed-sequence semantics: only rows with t < len update;
                    # backward chain therefore starts at t = len-1 per row.
                    valid = mask_ref[r0:r0 + B, :]          # (B, H) 0/1 float
                    h = valid * h_new + (1.0 - valid) * h
                    c = valid * c_new + (1.0 - valid) * c
                    # pad_packed_sequence zero-fills padded timesteps
                    act_ref[r0:r0 + B, hoff:hoff + H] = valid * h_new

        # Fused Linear + log_softmax over the lane-dense padded tag dimension.
        logits = (jnp.dot(act_ref[...], w_line_ref[...],
                          preferred_element_type=jnp.float32) + b_line_ref[...])
        m = jnp.max(logits, axis=-1, keepdims=True)
        lse = jnp.log(jnp.sum(jnp.exp(logits - m), axis=-1, keepdims=True)) + m
        out_ref[...] = logits - lse

    return kernel


# --------------------------------------------------------------------------
# Model (parameter setup + host-side ragged bookkeeping; compute = 1 kernel)
# --------------------------------------------------------------------------
class LSTMforNerPallas:
    def __init__(self, embedding_dim, hidden_dim, vocab_size, tagset_size,
                 num_layers, key):
        self.embedding_dim = embedding_dim
        self.hidden_dim = hidden_dim
        self.vocab_size = vocab_size
        self.tagset_size = tagset_size
        self.num_layers = num_layers

        keys = iter(jax.random.split(key, 64))
        H = hidden_dim
        k_lstm = 1.0 / np.sqrt(H)

        def u(shape, k):
            return jax.random.uniform(next(keys), shape, jnp.float32, -k, k)

        # nn.Embedding: N(0, 1)
        self.emb = jax.random.normal(next(keys),
                                     (vocab_size, embedding_dim),
                                     dtype=jnp.float32)

        # Bidirectional multi-layer LSTM params, U(-1/sqrt(H), 1/sqrt(H)).
        # Stored transposed & direction-fused: w_ih (in_dim, 8H) = [fwd | bwd].
        self.lstm = []
        for layer in range(num_layers):
            in_dim = embedding_dim if layer == 0 else 2 * hidden_dim
            w_ih_f = u((in_dim, 4 * H), k_lstm)
            w_ih_b = u((in_dim, 4 * H), k_lstm)
            w_hh_f = u((H, 4 * H), k_lstm)
            w_hh_b = u((H, 4 * H), k_lstm)
            b_f = u((4 * H,), k_lstm) + u((4 * H,), k_lstm)   # b_ih + b_hh
            b_b = u((4 * H,), k_lstm) + u((4 * H,), k_lstm)
            self.lstm.append({
                "w_ih": jnp.concatenate([w_ih_f, w_ih_b], axis=1),
                "bias": jnp.concatenate([b_f, b_b]).reshape(1, 8 * H),
                "w_hh_f": w_hh_f,
                "w_hh_b": w_hh_b,
            })

        # nn.Linear(2H, tagset): U(-1/sqrt(2H), 1/sqrt(2H)); stored (2H, TAGP)
        # with the tag dim zero-padded to a lane-dense multiple of 128 and the
        # padded bias entries at -1e30 so log_softmax / argmax are unaffected.
        k_lin = 1.0 / np.sqrt(2 * H)
        self._tagp = max(128, ((tagset_size + 127) // 128) * 128)
        w = u((2 * H, tagset_size), k_lin)
        b = u((tagset_size,), k_lin)
        self.w_line = jnp.zeros((2 * H, self._tagp),
                                jnp.float32).at[:, :tagset_size].set(w)
        self.b_line = jnp.full((1, self._tagp), -1e30,
                               jnp.float32).at[0, :tagset_size].set(b)

    def forward(self, x_list, y_list):
        H = self.hidden_dim
        E = self.embedding_dim

        # ---- ragged-input bookkeeping (matches the torch sort/pad loop) ----
        lengths = np.array([len(s) for s in x_list], dtype=np.int32)
        T = int(lengths.max())
        order = np.argsort(-lengths, kind="stable")      # descending, stable
        B0 = len(x_list)
        B = int(np.ceil(B0 / 8.0) * 8)                   # pad batch to 8 sublanes

        ids_tm = np.zeros((T, B), dtype=np.int32)        # time-major tokens
        oldy_np = np.zeros((B0, T), dtype=np.int32)
        sorted_len = np.zeros((B,), dtype=np.int32)
        for i, idx in enumerate(order):
            L = int(lengths[idx])
            ids_tm[:L, i] = x_list[idx]
            oldy_np[i, :L] = y_list[idx]
            sorted_len[i] = L

        # validity mask, flat time-major (T*B, H) float {0,1}
        mask_tm = (np.arange(T)[:, None] < sorted_len[None, :]).astype(np.float32)
        mask2d = jnp.asarray(np.repeat(mask_tm.reshape(T * B, 1), H, axis=1))

        ids = jnp.asarray(ids_tm)                        # (T, B)
        oldy = jnp.asarray(oldy_np)                      # (B0, T)
        lens = jnp.asarray(sorted_len[:B0])              # (B0,)

        # ---- embedding lookup (glue gather), flattened time-major ----
        x2d = jnp.take(self.emb, ids.reshape(T * B), axis=0)   # (T*B, E)

        # ---- single fused Pallas call: LSTM stack + classifier ----
        args = [x2d, mask2d]
        for p in self.lstm:
            args += [p["w_ih"], p["bias"], p["w_hh_f"], p["w_hh_b"]]
        args += [self.w_line, self.b_line]

        kernel = _make_stack_kernel(self.num_layers, T, B, E, H, self._tagp)
        out = pl.pallas_call(
            kernel,
            out_shape=jax.ShapeDtypeStruct((T * B, self._tagp), jnp.float32),
            scratch_shapes=[pltpu.VMEM((T * B, 8 * H), jnp.float32),   # gates
                            pltpu.VMEM((T * B, 2 * H), jnp.float32)],  # acts
        )(*args)

        tag_full = out.reshape(T, B, self._tagp)
        tag_score = jnp.transpose(tag_full, (1, 0, 2))[:B0, :, :self.tagset_size]

        # ---- accuracy over valid positions (tiny reduction, plain JAX) ----
        t_idx = jnp.arange(T, dtype=jnp.int32)[None, :]
        vmask = t_idx < lens[:, None]
        pred = jnp.argmax(tag_score, axis=2).astype(jnp.int32)
        eq = jnp.logical_and(pred == oldy, vmask)
        acc = jnp.sum(eq, axis=1).astype(jnp.float32) / lens.astype(jnp.float32)

        return tag_score, lens, oldy, acc


# --------------------------------------------------------------------------
if __name__ == "__main__":
    EMBEDDING_DIM = 32
    HIDDEN_DIM = 32
    VOCAB_SIZE = 50
    TAGSET_SIZE = 8
    NUM_LAYERS = 2

    key = jax.random.PRNGKey(0)
    k_model, k_tok, k_lab = jax.random.split(key, 3)

    model = LSTMforNerPallas(EMBEDDING_DIM, HIDDEN_DIM, VOCAB_SIZE,
                             TAGSET_SIZE, NUM_LAYERS, k_model)

    # small ragged batch of 4 sentences (max length 8)
    seq_lens = [8, 5, 7, 3]
    max_len = max(seq_lens)
    tok = np.asarray(jax.random.randint(k_tok, (len(seq_lens), max_len),
                                        1, VOCAB_SIZE, dtype=jnp.int32))
    lab = np.asarray(jax.random.randint(k_lab, (len(seq_lens), max_len),
                                        0, TAGSET_SIZE, dtype=jnp.int32))
    x_list = [tok[i, :L].tolist() for i, L in enumerate(seq_lens)]
    y_list = [lab[i, :L].tolist() for i, L in enumerate(seq_lens)]

    tag_score, length, oldy, acc = model.forward(x_list, y_list)
    jax.block_until_ready(tag_score)
    jax.block_until_ready(acc)

    assert tag_score.shape == (len(seq_lens), max_len, TAGSET_SIZE)
    assert acc.shape == (len(seq_lens),)
    assert bool(jnp.all(jnp.isfinite(tag_score)))
    # log_softmax sanity: real-tag probabilities sum to 1 (padded lanes ~= 0)
    prob_sum = jnp.sum(jnp.exp(tag_score), axis=-1)
    assert bool(jnp.all(jnp.abs(prob_sum - 1.0) < 1e-3))
    print("KERNEL_OK")
</pallas_src>

<mosaic_0001>
module attributes {stable_mosaic.version = 11 : i64} {
  func.func @kernel(%arg0: memref<64x32xf32, #tpu.memory_space<vmem>>, %arg1: memref<64x32xf32, #tpu.memory_space<vmem>>, %arg2: memref<32x256xf32, #tpu.memory_space<vmem>>, %arg3: memref<1x256xf32, #tpu.memory_space<vmem>>, %arg4: memref<32x128xf32, #tpu.memory_space<vmem>>, %arg5: memref<32x128xf32, #tpu.memory_space<vmem>>, %arg6: memref<64x256xf32, #tpu.memory_space<vmem>>, %arg7: memref<1x256xf32, #tpu.memory_space<vmem>>, %arg8: memref<32x128xf32, #tpu.memory_space<vmem>>, %arg9: memref<32x128xf32, #tpu.memory_space<vmem>>, %arg10: memref<64x128xf32, #tpu.memory_space<vmem>>, %arg11: memref<1x128xf32, #tpu.memory_space<vmem>>, %arg12: memref<64x128xf32, #tpu.memory_space<vmem>>, %arg13: memref<64x256xf32, #tpu.memory_space<vmem>>, %arg14: memref<64x64xf32, #tpu.memory_space<vmem>>) attributes {dimension_semantics = [], scalar_prefetch = 0 : i64, scratch_operands = 2 : i64, tpu.core_type = #tpu.core_type<tc>} {
    %c0 = arith.constant 0 : index
    %c0_0 = arith.constant 0 : index
    %0 = vector.load %arg0[%c0, %c0_0] : memref<64x32xf32, #tpu.memory_space<vmem>>, vector<64x32xf32>
    %c0_1 = arith.constant 0 : index
    %c0_2 = arith.constant 0 : index
    %1 = vector.load %arg2[%c0_1, %c0_2] : memref<32x256xf32, #tpu.memory_space<vmem>>, vector<32x256xf32>
    %cst = arith.constant dense<0.000000e+00> : vector<64x256xf32>
    %2 = tpu.matmul %0, %1, %cst {dimension_numbers = #tpu.dot_dimension_numbers<[1], [0], [0], [1], [0, 0, 1, 1], [], []>} : vector<64x32xf32>, vector<32x256xf32>, vector<64x256xf32> -> vector<64x256xf32>
    %c0_3 = arith.constant 0 : index
    %c0_4 = arith.constant 0 : index
    %3 = vector.load %arg3[%c0_3, %c0_4] : memref<1x256xf32, #tpu.memory_space<vmem>>, vector<1x256xf32>
    %4 = vector.broadcast %3 : vector<1x256xf32> to vector<64x256xf32>
    %5 = arith.addf %2, %4 : vector<64x256xf32>
    %c0_5 = arith.constant 0 : index
    %c0_6 = arith.constant 0 : index
    %6 = vector.load %arg13[%c0_5, %c0_6] : memref<64x256xf32, #tpu.memory_space<vmem>>, vector<64x256xf32>
    tpu.vector_store %arg13[%c0_5, %c0_6], %5 {strides = array<i32>} : memref<64x256xf32, #tpu.memory_space<vmem>>, vector<64x256xf32>,
    %c0_7 = arith.constant 0 : index
    %c0_8 = arith.constant 0 : index
    %7 = vector.load %arg4[%c0_7, %c0_8] : memref<32x128xf32, #tpu.memory_space<vmem>>, vector<32x128xf32>
    %cst_9 = arith.constant 0.000000e+00 : f32
    %8 = vector.broadcast %cst_9 : f32 to vector<8x32xf32>
    %cst_10 = arith.constant 0.000000e+00 : f32
    %9 = vector.broadcast %cst_10 : f32 to vector<8x32xf32>
    %c0_11 = arith.constant 0 : index
    %c0_12 = arith.constant 0 : index
    %10 = vector.load %arg13[%c0_11, %c0_12] : memref<64x256xf32, #tpu.memory_space<vmem>>, vector<8x128xf32>
    %cst_13 = arith.constant dense<0.000000e+00> : vector<8x128xf32>
    %11 = tpu.matmul %8, %7, %cst_13 {dimension_numbers = #tpu.dot_dimension_numbers<[1], [0], [0], [1], [0, 0, 1, 1], [], []>} : vector<8x32xf32>, vector<32x128xf32>, vector<8x128xf32> -> vector<8x128xf32>
    %12 = arith.addf %10, %11 : vector<8x128xf32>
    %13 = arith.negf %12 : vector<8x128xf32>
    %14 = math.exp %13 : vector<8x128xf32>
    %cst_14 = arith.constant 1.000000e+00 : f32
    %15 = vector.broadcast %cst_14 : f32 to vector<8x128xf32>
    %16 = arith.addf %15, %14 : vector<8x128xf32>
    %17 = arith.divf %15, %16 : vector<8x128xf32>
    %18 = vector.extract_strided_slice %12 {offsets = [0, 64], sizes = [8, 32], strides = [1, 1]} : vector<8x128xf32> to vector<8x32xf32>
    %19 = math.tanh %18 : vector<8x32xf32>
    %20 = vector.extract_strided_slice %17 {offsets = [0, 32], sizes = [8, 32], strides = [1, 1]} : vector<8x128xf32> to vector<8x32xf32>
    %21 = arith.mulf %20, %9 : vector<8x32xf32>
    %22 = vector.extract_strided_slice %17 {offsets = [0, 0], sizes = [8, 32], strides = [1, 1]} : vector<8x128xf32> to vector<8x32xf32>
    %23 = arith.mulf %22, %19 : vector<8x32xf32>
    %24 = arith.addf %21, %23 : vector<8x32xf32>
    %25 = vector.extract_strided_slice %17 {offsets = [0, 96], sizes = [8, 32], strides = [1, 1]} : vector<8x128xf32> to vector<8x32xf32>
    %26 = math.tanh %24 : vector<8x32xf32>
    %27 = arith.mulf %25, %26 : vector<8x32xf32>
    %c0_15 = arith.constant 0 : index
    %c0_16 = arith.constant 0 : index
    %28 = vector.load %arg1[%c0_15, %c0_16] : memref<64x32xf32, #tpu.memory_space<vmem>>, vector<8x32xf32>
    %29 = arith.mulf %28, %27 : vector<8x32xf32>
    %cst_17 = arith.constant 1.000000e+00 : f32
    %30 = vector.broadcast %cst_17 : f32 to vector<8x32xf32>
    %31 = arith.subf %30, %28 : vector<8x32xf32>
    %32 = arith.mulf %31, %8 : vector<8x32xf32>
    %33 = arith.addf %29, %32 : vector<8x32xf32>
    %34 = arith.mulf %28, %24 : vector<8x32xf32>
    %cst_18 = arith.constant 1.000000e+00 : f32
    %35 = vector.broadcast %cst_18 : f32 to vector<8x32xf32>
    %36 = arith.subf %35, %28 : vector<8x32xf32>
    %37 = arith.mulf %36, %9 : vector<8x32xf32>
    %38 = arith.addf %34, %37 : vector<8x32xf32>
    %39 = arith.mulf %28, %27 : vector<8x32xf32>
    %c0_19 = arith.constant 0 : index
    %c0_20 = arith.constant 0 : index
    %40 = vector.load %arg14[%c0_19, %c0_20] : memref<64x64xf32, #tpu.memory_space<vmem>>, vector<8x32xf32>
    tpu.vector_store %arg14[%c0_19, %c0_20], %39 {strides = array<i32>} : memref<64x64xf32, #tpu.memory_space<vmem>>, vector<8x32xf32>,
    %c8 = arith.constant 8 : index
    %c0_21 = arith.constant 0 : index
    %41 = vector.load %arg13[%c8, %c0_21] : memref<64x256xf32, #tpu.memory_space<vmem>>, vector<8x128xf32>
    %cst_22 = arith.constant dense<0.000000e+00> : vector<8x128xf32>
    %42 = tpu.matmul %33, %7, %cst_22 {dimension_numbers = #tpu.dot_dimension_numbers<[1], [0], [0], [1], [0, 0, 1, 1], [], []>} : vector<8x32xf32>, vector<32x128xf32>, vector<8x128xf32> -> vector<8x128xf32>
    %43 = arith.addf %41, %42 : vector<8x128xf32>
    %44 = arith.negf %43 : vector<8x128xf32>
    %45 = math.exp %44 : vector<8x128xf32>
    %cst_23 = arith.constant 1.000000e+00 : f32
    %46 = vector.broadcast %cst_23 : f32 to vector<8x128xf32>
    %47 = arith.addf %46, %45 : vector<8x128xf32>
    %48 = arith.divf %46, %47 : vector<8x128xf32>
    %49 = vector.extract_strided_slice %43 {offsets = [0, 64], sizes = [8, 32], strides = [1, 1]} : vector<8x128xf32> to vector<8x32xf32>
    %50 = math.tanh %49 : vector<8x32xf32>
    %51 = vector.extract_strided_slice %48 {offsets = [0, 32], sizes = [8, 32], strides = [1, 1]} : vector<8x128xf32> to vector<8x32xf32>
    %52 = arith.mulf %51, %38 : vector<8x32xf32>
    %53 = vector.extract_strided_slice %48 {offsets = [0, 0], sizes = [8, 32], strides = [1, 1]} : vector<8x128xf32> to vector<8x32xf32>
    %54 = arith.mulf %53, %50 : vector<8x32xf32>
    %55 = arith.addf %52, %54 : vector<8x32xf32>
    %56 = vector.extract_strided_slice %48 {offsets = [0, 96], sizes = [8, 32], strides = [1, 1]} : vector<8x128xf32> to vector<8x32xf32>
    %57 = math.tanh %55 : vector<8x32xf32>
    %58 = arith.mulf %56, %57 : vector<8x32xf32>
    %c8_24 = arith.constant 8 : index
    %c0_25 = arith.constant 0 : index
    %59 = vector.load %arg1[%c8_24, %c0_25] : memref<64x32xf32, #tpu.memory_space<vmem>>, vector<8x32xf32>
    %60 = arith.mulf %59, %58 : vector<8x32xf32>
    %cst_26 = arith.constant 1.000000e+00 : f32
    %61 = vector.broadcast %cst_26 : f32 to vector<8x32xf32>
    %62 = arith.subf %61, %59 : vector<8x32xf32>
    %63 = arith.mulf %62, %33 : vector<8x32xf32>
    %64 = arith.addf %60, %63 : vector<8x32xf32>
    %65 = arith.mulf %59, %55 : vector<8x32xf32>
    %cst_27 = arith.constant 1.000000e+00 : f32
    %66 = vector.broadcast %cst_27 : f32 to vector<8x32xf32>
    %67 = arith.subf %66, %59 : vector<8x32xf32>
    %68 = arith.mulf %67, %38 : vector<8x32xf32>
    %69 = arith.addf %65, %68 : vector<8x32xf32>
    %70 = arith.mulf %59, %58 : vector<8x32xf32>
    %c8_28 = arith.constant 8 : index
    %c0_29 = arith.constant 0 : index
    %71 = vector.load %arg14[%c8_28, %c0_29] : memref<64x64xf32, #tpu.memory_space<vmem>>, vector<8x32xf32>
    tpu.vector_store %arg14[%c8_28, %c0_29], %70 {strides = array<i32>} : memref<64x64xf32, #tpu.memory_space<vmem>>, vector<8x32xf32>,
    %c16 = arith.constant 16 : index
    %c0_30 = arith.constant 0 : index
    %72 = vector.load %arg13[%c16, %c0_30] : memref<64x256xf32, #tpu.memory_space<vmem>>, vector<8x128xf32>
    %cst_31 = arith.constant dense<0.000000e+00> : vector<8x128xf32>
    %73 = tpu.matmul %64, %7, %cst_31 {dimension_numbers = #tpu.dot_dimension_numbers<[1], [0], [0], [1], [0, 0, 1, 1], [], []>} : vector<8x32xf32>, vector<32x128xf32>, vector<8x128xf32> -> vector<8x128xf32>
    %74 = arith.addf %72, %73 : vector<8x128xf32>
    %75 = arith.negf %74 : vector<8x128xf32>
    %76 = math.exp %75 : vector<8x128xf32>
    %cst_32 = arith.constant 1.000000e+00 : f32
    %77 = vector.broadcast %cst_32 : f32 to vector<8x128xf32>
    %78 = arith.addf %77, %76 : vector<8x128xf32>
    %79 = arith.divf %77, %78 : vector<8x128xf32>
    %80 = vector.extract_strided_slice %74 {offsets = [0, 64], sizes = [8, 32], strides = [1, 1]} : vector<8x128xf32> to vector<8x32xf32>
    %81 = math.tanh %80 : vector<8x32xf32>
    %82 = vector.extract_strided_slice %79 {offsets = [0, 32], sizes = [8, 32], strides = [1, 1]} : vector<8x128xf32> to vector<8x32xf32>
    %83 = arith.mulf %82, %69 : vector<8x32xf32>
    %84 = vector.extract_strided_slice %79 {offsets = [0, 0], sizes = [8, 32], strides = [1, 1]} : vector<8x128xf32> to vector<8x32xf32>
    %85 = arith.mulf %84, %81 : vector<8x32xf32>
    %86 = arith.addf %83, %85 : vector<8x32xf32>
    %87 = vector.extract_strided_slice %79 {offsets = [0, 96], sizes = [8, 32], strides = [1, 1]} : vector<8x128xf32> to vector<8x32xf32>
    %88 = math.tanh %86 : vector<8x32xf32>
    %89 = arith.mulf %87, %88 : vector<8x32xf32>
    %c16_33 = arith.constant 16 : index
    %c0_34 = arith.constant 0 : index
    %90 = vector.load %arg1[%c16_33, %c0_34] : memref<64x32xf32, #tpu.memory_space<vmem>>, vector<8x32xf32>
    %91 = arith.mulf %90, %89 : vector<8x32xf32>
    %cst_35 = arith.constant 1.000000e+00 : f32
    %92 = vector.broadcast %cst_35 : f32 to vector<8x32xf32>
    %93 = arith.subf %92, %90 : vector<8x32xf32>
    %94 = arith.mulf %93, %64 : vector<8x32xf32>
    %95 = arith.addf %91, %94 : vector<8x32xf32>
    %96 = arith.mulf %90, %86 : vector<8x32xf32>
    %cst_36 = arith.constant 1.000000e+00 : f32
    %97 = vector.broadcast %cst_36 : f32 to vector<8x32xf32>
    %98 = arith.subf %97, %90 : vector<8x32xf32>
    %99 = arith.mulf %98, %69 : vector<8x32xf32>
    %100 = arith.addf %96, %99 : vector<8x32xf32>
    %101 = arith.mulf %90, %89 : vector<8x32xf32>
    %c16_37 = arith.constant 16 : index
    %c0_38 = arith.constant 0 : index
    %102 = vector.load %arg14[%c16_37, %c0_38] : memref<64x64xf32, #tpu.memory_space<vmem>>, vector<8x32xf32>
    tpu.vector_store %arg14[%c16_37, %c0_38], %101 {strides = array<i32>} : memref<64x64xf32, #tpu.memory_space<vmem>>, vector<8x32xf32>,
    %c24 = arith.constant 24 : index
    %c0_39 = arith.constant 0 : index
    %103 = vector.load %arg13[%c24, %c0_39] : memref<64x256xf32, #tpu.memory_space<vmem>>, vector<8x128xf32>
    %cst_40 = arith.constant dense<0.000000e+00> : vector<8x128xf32>
    %104 = tpu.matmul %95, %7, %cst_40 {dimension_numbers = #tpu.dot_dimension_numbers<[1], [0], [0], [1], [0, 0, 1, 1], [], []>} : vector<8x32xf32>, vector<32x128xf32>, vector<8x128xf32> -> vector<8x128xf32>
    %105 = arith.addf %103, %104 : vector<8x128xf32>
    %106 = arith.negf %105 : vector<8x128xf32>
    %107 = math.exp %106 : vector<8x128xf32>
    %cst_41 = arith.constant 1.000000e+00 : f32
    %108 = vector.broadcast %cst_41 : f32 to vector<8x128xf32>
    %109 = arith.addf %108, %107 : vector<8x128xf32>
    %110 = arith.divf %108, %109 : vector<8x128xf32>
    %111 = vector.extract_strided_slice %105 {offsets = [0, 64], sizes = [8, 32], strides = [1, 1]} : vector<8x128xf32> to vector<8x32xf32>
    %112 = math.tanh %111 : vector<8x32xf32>
    %113 = vector.extract_strided_slice %110 {offsets = [0, 32], sizes = [8, 32], strides = [1, 1]} : vector<8x128xf32> to vector<8x32xf32>
    %114 = arith.mulf %113, %100 : vector<8x32xf32>
    %115 = vector.extract_strided_slice %110 {offsets = [0, 0], sizes = [8, 32], strides = [1, 1]} : vector<8x128xf32> to vector<8x32xf32>
    %116 = arith.mulf %115, %112 : vector<8x32xf32>
    %117 = arith.addf %114, %116 : vector<8x32xf32>
    %118 = vector.extract_strided_slice %110 {offsets = [0, 96], sizes = [8, 32], strides = [1, 1]} : vector<8x128xf32> to vector<8x32xf32>
    %119 = math.tanh %117 : vector<8x32xf32>
    %120 = arith.mulf %118, %119 : vector<8x32xf32>
    %c24_42 = arith.constant 24 : index
    %c0_43 = arith.constant 0 : index
    %121 = vector.load %arg1[%c24_42, %c0_43] : memref<64x32xf32, #tpu.memory_space<vmem>>, vector<8x32xf32>
    %122 = arith.mulf %121, %120 : vector<8x32xf32>
    %cst_44 = arith.constant 1.000000e+00 : f32
    %123 = vector.broadcast %cst_44 : f32 to vector<8x32xf32>
    %124 = arith.subf %123, %121 : vector<8x32xf32>
    %125 = arith.mulf %124, %95 : vector<8x32xf32>
    %126 = arith.addf %122, %125 : vector<8x32xf32>
    %127 = arith.mulf %121, %117 : vector<8x32xf32>
    %cst_45 = arith.constant 1.000000e+00 : f32
    %128 = vector.broadcast %cst_45 : f32 to vector<8x32xf32>
    %129 = arith.subf %128, %121 : vector<8x32xf32>
    %130 = arith.mulf %129, %100 : vector<8x32xf32>
    %131 = arith.addf %127, %130 : vector<8x32xf32>
    %132 = arith.mulf %121, %120 : vector<8x32xf32>
    %c24_46 = arith.constant 24 : index
    %c0_47 = arith.constant 0 : index
    %133 = vector.load %arg14[%c24_46, %c0_47] : memref<64x64xf32, #tpu.memory_space<vmem>>, vector<8x32xf32>
    tpu.vector_store %arg14[%c24_46, %c0_47], %132 {strides = array<i32>} : memref<64x64xf32, #tpu.memory_space<vmem>>, vector<8x32xf32>,
    %c32 = arith.constant 32 : index
    %c0_48 = arith.constant 0 : index
    %134 = vector.load %arg13[%c32, %c0_48] : memref<64x256xf32, #tpu.memory_space<vmem>>, vector<8x128xf32>
    %cst_49 = arith.constant dense<0.000000e+00> : vector<8x128xf32>
    %135 = tpu.matmul %126, %7, %cst_49 {dimension_numbers = #tpu.dot_dimension_numbers<[1], [0], [0], [1], [0, 0, 1, 1], [], []>} : vector<8x32xf32>, vector<32x128xf32>, vector<8x128xf32> -> vector<8x128xf32>
    %136 = arith.addf %134, %135 : vector<8x128xf32>
    %137 = arith.negf %136 : vector<8x128xf32>
    %138 = math.exp %137 : vector<8x128xf32>
    %cst_50 = arith.constant 1.000000e+00 : f32
    %139 = vector.broadcast %cst_50 : f32 to vector<8x128xf32>
    %140 = arith.addf %139, %138 : vector<8x128xf32>
    %141 = arith.divf %139, %140 : vector<8x128xf32>
    %142 = vector.extract_strided_slice %136 {offsets = [0, 64], sizes = [8, 32], strides = [1, 1]} : vector<8x128xf32> to vector<8x32xf32>
    %143 = math.tanh %142 : vector<8x32xf32>
    %144 = vector.extract_strided_slice %141 {offsets = [0, 32], sizes = [8, 32], strides = [1, 1]} : vector<8x128xf32> to vector<8x32xf32>
    %145 = arith.mulf %144, %131 : vector<8x32xf32>
    %146 = vector.extract_strided_slice %141 {offsets = [0, 0], sizes = [8, 32], strides = [1, 1]} : vector<8x128xf32> to vector<8x32xf32>
    %147 = arith.mulf %146, %143 : vector<8x32xf32>
    %148 = arith.addf %145, %147 : vector<8x32xf32>
    %149 = vector.extract_strided_slice %141 {offsets = [0, 96], sizes = [8, 32], strides = [1, 1]} : vector<8x128xf32> to vector<8x32xf32>
    %150 = math.tanh %148 : vector<8x32xf32>
    %151 = arith.mulf %149, %150 : vector<8x32xf32>
    %c32_51 = arith.constant 32 : index
    %c0_52 = arith.constant 0 : index
    %152 = vector.load %arg1[%c32_51, %c0_52] : memref<64x32xf32, #tpu.memory_space<vmem>>, vector<8x32xf32>
    %153 = arith.mulf %152, %151 : vector<8x32xf32>
    %cst_53 = arith.constant 1.000000e+00 : f32
    %154 = vector.broadcast %cst_53 : f32 to vector<8x32xf32>
    %155 = arith.subf %154, %152 : vector<8x32xf32>
    %156 = arith.mulf %155, %126 : vector<8x32xf32>
    %157 = arith.addf %153, %156 : vector<8x32xf32>
    %158 = arith.mulf %152, %148 : vector<8x32xf32>
    %cst_54 = arith.constant 1.000000e+00 : f32
    %159 = vector.broadcast %cst_54 : f32 to vector<8x32xf32>
    %160 = arith.subf %159, %152 : vector<8x32xf32>
    %161 = arith.mulf %160, %131 : vector<8x32xf32>
    %162 = arith.addf %158, %161 : vector<8x32xf32>
    %163 = arith.mulf %152, %151 : vector<8x32xf32>
    %c32_55 = arith.constant 32 : index
    %c0_56 = arith.constant 0 : index
    %164 = vector.load %arg14[%c32_55, %c0_56] : memref<64x64xf32, #tpu.memory_space<vmem>>, vector<8x32xf32>
    tpu.vector_store %arg14[%c32_55, %c0_56], %163 {strides = array<i32>} : memref<64x64xf32, #tpu.memory_space<vmem>>, vector<8x32xf32>,
    %c40 = arith.constant 40 : index
    %c0_57 = arith.constant 0 : index
    %165 = vector.load %arg13[%c40, %c0_57] : memref<64x256xf32, #tpu.memory_space<vmem>>, vector<8x128xf32>
    %cst_58 = arith.constant dense<0.000000e+00> : vector<8x128xf32>
    %166 = tpu.matmul %157, %7, %cst_58 {dimension_numbers = #tpu.dot_dimension_numbers<[1], [0], [0], [1], [0, 0, 1, 1], [], []>} : vector<8x32xf32>, vector<32x128xf32>, vector<8x128xf32> -> vector<8x128xf32>
    %167 = arith.addf %165, %166 : vector<8x128xf32>
    %168 = arith.negf %167 : vector<8x128xf32>
    %169 = math.exp %168 : vector<8x128xf32>
    %cst_59 = arith.constant 1.000000e+00 : f32
    %170 = vector.broadcast %cst_59 : f32 to vector<8x128xf32>
    %171 = arith.addf %170, %169 : vector<8x128xf32>
    %172 = arith.divf %170, %171 : vector<8x128xf32>
    %173 = vector.extract_strided_slice %167 {offsets = [0, 64], sizes = [8, 32], strides = [1, 1]} : vector<8x128xf32> to vector<8x32xf32>
    %174 = math.tanh %173 : vector<8x32xf32>
    %175 = vector.extract_strided_slice %172 {offsets = [0, 32], sizes = [8, 32], strides = [1, 1]} : vector<8x128xf32> to vector<8x32xf32>
    %176 = arith.mulf %175, %162 : vector<8x32xf32>
    %177 = vector.extract_strided_slice %172 {offsets = [0, 0], sizes = [8, 32], strides = [1, 1]} : vector<8x128xf32> to vector<8x32xf32>
    %178 = arith.mulf %177, %174 : vector<8x32xf32>
    %179 = arith.addf %176, %178 : vector<8x32xf32>
    %180 = vector.extract_strided_slice %172 {offsets = [0, 96], sizes = [8, 32], strides = [1, 1]} : vector<8x128xf32> to vector<8x32xf32>
    %181 = math.tanh %179 : vector<8x32xf32>
    %182 = arith.mulf %180, %181 : vector<8x32xf32>
    %c40_60 = arith.constant 40 : index
    %c0_61 = arith.constant 0 : index
    %183 = vector.load %arg1[%c40_60, %c0_61] : memref<64x32xf32, #tpu.memory_space<vmem>>, vector<8x32xf32>
    %184 = arith.mulf %183, %182 : vector<8x32xf32>
    %cst_62 = arith.constant 1.000000e+00 : f32
    %185 = vector.broadcast %cst_62 : f32 to vector<8x32xf32>
    %186 = arith.subf %185, %183 : vector<8x32xf32>
    %187 = arith.mulf %186, %157 : vector<8x32xf32>
    %188 = arith.addf %184, %187 : vector<8x32xf32>
    %189 = arith.mulf %183, %179 : vector<8x32xf32>
    %cst_63 = arith.constant 1.000000e+00 : f32
    %190 = vector.broadcast %cst_63 : f32 to vector<8x32xf32>
    %191 = arith.subf %190, %183 : vector<8x32xf32>
    %192 = arith.mulf %191, %162 : vector<8x32xf32>
    %193 = arith.addf %189, %192 : vector<8x32xf32>
    %194 = arith.mulf %183, %182 : vector<8x32xf32>
    %c40_64 = arith.constant 40 : index
    %c0_65 = arith.constant 0 : index
    %195 = vector.load %arg14[%c40_64, %c0_65] : memref<64x64xf32, #tpu.memory_space<vmem>>, vector<8x32xf32>
    tpu.vector_store %arg14[%c40_64, %c0_65], %194 {strides = array<i32>} : memref<64x64xf32, #tpu.memory_space<vmem>>, vector<8x32xf32>,
    %c48 = arith.constant 48 : index
    %c0_66 = arith.constant 0 : index
    %196 = vector.load %arg13[%c48, %c0_66] : memref<64x256xf32, #tpu.memory_space<vmem>>, vector<8x128xf32>
    %cst_67 = arith.constant dense<0.000000e+00> : vector<8x128xf32>
    %197 = tpu.matmul %188, %7, %cst_67 {dimension_numbers = #tpu.dot_dimension_numbers<[1], [0], [0], [1], [0, 0, 1, 1], [], []>} : vector<8x32xf32>, vector<32x128xf32>, vector<8x128xf32> -> vector<8x128xf32>
    %198 = arith.addf %196, %197 : vector<8x128xf32>
    %199 = arith.negf %198 : vector<8x128xf32>
    %200 = math.exp %199 : vector<8x128xf32>
    %cst_68 = arith.constant 1.000000e+00 : f32
    %201 = vector.broadcast %cst_68 : f32 to vector<8x128xf32>
    %202 = arith.addf %201, %200 : vector<8x128xf32>
    %203 = arith.divf %201, %202 : vector<8x128xf32>
    %204 = vector.extract_strided_slice %198 {offsets = [0, 64], sizes = [8, 32], strides = [1, 1]} : vector<8x128xf32> to vector<8x32xf32>
    %205 = math.tanh %204 : vector<8x32xf32>
    %206 = vector.extract_strided_slice %203 {offsets = [0, 32], sizes = [8, 32], strides = [1, 1]} : vector<8x128xf32> to vector<8x32xf32>
    %207 = arith.mulf %206, %193 : vector<8x32xf32>
    %208 = vector.extract_strided_slice %203 {offsets = [0, 0], sizes = [8, 32], strides = [1, 1]} : vector<8x128xf32> to vector<8x32xf32>
    %209 = arith.mulf %208, %205 : vector<8x32xf32>
    %210 = arith.addf %207, %209 : vector<8x32xf32>
    %211 = vector.extract_strided_slice %203 {offsets = [0, 96], sizes = [8, 32], strides = [1, 1]} : vector<8x128xf32> to vector<8x32xf32>
    %212 = math.tanh %210 : vector<8x32xf32>
    %213 = arith.mulf %211, %212 : vector<8x32xf32>
    %c48_69 = arith.constant 48 : index
    %c0_70 = arith.constant 0 : index
    %214 = vector.load %arg1[%c48_69, %c0_70] : memref<64x32xf32, #tpu.memory_space<vmem>>, vector<8x32xf32>
    %215 = arith.mulf %214, %213 : vector<8x32xf32>
    %cst_71 = arith.constant 1.000000e+00 : f32
    %216 = vector.broadcast %cst_71 : f32 to vector<8x32xf32>
    %217 = arith.subf %216, %214 : vector<8x32xf32>
    %218 = arith.mulf %217, %188 : vector<8x32xf32>
    %219 = arith.addf %215, %218 : vector<8x32xf32>
    %220 = arith.mulf %214, %210 : vector<8x32xf32>
    %cst_72 = arith.constant 1.000000e+00 : f32
    %221 = vector.broadcast %cst_72 : f32 to vector<8x32xf32>
    %222 = arith.subf %221, %214 : vector<8x32xf32>
    %223 = arith.mulf %222, %193 : vector<8x32xf32>
    %224 = arith.addf %220, %223 : vector<8x32xf32>
    %225 = arith.mulf %214, %213 : vector<8x32xf32>
    %c48_73 = arith.constant 48 : index
    %c0_74 = arith.constant 0 : index
    %226 = vector.load %arg14[%c48_73, %c0_74] : memref<64x64xf32, #tpu.memory_space<vmem>>, vector<8x32xf32>
    tpu.vector_store %arg14[%c48_73, %c0_74], %225 {strides = array<i32>} : memref<64x64xf32, #tpu.memory_space<vmem>>, vector<8x32xf32>,
    %c56 = arith.constant 56 : index
    %c0_75 = arith.constant 0 : index
    %227 = vector.load %arg13[%c56, %c0_75] : memref<64x256xf32, #tpu.memory_space<vmem>>, vector<8x128xf32>
    %cst_76 = arith.constant dense<0.000000e+00> : vector<8x128xf32>
    %228 = tpu.matmul %219, %7, %cst_76 {dimension_numbers = #tpu.dot_dimension_numbers<[1], [0], [0], [1], [0, 0, 1, 1], [], []>} : vector<8x32xf32>, vector<32x128xf32>, vector<8x128xf32> -> vector<8x128xf32>
    %229 = arith.addf %227, %228 : vector<8x128xf32>
    %230 = arith.negf %229 : vector<8x128xf32>
    %231 = math.exp %230 : vector<8x128xf32>
    %cst_77 = arith.constant 1.000000e+00 : f32
    %232 = vector.broadcast %cst_77 : f32 to vector<8x128xf32>
    %233 = arith.addf %232, %231 : vector<8x128xf32>
    %234 = arith.divf %232, %233 : vector<8x128xf32>
    %235 = vector.extract_strided_slice %229 {offsets = [0, 64], sizes = [8, 32], strides = [1, 1]} : vector<8x128xf32> to vector<8x32xf32>
    %236 = math.tanh %235 : vector<8x32xf32>
    %237 = vector.extract_strided_slice %234 {offsets = [0, 32], sizes = [8, 32], strides = [1, 1]} : vector<8x128xf32> to vector<8x32xf32>
    %238 = arith.mulf %237, %224 : vector<8x32xf32>
    %239 = vector.extract_strided_slice %234 {offsets = [0, 0], sizes = [8, 32], strides = [1, 1]} : vector<8x128xf32> to vector<8x32xf32>
    %240 = arith.mulf %239, %236 : vector<8x32xf32>
    %241 = arith.addf %238, %240 : vector<8x32xf32>
    %242 = vector.extract_strided_slice %234 {offsets = [0, 96], sizes = [8, 32], strides = [1, 1]} : vector<8x128xf32> to vector<8x32xf32>
    %243 = math.tanh %241 : vector<8x32xf32>
    %244 = arith.mulf %242, %243 : vector<8x32xf32>
    %c56_78 = arith.constant 56 : index
    %c0_79 = arith.constant 0 : index
    %245 = vector.load %arg1[%c56_78, %c0_79] : memref<64x32xf32, #tpu.memory_space<vmem>>, vector<8x32xf32>
    %246 = arith.mulf %245, %244 : vector<8x32xf32>
    %c56_80 = arith.constant 56 : index
    %c0_81 = arith.constant 0 : index
    %247 = vector.load %arg14[%c56_80, %c0_81] : memref<64x64xf32, #tpu.memory_space<vmem>>, vector<8x32xf32>
    tpu.vector_store %arg14[%c56_80, %c0_81], %246 {strides = array<i32>} : memref<64x64xf32, #tpu.memory_space<vmem>>, vector<8x32xf32>,
    %c0_82 = arith.constant 0 : index
    %c0_83 = arith.constant 0 : index
    %248 = vector.load %arg5[%c0_82, %c0_83] : memref<32x128xf32, #tpu.memory_space<vmem>>, vector<32x128xf32>
    %cst_84 = arith.constant 0.000000e+00 : f32
    %249 = vector.broadcast %cst_84 : f32 to vector<8x32xf32>
    %cst_85 = arith.constant 0.000000e+00 : f32
    %250 = vector.broadcast %cst_85 : f32 to vector<8x32xf32>
    %c56_86 = arith.constant 56 : index
    %c128 = arith.constant 128 : index
    %251 = vector.load %arg13[%c56_86, %c128] : memref<64x256xf32, #tpu.memory_space<vmem>>, vector<8x128xf32>
    %cst_87 = arith.constant dense<0.000000e+00> : vector<8x128xf32>
    %252 = tpu.matmul %249, %248, %cst_87 {dimension_numbers = #tpu.dot_dimension_numbers<[1], [0], [0], [1], [0, 0, 1, 1], [], []>} : vector<8x32xf32>, vector<32x128xf32>, vector<8x128xf32> -> vector<8x128xf32>
    %253 = arith.addf %251, %252 : vector<8x128xf32>
    %254 = arith.negf %253 : vector<8x128xf32>
    %255 = math.exp %254 : vector<8x128xf32>
    %cst_88 = arith.constant 1.000000e+00 : f32
    %256 = vector.broadcast %cst_88 : f32 to vector<8x128xf32>
    %257 = arith.addf %256, %255 : vector<8x128xf32>
    %258 = arith.divf %256, %257 : vector<8x128xf32>
    %259 = vector.extract_strided_slice %253 {offsets = [0, 64], sizes = [8, 32], strides = [1, 1]} : vector<8x128xf32> to vector<8x32xf32>
    %260 = math.tanh %259 : vector<8x32xf32>
    %261 = vector.extract_strided_slice %258 {offsets = [0, 32], sizes = [8, 32], strides = [1, 1]} : vector<8x128xf32> to vector<8x32xf32>
    %262 = arith.mulf %261, %250 : vector<8x32xf32>
    %263 = vector.extract_strided_slice %258 {offsets = [0, 0], sizes = [8, 32], strides = [1, 1]} : vector<8x128xf32> to vector<8x32xf32>
    %264 = arith.mulf %263, %260 : vector<8x32xf32>
    %265 = arith.addf %262, %264 : vector<8x32xf32>
    %266 = vector.extract_strided_slice %258 {offsets = [0, 96], sizes = [8, 32], strides = [1, 1]} : vector<8x128xf32> to vector<8x32xf32>
    %267 = math.tanh %265 : vector<8x32xf32>
    %268 = arith.mulf %266, %267 : vector<8x32xf32>
    %c56_89 = arith.constant 56 : index
    %c0_90 = arith.constant 0 : index
    %269 = vector.load %arg1[%c56_89, %c0_90] : memref<64x32xf32, #tpu.memory_space<vmem>>, vector<8x32xf32>
    %270 = arith.mulf %269, %268 : vector<8x32xf32>
    %cst_91 = arith.constant 1.000000e+00 : f32
    %271 = vector.broadcast %cst_91 : f32 to vector<8x32xf32>
    %272 = arith.subf %271, %269 : vector<8x32xf32>
    %273 = arith.mulf %272, %249 : vector<8x32xf32>
    %274 = arith.addf %270, %273 : vector<8x32xf32>
    %275 = arith.mulf %269, %265 : vector<8x32xf32>
    %cst_92 = arith.constant 1.000000e+00 : f32
    %276 = vector.broadcast %cst_92 : f32 to vector<8x32xf32>
    %277 = arith.subf %276, %269 : vector<8x32xf32>
    %278 = arith.mulf %277, %250 : vector<8x32xf32>
    %279 = arith.addf %275, %278 : vector<8x32xf32>
    %280 = arith.mulf %269, %268 : vector<8x32xf32>
    %c56_93 = arith.constant 56 : index
    %c32_94 = arith.constant 32 : index
    %281 = vector.load %arg14[%c56_93, %c32_94] : memref<64x64xf32, #tpu.memory_space<vmem>>, vector<8x32xf32>
    tpu.vector_store %arg14[%c56_93, %c32_94], %280 {strides = array<i32>} : memref<64x64xf32, #tpu.memory_space<vmem>>, vector<8x32xf32>,
    %c48_95 = arith.constant 48 : index
    %c128_96 = arith.constant 128 : index
    %282 = vector.load %arg13[%c48_95, %c128_96] : memref<64x256xf32, #tpu.memory_space<vmem>>, vector<8x128xf32>
    %cst_97 = arith.constant dense<0.000000e+00> : vector<8x128xf32>
    %283 = tpu.matmul %274, %248, %cst_97 {dimension_numbers = #tpu.dot_dimension_numbers<[1], [0], [0], [1], [0, 0, 1, 1], [], []>} : vector<8x32xf32>, vector<32x128xf32>, vector<8x128xf32> -> vector<8x128xf32>
    %284 = arith.addf %282, %283 : vector<8x128xf32>
    %285 = arith.negf %284 : vector<8x128xf32>
    %286 = math.exp %285 : vector<8x128xf32>
    %cst_98 = arith.constant 1.000000e+00 : f32
    %287 = vector.broadcast %cst_98 : f32 to vector<8x128xf32>
    %288 = arith.addf %287, %286 : vector<8x128xf32>
    %289 = arith.divf %287, %288 : vector<8x128xf32>
    %290 = vector.extract_strided_slice %284 {offsets = [0, 64], sizes = [8, 32], strides = [1, 1]} : vector<8x128xf32> to vector<8x32xf32>
    %291 = math.tanh %290 : vector<8x32xf32>
    %292 = vector.extract_strided_slice %289 {offsets = [0, 32], sizes = [8, 32], strides = [1, 1]} : vector<8x128xf32> to vector<8x32xf32>
    %293 = arith.mulf %292, %279 : vector<8x32xf32>
    %294 = vector.extract_strided_slice %289 {offsets = [0, 0], sizes = [8, 32], strides = [1, 1]} : vector<8x128xf32> to vector<8x32xf32>
    %295 = arith.mulf %294, %291 : vector<8x32xf32>
    %296 = arith.addf %293, %295 : vector<8x32xf32>
    %297 = vector.extract_strided_slice %289 {offsets = [0, 96], sizes = [8, 32], strides = [1, 1]} : vector<8x128xf32> to vector<8x32xf32>
    %298 = math.tanh %296 : vector<8x32xf32>
    %299 = arith.mulf %297, %298 : vector<8x32xf32>
    %c48_99 = arith.constant 48 : index
    %c0_100 = arith.constant 0 : index
    %300 = vector.load %arg1[%c48_99, %c0_100] : memref<64x32xf32, #tpu.memory_space<vmem>>, vector<8x32xf32>
    %301 = arith.mulf %300, %299 : vector<8x32xf32>
    %cst_101 = arith.constant 1.000000e+00 : f32
    %302 = vector.broadcast %cst_101 : f32 to vector<8x32xf32>
    %303 = arith.subf %302, %300 : vector<8x32xf32>
    %304 = arith.mulf %303, %274 : vector<8x32xf32>
    %305 = arith.addf %301, %304 : vector<8x32xf32>
    %306 = arith.mulf %300, %296 : vector<8x32xf32>
    %cst_102 = arith.constant 1.000000e+00 : f32
    %307 = vector.broadcast %cst_102 : f32 to vector<8x32xf32>
    %308 = arith.subf %307, %300 : vector<8x32xf32>
    %309 = arith.mulf %308, %279 : vector<8x32xf32>
    %310 = arith.addf %306, %309 : vector<8x32xf32>
    %311 = arith.mulf %300, %299 : vector<8x32xf32>
    %c48_103 = arith.constant 48 : index
    %c32_104 = arith.constant 32 : index
    %312 = vector.load %arg14[%c48_103, %c32_104] : memref<64x64xf32, #tpu.memory_space<vmem>>, vector<8x32xf32>
    tpu.vector_store %arg14[%c48_103, %c32_104], %311 {strides = array<i32>} : memref<64x64xf32, #tpu.memory_space<vmem>>, vector<8x32xf32>,
    %c40_105 = arith.constant 40 : index
    %c128_106 = arith.constant 128 : index
    %313 = vector.load %arg13[%c40_105, %c128_106] : memref<64x256xf32, #tpu.memory_space<vmem>>, vector<8x128xf32>
    %cst_107 = arith.constant dense<0.000000e+00> : vector<8x128xf32>
    %314 = tpu.matmul %305, %248, %cst_107 {dimension_numbers = #tpu.dot_dimension_numbers<[1], [0], [0], [1], [0, 0, 1, 1], [], []>} : vector<8x32xf32>, vector<32x128xf32>, vector<8x128xf32> -> vector<8x128xf32>
    %315 = arith.addf %313, %314 : vector<8x128xf32>
    %316 = arith.negf %315 : vector<8x128xf32>
    %317 = math.exp %316 : vector<8x128xf32>
    %cst_108 = arith.constant 1.000000e+00 : f32
    %318 = vector.broadcast %cst_108 : f32 to vector<8x128xf32>
    %319 = arith.addf %318, %317 : vector<8x128xf32>
    %320 = arith.divf %318, %319 : vector<8x128xf32>
    %321 = vector.extract_strided_slice %315 {offsets = [0, 64], sizes = [8, 32], strides = [1, 1]} : vector<8x128xf32> to vector<8x32xf32>
    %322 = math.tanh %321 : vector<8x32xf32>
    %323 = vector.extract_strided_slice %320 {offsets = [0, 32], sizes = [8, 32], strides = [1, 1]} : vector<8x128xf32> to vector<8x32xf32>
    %324 = arith.mulf %323, %310 : vector<8x32xf32>
    %325 = vector.extract_strided_slice %320 {offsets = [0, 0], sizes = [8, 32], strides = [1, 1]} : vector<8x128xf32> to vector<8x32xf32>
    %326 = arith.mulf %325, %322 : vector<8x32xf32>
    %327 = arith.addf %324, %326 : vector<8x32xf32>
    %328 = vector.extract_strided_slice %320 {offsets = [0, 96], sizes = [8, 32], strides = [1, 1]} : vector<8x128xf32> to vector<8x32xf32>
    %329 = math.tanh %327 : vector<8x32xf32>
    %330 = arith.mulf %328, %329 : vector<8x32xf32>
    %c40_109 = arith.constant 40 : index
    %c0_110 = arith.constant 0 : index
    %331 = vector.load %arg1[%c40_109, %c0_110] : memref<64x32xf32, #tpu.memory_space<vmem>>, vector<8x32xf32>
    %332 = arith.mulf %331, %330 : vector<8x32xf32>
    %cst_111 = arith.constant 1.000000e+00 : f32
    %333 = vector.broadcast %cst_111 : f32 to vector<8x32xf32>
    %334 = arith.subf %333, %331 : vector<8x32xf32>
    %335 = arith.mulf %334, %305 : vector<8x32xf32>
    %336 = arith.addf %332, %335 : vector<8x32xf32>
    %337 = arith.mulf %331, %327 : vector<8x32xf32>
    %cst_112 = arith.constant 1.000000e+00 : f32
    %338 = vector.broadcast %cst_112 : f32 to vector<8x32xf32>
    %339 = arith.subf %338, %331 : vector<8x32xf32>
    %340 = arith.mulf %339, %310 : vector<8x32xf32>
    %341 = arith.addf %337, %340 : vector<8x32xf32>
    %342 = arith.mulf %331, %330 : vector<8x32xf32>
    %c40_113 = arith.constant 40 : index
    %c32_114 = arith.constant 32 : index
    %343 = vector.load %arg14[%c40_113, %c32_114] : memref<64x64xf32, #tpu.memory_space<vmem>>, vector<8x32xf32>
    tpu.vector_store %arg14[%c40_113, %c32_114], %342 {strides = array<i32>} : memref<64x64xf32, #tpu.memory_space<vmem>>, vector<8x32xf32>,
    %c32_115 = arith.constant 32 : index
    %c128_116 = arith.constant 128 : index
    %344 = vector.load %arg13[%c32_115, %c128_116] : memref<64x256xf32, #tpu.memory_space<vmem>>, vector<8x128xf32>
    %cst_117 = arith.constant dense<0.000000e+00> : vector<8x128xf32>
    %345 = tpu.matmul %336, %248, %cst_117 {dimension_numbers = #tpu.dot_dimension_numbers<[1], [0], [0], [1], [0, 0, 1, 1], [], []>} : vector<8x32xf32>, vector<32x128xf32>, vector<8x128xf32> -> vector<8x128xf32>
    %346 = arith.addf %344, %345 : vector<8x128xf32>
    %347 = arith.negf %346 : vector<8x128xf32>
    %348 = math.exp %347 : vector<8x128xf32>
    %cst_118 = arith.constant 1.000000e+00 : f32
    %349 = vector.broadcast %cst_118 : f32 to vector<8x128xf32>
    %350 = arith.addf %349, %348 : vector<8x128xf32>
    %351 = arith.divf %349, %350 : vector<8x128xf32>
    %352 = vector.extract_strided_slice %346 {offsets = [0, 64], sizes = [8, 32], strides = [1, 1]} : vector<8x128xf32> to vector<8x32xf32>
    %353 = math.tanh %352 : vector<8x32xf32>
    %354 = vector.extract_strided_slice %351 {offsets = [0, 32], sizes = [8, 32], strides = [1, 1]} : vector<8x128xf32> to vector<8x32xf32>
    %355 = arith.mulf %354, %341 : vector<8x32xf32>
    %356 = vector.extract_strided_slice %351 {offsets = [0, 0], sizes = [8, 32], strides = [1, 1]} : vector<8x128xf32> to vector<8x32xf32>
    %357 = arith.mulf %356, %353 : vector<8x32xf32>
    %358 = arith.addf %355, %357 : vector<8x32xf32>
    %359 = vector.extract_strided_slice %351 {offsets = [0, 96], sizes = [8, 32], strides = [1, 1]} : vector<8x128xf32> to vector<8x32xf32>
    %360 = math.tanh %358 : vector<8x32xf32>
    %361 = arith.mulf %359, %360 : vector<8x32xf32>
    %c32_119 = arith.constant 32 : index
    %c0_120 = arith.constant 0 : index
    %362 = vector.load %arg1[%c32_119, %c0_120] : memref<64x32xf32, #tpu.memory_space<vmem>>, vector<8x32xf32>
    %363 = arith.mulf %362, %361 : vector<8x32xf32>
    %cst_121 = arith.constant 1.000000e+00 : f32
    %364 = vector.broadcast %cst_121 : f32 to vector<8x32xf32>
    %365 = arith.subf %364, %362 : vector<8x32xf32>
    %366 = arith.mulf %365, %336 : vector<8x32xf32>
    %367 = arith.addf %363, %366 : vector<8x32xf32>
    %368 = arith.mulf %362, %358 : vector<8x32xf32>
    %cst_122 = arith.constant 1.000000e+00 : f32
    %369 = vector.broadcast %cst_122 : f32 to vector<8x32xf32>
    %370 = arith.subf %369, %362 : vector<8x32xf32>
    %371 = arith.mulf %370, %341 : vector<8x32xf32>
    %372 = arith.addf %368, %371 : vector<8x32xf32>
    %373 = arith.mulf %362, %361 : vector<8x32xf32>
    %c32_123 = arith.constant 32 : index
    %c32_124 = arith.constant 32 : index
    %374 = vector.load %arg14[%c32_123, %c32_124] : memref<64x64xf32, #tpu.memory_space<vmem>>, vector<8x32xf32>
    tpu.vector_store %arg14[%c32_123, %c32_124], %373 {strides = array<i32>} : memref<64x64xf32, #tpu.memory_space<vmem>>, vector<8x32xf32>,
    %c24_125 = arith.constant 24 : index
    %c128_126 = arith.constant 128 : index
    %375 = vector.load %arg13[%c24_125, %c128_126] : memref<64x256xf32, #tpu.memory_space<vmem>>, vector<8x128xf32>
    %cst_127 = arith.constant dense<0.000000e+00> : vector<8x128xf32>
    %376 = tpu.matmul %367, %248, %cst_127 {dimension_numbers = #tpu.dot_dimension_numbers<[1], [0], [0], [1], [0, 0, 1, 1], [], []>} : vector<8x32xf32>, vector<32x128xf32>, vector<8x128xf32> -> vector<8x128xf32>
    %377 = arith.addf %375, %376 : vector<8x128xf32>
    %378 = arith.negf %377 : vector<8x128xf32>
    %379 = math.exp %378 : vector<8x128xf32>
    %cst_128 = arith.constant 1.000000e+00 : f32
    %380 = vector.broadcast %cst_128 : f32 to vector<8x128xf32>
    %381 = arith.addf %380, %379 : vector<8x128xf32>
    %382 = arith.divf %380, %381 : vector<8x128xf32>
    %383 = vector.extract_strided_slice %377 {offsets = [0, 64], sizes = [8, 32], strides = [1, 1]} : vector<8x128xf32> to vector<8x32xf32>
    %384 = math.tanh %383 : vector<8x32xf32>
    %385 = vector.extract_strided_slice %382 {offsets = [0, 32], sizes = [8, 32], strides = [1, 1]} : vector<8x128xf32> to vector<8x32xf32>
    %386 = arith.mulf %385, %372 : vector<8x32xf32>
    %387 = vector.extract_strided_slice %382 {offsets = [0, 0], sizes = [8, 32], strides = [1, 1]} : vector<8x128xf32> to vector<8x32xf32>
    %388 = arith.mulf %387, %384 : vector<8x32xf32>
    %389 = arith.addf %386, %388 : vector<8x32xf32>
    %390 = vector.extract_strided_slice %382 {offsets = [0, 96], sizes = [8, 32], strides = [1, 1]} : vector<8x128xf32> to vector<8x32xf32>
    %391 = math.tanh %389 : vector<8x32xf32>
    %392 = arith.mulf %390, %391 : vector<8x32xf32>
    %c24_129 = arith.constant 24 : index
    %c0_130 = arith.constant 0 : index
    %393 = vector.load %arg1[%c24_129, %c0_130] : memref<64x32xf32, #tpu.memory_space<vmem>>, vector<8x32xf32>
    %394 = arith.mulf %393, %392 : vector<8x32xf32>
    %cst_131 = arith.constant 1.000000e+00 : f32
    %395 = vector.broadcast %cst_131 : f32 to vector<8x32xf32>
    %396 = arith.subf %395, %393 : vector<8x32xf32>
    %397 = arith.mulf %396, %367 : vector<8x32xf32>
    %398 = arith.addf %394, %397 : vector<8x32xf32>
    %399 = arith.mulf %393, %389 : vector<8x32xf32>
    %cst_132 = arith.constant 1.000000e+00 : f32
    %400 = vector.broadcast %cst_132 : f32 to vector<8x32xf32>
    %401 = arith.subf %400, %393 : vector<8x32xf32>
    %402 = arith.mulf %401, %372 : vector<8x32xf32>
    %403 = arith.addf %399, %402 : vector<8x32xf32>
    %404 = arith.mulf %393, %392 : vector<8x32xf32>
    %c24_133 = arith.constant 24 : index
    %c32_134 = arith.constant 32 : index
    %405 = vector.load %arg14[%c24_133, %c32_134] : memref<64x64xf32, #tpu.memory_space<vmem>>, vector<8x32xf32>
    tpu.vector_store %arg14[%c24_133, %c32_134], %404 {strides = array<i32>} : memref<64x64xf32, #tpu.memory_space<vmem>>, vector<8x32xf32>,
    %c16_135 = arith.constant 16 : index
    %c128_136 = arith.constant 128 : index
    %406 = vector.load %arg13[%c16_135, %c128_136] : memref<64x256xf32, #tpu.memory_space<vmem>>, vector<8x128xf32>
    %cst_137 = arith.constant dense<0.000000e+00> : vector<8x128xf32>
    %407 = tpu.matmul %398, %248, %cst_137 {dimension_numbers = #tpu.dot_dimension_numbers<[1], [0], [0], [1], [0, 0, 1, 1], [], []>} : vector<8x32xf32>, vector<32x128xf32>, vector<8x128xf32> -> vector<8x128xf32>
    %408 = arith.addf %406, %407 : vector<8x128xf32>
    %409 = arith.negf %408 : vector<8x128xf32>
    %410 = math.exp %409 : vector<8x128xf32>
    %cst_138 = arith.constant 1.000000e+00 : f32
    %411 = vector.broadcast %cst_138 : f32 to vector<8x128xf32>
    %412 = arith.addf %411, %410 : vector<8x128xf32>
    %413 = arith.divf %411, %412 : vector<8x128xf32>
    %414 = vector.extract_strided_slice %408 {offsets = [0, 64], sizes = [8, 32], strides = [1, 1]} : vector<8x128xf32> to vector<8x32xf32>
    %415 = math.tanh %414 : vector<8x32xf32>
    %416 = vector.extract_strided_slice %413 {offsets = [0, 32], sizes = [8, 32], strides = [1, 1]} : vector<8x128xf32> to vector<8x32xf32>
    %417 = arith.mulf %416, %403 : vector<8x32xf32>
    %418 = vector.extract_strided_slice %413 {offsets = [0, 0], sizes = [8, 32], strides = [1, 1]} : vector<8x128xf32> to vector<8x32xf32>
    %419 = arith.mulf %418, %415 : vector<8x32xf32>
    %420 = arith.addf %417, %419 : vector<8x32xf32>
    %421 = vector.extract_strided_slice %413 {offsets = [0, 96], sizes = [8, 32], strides = [1, 1]} : vector<8x128xf32> to vector<8x32xf32>
    %422 = math.tanh %420 : vector<8x32xf32>
    %423 = arith.mulf %421, %422 : vector<8x32xf32>
    %c16_139 = arith.constant 16 : index
    %c0_140 = arith.constant 0 : index
    %424 = vector.load %arg1[%c16_139, %c0_140] : memref<64x32xf32, #tpu.memory_space<vmem>>, vector<8x32xf32>
    %425 = arith.mulf %424, %423 : vector<8x32xf32>
    %cst_141 = arith.constant 1.000000e+00 : f32
    %426 = vector.broadcast %cst_141 : f32 to vector<8x32xf32>
    %427 = arith.subf %426, %424 : vector<8x32xf32>
    %428 = arith.mulf %427, %398 : vector<8x32xf32>
    %429 = arith.addf %425, %428 : vector<8x32xf32>
    %430 = arith.mulf %424, %420 : vector<8x32xf32>
    %cst_142 = arith.constant 1.000000e+00 : f32
    %431 = vector.broadcast %cst_142 : f32 to vector<8x32xf32>
    %432 = arith.subf %431, %424 : vector<8x32xf32>
    %433 = arith.mulf %432, %403 : vector<8x32xf32>
    %434 = arith.addf %430, %433 : vector<8x32xf32>
    %435 = arith.mulf %424, %423 : vector<8x32xf32>
    %c16_143 = arith.constant 16 : index
    %c32_144 = arith.constant 32 : index
    %436 = vector.load %arg14[%c16_143, %c32_144] : memref<64x64xf32, #tpu.memory_space<vmem>>, vector<8x32xf32>
    tpu.vector_store %arg14[%c16_143, %c32_144], %435 {strides = array<i32>} : memref<64x64xf32, #tpu.memory_space<vmem>>, vector<8x32xf32>,
    %c8_145 = arith.constant 8 : index
    %c128_146 = arith.constant 128 : index
    %437 = vector.load %arg13[%c8_145, %c128_146] : memref<64x256xf32, #tpu.memory_space<vmem>>, vector<8x128xf32>
    %cst_147 = arith.constant dense<0.000000e+00> : vector<8x128xf32>
    %438 = tpu.matmul %429, %248, %cst_147 {dimension_numbers = #tpu.dot_dimension_numbers<[1], [0], [0], [1], [0, 0, 1, 1], [], []>} : vector<8x32xf32>, vector<32x128xf32>, vector<8x128xf32> -> vector<8x128xf32>
    %439 = arith.addf %437, %438 : vector<8x128xf32>
    %440 = arith.negf %439 : vector<8x128xf32>
    %441 = math.exp %440 : vector<8x128xf32>
    %cst_148 = arith.constant 1.000000e+00 : f32
    %442 = vector.broadcast %cst_148 : f32 to vector<8x128xf32>
    %443 = arith.addf %442, %441 : vector<8x128xf32>
    %444 = arith.divf %442, %443 : vector<8x128xf32>
    %445 = vector.extract_strided_slice %439 {offsets = [0, 64], sizes = [8, 32], strides = [1, 1]} : vector<8x128xf32> to vector<8x32xf32>
    %446 = math.tanh %445 : vector<8x32xf32>
    %447 = vector.extract_strided_slice %444 {offsets = [0, 32], sizes = [8, 32], strides = [1, 1]} : vector<8x128xf32> to vector<8x32xf32>
    %448 = arith.mulf %447, %434 : vector<8x32xf32>
    %449 = vector.extract_strided_slice %444 {offsets = [0, 0], sizes = [8, 32], strides = [1, 1]} : vector<8x128xf32> to vector<8x32xf32>
    %450 = arith.mulf %449, %446 : vector<8x32xf32>
    %451 = arith.addf %448, %450 : vector<8x32xf32>
    %452 = vector.extract_strided_slice %444 {offsets = [0, 96], sizes = [8, 32], strides = [1, 1]} : vector<8x128xf32> to vector<8x32xf32>
    %453 = math.tanh %451 : vector<8x32xf32>
    %454 = arith.mulf %452, %453 : vector<8x32xf32>
    %c8_149 = arith.constant 8 : index
    %c0_150 = arith.constant 0 : index
    %455 = vector.load %arg1[%c8_149, %c0_150] : memref<64x32xf32, #tpu.memory_space<vmem>>, vector<8x32xf32>
    %456 = arith.mulf %455, %454 : vector<8x32xf32>
    %cst_151 = arith.constant 1.000000e+00 : f32
    %457 = vector.broadcast %cst_151 : f32 to vector<8x32xf32>
    %458 = arith.subf %457, %455 : vector<8x32xf32>
    %459 = arith.mulf %458, %429 : vector<8x32xf32>
    %460 = arith.addf %456, %459 : vector<8x32xf32>
    %461 = arith.mulf %455, %451 : vector<8x32xf32>
    %cst_152 = arith.constant 1.000000e+00 : f32
    %462 = vector.broadcast %cst_152 : f32 to vector<8x32xf32>
    %463 = arith.subf %462, %455 : vector<8x32xf32>
    %464 = arith.mulf %463, %434 : vector<8x32xf32>
    %465 = arith.addf %461, %464 : vector<8x32xf32>
    %466 = arith.mulf %455, %454 : vector<8x32xf32>
    %c8_153 = arith.constant 8 : index
    %c32_154 = arith.constant 32 : index
    %467 = vector.load %arg14[%c8_153, %c32_154] : memref<64x64xf32, #tpu.memory_space<vmem>>, vector<8x32xf32>
    tpu.vector_store %arg14[%c8_153, %c32_154], %466 {strides = array<i32>} : memref<64x64xf32, #tpu.memory_space<vmem>>, vector<8x32xf32>,
    %c0_155 = arith.constant 0 : index
    %c128_156 = arith.constant 128 : index
    %468 = vector.load %arg13[%c0_155, %c128_156] : memref<64x256xf32, #tpu.memory_space<vmem>>, vector<8x128xf32>
    %cst_157 = arith.constant dense<0.000000e+00> : vector<8x128xf32>
    %469 = tpu.matmul %460, %248, %cst_157 {dimension_numbers = #tpu.dot_dimension_numbers<[1], [0], [0], [1], [0, 0, 1, 1], [], []>} : vector<8x32xf32>, vector<32x128xf32>, vector<8x128xf32> -> vector<8x128xf32>
    %470 = arith.addf %468, %469 : vector<8x128xf32>
    %471 = arith.negf %470 : vector<8x128xf32>
    %472 = math.exp %471 : vector<8x128xf32>
    %cst_158 = arith.constant 1.000000e+00 : f32
    %473 = vector.broadcast %cst_158 : f32 to vector<8x128xf32>
    %474 = arith.addf %473, %472 : vector<8x128xf32>
    %475 = arith.divf %473, %474 : vector<8x128xf32>
    %476 = vector.extract_strided_slice %470 {offsets = [0, 64], sizes = [8, 32], strides = [1, 1]} : vector<8x128xf32> to vector<8x32xf32>
    %477 = math.tanh %476 : vector<8x32xf32>
    %478 = vector.extract_strided_slice %475 {offsets = [0, 32], sizes = [8, 32], strides = [1, 1]} : vector<8x128xf32> to vector<8x32xf32>
    %479 = arith.mulf %478, %465 : vector<8x32xf32>
    %480 = vector.extract_strided_slice %475 {offsets = [0, 0], sizes = [8, 32], strides = [1, 1]} : vector<8x128xf32> to vector<8x32xf32>
    %481 = arith.mulf %480, %477 : vector<8x32xf32>
    %482 = arith.addf %479, %481 : vector<8x32xf32>
    %483 = vector.extract_strided_slice %475 {offsets = [0, 96], sizes = [8, 32], strides = [1, 1]} : vector<8x128xf32> to vector<8x32xf32>
    %484 = math.tanh %482 : vector<8x32xf32>
    %485 = arith.mulf %483, %484 : vector<8x32xf32>
    %c0_159 = arith.constant 0 : index
    %c0_160 = arith.constant 0 : index
    %486 = vector.load %arg1[%c0_159, %c0_160] : memref<64x32xf32, #tpu.memory_space<vmem>>, vector<8x32xf32>
    %487 = arith.mulf %486, %485 : vector<8x32xf32>
    %c0_161 = arith.constant 0 : index
    %c32_162 = arith.constant 32 : index
    %488 = vector.load %arg14[%c0_161, %c32_162] : memref<64x64xf32, #tpu.memory_space<vmem>>, vector<8x32xf32>
    tpu.vector_store %arg14[%c0_161, %c32_162], %487 {strides = array<i32>} : memref<64x64xf32, #tpu.memory_space<vmem>>, vector<8x32xf32>,
    %c0_163 = arith.constant 0 : index
    %c0_164 = arith.constant 0 : index
    %489 = vector.load %arg14[%c0_163, %c0_164] : memref<64x64xf32, #tpu.memory_space<vmem>>, vector<64x64xf32>
    %c0_165 = arith.constant 0 : index
    %c0_166 = arith.constant 0 : index
    %490 = vector.load %arg6[%c0_165, %c0_166] : memref<64x256xf32, #tpu.memory_space<vmem>>, vector<64x256xf32>
    %cst_167 = arith.constant dense<0.000000e+00> : vector<64x256xf32>
    %491 = tpu.matmul %489, %490, %cst_167 {dimension_numbers = #tpu.dot_dimension_numbers<[1], [0], [0], [1], [0, 0, 1, 1], [], []>} : vector<64x64xf32>, vector<64x256xf32>, vector<64x256xf32> -> vector<64x256xf32>
    %c0_168 = arith.constant 0 : index
    %c0_169 = arith.constant 0 : index
    %492 = vector.load %arg7[%c0_168, %c0_169] : memref<1x256xf32, #tpu.memory_space<vmem>>, vector<1x256xf32>
    %493 = vector.broadcast %492 : vector<1x256xf32> to vector<64x256xf32>
    %494 = arith.addf %491, %493 : vector<64x256xf32>
    %c0_170 = arith.constant 0 : index
    %c0_171 = arith.constant 0 : index
    %495 = vector.load %arg13[%c0_170, %c0_171] : memref<64x256xf32, #tpu.memory_space<vmem>>, vector<64x256xf32>
    tpu.vector_store %arg13[%c0_170, %c0_171], %494 {strides = array<i32>} : memref<64x256xf32, #tpu.memory_space<vmem>>, vector<64x256xf32>,
    %c0_172 = arith.constant 0 : index
    %c0_173 = arith.constant 0 : index
    %496 = vector.load %arg8[%c0_172, %c0_173] : memref<32x128xf32, #tpu.memory_space<vmem>>, vector<32x128xf32>
    %cst_174 = arith.constant 0.000000e+00 : f32
    %497 = vector.broadcast %cst_174 : f32 to vector<8x32xf32>
    %cst_175 = arith.constant 0.000000e+00 : f32
    %498 = vector.broadcast %cst_175 : f32 to vector<8x32xf32>
    %c0_176 = arith.constant 0 : index
    %c0_177 = arith.constant 0 : index
    %499 = vector.load %arg13[%c0_176, %c0_177] : memref<64x256xf32, #tpu.memory_space<vmem>>, vector<8x128xf32>
    %cst_178 = arith.constant dense<0.000000e+00> : vector<8x128xf32>
    %500 = tpu.matmul %497, %496, %cst_178 {dimension_numbers = #tpu.dot_dimension_numbers<[1], [0], [0], [1], [0, 0, 1, 1], [], []>} : vector<8x32xf32>, vector<32x128xf32>, vector<8x128xf32> -> vector<8x128xf32>
    %501 = arith.addf %499, %500 : vector<8x128xf32>
    %502 = arith.negf %501 : vector<8x128xf32>
    %503 = math.exp %502 : vector<8x128xf32>
    %cst_179 = arith.constant 1.000000e+00 : f32
    %504 = vector.broadcast %cst_179 : f32 to vector<8x128xf32>
    %505 = arith.addf %504, %503 : vector<8x128xf32>
    %506 = arith.divf %504, %505 : vector<8x128xf32>
    %507 = vector.extract_strided_slice %501 {offsets = [0, 64], sizes = [8, 32], strides = [1, 1]} : vector<8x128xf32> to vector<8x32xf32>
    %508 = math.tanh %507 : vector<8x32xf32>
    %509 = vector.extract_strided_slice %506 {offsets = [0, 32], sizes = [8, 32], strides = [1, 1]} : vector<8x128xf32> to vector<8x32xf32>
    %510 = arith.mulf %509, %498 : vector<8x32xf32>
    %511 = vector.extract_strided_slice %506 {offsets = [0, 0], sizes = [8, 32], strides = [1, 1]} : vector<8x128xf32> to vector<8x32xf32>
    %512 = arith.mulf %511, %508 : vector<8x32xf32>
    %513 = arith.addf %510, %512 : vector<8x32xf32>
    %514 = vector.extract_strided_slice %506 {offsets = [0, 96], sizes = [8, 32], strides = [1, 1]} : vector<8x128xf32> to vector<8x32xf32>
    %515 = math.tanh %513 : vector<8x32xf32>
    %516 = arith.mulf %514, %515 : vector<8x32xf32>
    %c0_180 = arith.constant 0 : index
    %c0_181 = arith.constant 0 : index
    %517 = vector.load %arg1[%c0_180, %c0_181] : memref<64x32xf32, #tpu.memory_space<vmem>>, vector<8x32xf32>
    %518 = arith.mulf %517, %516 : vector<8x32xf32>
    %cst_182 = arith.constant 1.000000e+00 : f32
    %519 = vector.broadcast %cst_182 : f32 to vector<8x32xf32>
    %520 = arith.subf %519, %517 : vector<8x32xf32>
    %521 = arith.mulf %520, %497 : vector<8x32xf32>
    %522 = arith.addf %518, %521 : vector<8x32xf32>
    %523 = arith.mulf %517, %513 : vector<8x32xf32>
    %cst_183 = arith.constant 1.000000e+00 : f32
    %524 = vector.broadcast %cst_183 : f32 to vector<8x32xf32>
    %525 = arith.subf %524, %517 : vector<8x32xf32>
    %526 = arith.mulf %525, %498 : vector<8x32xf32>
    %527 = arith.addf %523, %526 : vector<8x32xf32>
    %528 = arith.mulf %517, %516 : vector<8x32xf32>
    %c0_184 = arith.constant 0 : index
    %c0_185 = arith.constant 0 : index
    %529 = vector.load %arg14[%c0_184, %c0_185] : memref<64x64xf32, #tpu.memory_space<vmem>>, vector<8x32xf32>
    tpu.vector_store %arg14[%c0_184, %c0_185], %528 {strides = array<i32>} : memref<64x64xf32, #tpu.memory_space<vmem>>, vector<8x32xf32>,
    %c8_186 = arith.constant 8 : index
    %c0_187 = arith.constant 0 : index
    %530 = vector.load %arg13[%c8_186, %c0_187] : memref<64x256xf32, #tpu.memory_space<vmem>>, vector<8x128xf32>
    %cst_188 = arith.constant dense<0.000000e+00> : vector<8x128xf32>
    %531 = tpu.matmul %522, %496, %cst_188 {dimension_numbers = #tpu.dot_dimension_numbers<[1], [0], [0], [1], [0, 0, 1, 1], [], []>} : vector<8x32xf32>, vector<32x128xf32>, vector<8x128xf32> -> vector<8x128xf32>
    %532 = arith.addf %530, %531 : vector<8x128xf32>
    %533 = arith.negf %532 : vector<8x128xf32>
    %534 = math.exp %533 : vector<8x128xf32>
    %cst_189 = arith.constant 1.000000e+00 : f32
    %535 = vector.broadcast %cst_189 : f32 to vector<8x128xf32>
    %536 = arith.addf %535, %534 : vector<8x128xf32>
    %537 = arith.divf %535, %536 : vector<8x128xf32>
    %538 = vector.extract_strided_slice %532 {offsets = [0, 64], sizes = [8, 32], strides = [1, 1]} : vector<8x128xf32> to vector<8x32xf32>
    %539 = math.tanh %538 : vector<8x32xf32>
    %540 = vector.extract_strided_slice %537 {offsets = [0, 32], sizes = [8, 32], strides = [1, 1]} : vector<8x128xf32> to vector<8x32xf32>
    %541 = arith.mulf %540, %527 : vector<8x32xf32>
    %542 = vector.extract_strided_slice %537 {offsets = [0, 0], sizes = [8, 32], strides = [1, 1]} : vector<8x128xf32> to vector<8x32xf32>
    %543 = arith.mulf %542, %539 : vector<8x32xf32>
    %544 = arith.addf %541, %543 : vector<8x32xf32>
    %545 = vector.extract_strided_slice %537 {offsets = [0, 96], sizes = [8, 32], strides = [1, 1]} : vector<8x128xf32> to vector<8x32xf32>
    %546 = math.tanh %544 : vector<8x32xf32>
    %547 = arith.mulf %545, %546 : vector<8x32xf32>
    %c8_190 = arith.constant 8 : index
    %c0_191 = arith.constant 0 : index
    %548 = vector.load %arg1[%c8_190, %c0_191] : memref<64x32xf32, #tpu.memory_space<vmem>>, vector<8x32xf32>
    %549 = arith.mulf %548, %547 : vector<8x32xf32>
    %cst_192 = arith.constant 1.000000e+00 : f32
    %550 = vector.broadcast %cst_192 : f32 to vector<8x32xf32>
    %551 = arith.subf %550, %548 : vector<8x32xf32>
    %552 = arith.mulf %551, %522 : vector<8x32xf32>
    %553 = arith.addf %549, %552 : vector<8x32xf32>
    %554 = arith.mulf %548, %544 : vector<8x32xf32>
    %cst_193 = arith.constant 1.000000e+00 : f32
    %555 = vector.broadcast %cst_193 : f32 to vector<8x32xf32>
    %556 = arith.subf %555, %548 : vector<8x32xf32>
    %557 = arith.mulf %556, %527 : vector<8x32xf32>
    %558 = arith.addf %554, %557 : vector<8x32xf32>
    %559 = arith.mulf %548, %547 : vector<8x32xf32>
    %c8_194 = arith.constant 8 : index
    %c0_195 = arith.constant 0 : index
    %560 = vector.load %arg14[%c8_194, %c0_195] : memref<64x64xf32, #tpu.memory_space<vmem>>, vector<8x32xf32>
    tpu.vector_store %arg14[%c8_194, %c0_195], %559 {strides = array<i32>} : memref<64x64xf32, #tpu.memory_space<vmem>>, vector<8x32xf32>,
    %c16_196 = arith.constant 16 : index
    %c0_197 = arith.constant 0 : index
    %561 = vector.load %arg13[%c16_196, %c0_197] : memref<64x256xf32, #tpu.memory_space<vmem>>, vector<8x128xf32>
    %cst_198 = arith.constant dense<0.000000e+00> : vector<8x128xf32>
    %562 = tpu.matmul %553, %496, %cst_198 {dimension_numbers = #tpu.dot_dimension_numbers<[1], [0], [0], [1], [0, 0, 1, 1], [], []>} : vector<8x32xf32>, vector<32x128xf32>, vector<8x128xf32> -> vector<8x128xf32>
    %563 = arith.addf %561, %562 : vector<8x128xf32>
    %564 = arith.negf %563 : vector<8x128xf32>
    %565 = math.exp %564 : vector<8x128xf32>
    %cst_199 = arith.constant 1.000000e+00 : f32
    %566 = vector.broadcast %cst_199 : f32 to vector<8x128xf32>
    %567 = arith.addf %566, %565 : vector<8x128xf32>
    %568 = arith.divf %566, %567 : vector<8x128xf32>
    %569 = vector.extract_strided_slice %563 {offsets = [0, 64], sizes = [8, 32], strides = [1, 1]} : vector<8x128xf32> to vector<8x32xf32>
    %570 = math.tanh %569 : vector<8x32xf32>
    %571 = vector.extract_strided_slice %568 {offsets = [0, 32], sizes = [8, 32], strides = [1, 1]} : vector<8x128xf32> to vector<8x32xf32>
    %572 = arith.mulf %571, %558 : vector<8x32xf32>
    %573 = vector.extract_strided_slice %568 {offsets = [0, 0], sizes = [8, 32], strides = [1, 1]} : vector<8x128xf32> to vector<8x32xf32>
    %574 = arith.mulf %573, %570 : vector<8x32xf32>
    %575 = arith.addf %572, %574 : vector<8x32xf32>
    %576 = vector.extract_strided_slice %568 {offsets = [0, 96], sizes = [8, 32], strides = [1, 1]} : vector<8x128xf32> to vector<8x32xf32>
    %577 = math.tanh %575 : vector<8x32xf32>
    %578 = arith.mulf %576, %577 : vector<8x32xf32>
    %c16_200 = arith.constant 16 : index
    %c0_201 = arith.constant 0 : index
    %579 = vector.load %arg1[%c16_200, %c0_201] : memref<64x32xf32, #tpu.memory_space<vmem>>, vector<8x32xf32>
    %580 = arith.mulf %579, %578 : vector<8x32xf32>
    %cst_202 = arith.constant 1.000000e+00 : f32
    %581 = vector.broadcast %cst_202 : f32 to vector<8x32xf32>
    %582 = arith.subf %581, %579 : vector<8x32xf32>
    %583 = arith.mulf %582, %553 : vector<8x32xf32>
    %584 = arith.addf %580, %583 : vector<8x32xf32>
    %585 = arith.mulf %579, %575 : vector<8x32xf32>
    %cst_203 = arith.constant 1.000000e+00 : f32
    %586 = vector.broadcast %cst_203 : f32 to vector<8x32xf32>
    %587 = arith.subf %586, %579 : vector<8x32xf32>
    %588 = arith.mulf %587, %558 : vector<8x32xf32>
    %589 = arith.addf %585, %588 : vector<8x32xf32>
    %590 = arith.mulf %579, %578 : vector<8x32xf32>
    %c16_204 = arith.constant 16 : index
    %c0_205 = arith.constant 0 : index
    %591 = vector.load %arg14[%c16_204, %c0_205] : memref<64x64xf32, #tpu.memory_space<vmem>>, vector<8x32xf32>
    tpu.vector_store %arg14[%c16_204, %c0_205], %590 {strides = array<i32>} : memref<64x64xf32, #tpu.memory_space<vmem>>, vector<8x32xf32>,
    %c24_206 = arith.constant 24 : index
    %c0_207 = arith.constant 0 : index
    %592 = vector.load %arg13[%c24_206, %c0_207] : memref<64x256xf32, #tpu.memory_space<vmem>>, vector<8x128xf32>
    %cst_208 = arith.constant dense<0.000000e+00> : vector<8x128xf32>
    %593 = tpu.matmul %584, %496, %cst_208 {dimension_numbers = #tpu.dot_dimension_numbers<[1], [0], [0], [1], [0, 0, 1, 1], [], []>} : vector<8x32xf32>, vector<32x128xf32>, vector<8x128xf32> -> vector<8x128xf32>
    %594 = arith.addf %592, %593 : vector<8x128xf32>
    %595 = arith.negf %594 : vector<8x128xf32>
    %596 = math.exp %595 : vector<8x128xf32>
    %cst_209 = arith.constant 1.000000e+00 : f32
    %597 = vector.broadcast %cst_209 : f32 to vector<8x128xf32>
    %598 = arith.addf %597, %596 : vector<8x128xf32>
    %599 = arith.divf %597, %598 : vector<8x128xf32>
    %600 = vector.extract_strided_slice %594 {offsets = [0, 64], sizes = [8, 32], strides = [1, 1]} : vector<8x128xf32> to vector<8x32xf32>
    %601 = math.tanh %600 : vector<8x32xf32>
    %602 = vector.extract_strided_slice %599 {offsets = [0, 32], sizes = [8, 32], strides = [1, 1]} : vector<8x128xf32> to vector<8x32xf32>
    %603 = arith.mulf %602, %589 : vector<8x32xf32>
    %604 = vector.extract_strided_slice %599 {offsets = [0, 0], sizes = [8, 32], strides = [1, 1]} : vector<8x128xf32> to vector<8x32xf32>
    %605 = arith.mulf %604, %601 : vector<8x32xf32>
    %606 = arith.addf %603, %605 : vector<8x32xf32>
    %607 = vector.extract_strided_slice %599 {offsets = [0, 96], sizes = [8, 32], strides = [1, 1]} : vector<8x128xf32> to vector<8x32xf32>
    %608 = math.tanh %606 : vector<8x32xf32>
    %609 = arith.mulf %607, %608 : vector<8x32xf32>
    %c24_210 = arith.constant 24 : index
    %c0_211 = arith.constant 0 : index
    %610 = vector.load %arg1[%c24_210, %c0_211] : memref<64x32xf32, #tpu.memory_space<vmem>>, vector<8x32xf32>
    %611 = arith.mulf %610, %609 : vector<8x32xf32>
    %cst_212 = arith.constant 1.000000e+00 : f32
    %612 = vector.broadcast %cst_212 : f32 to vector<8x32xf32>
    %613 = arith.subf %612, %610 : vector<8x32xf32>
    %614 = arith.mulf %613, %584 : vector<8x32xf32>
    %615 = arith.addf %611, %614 : vector<8x32xf32>
    %616 = arith.mulf %610, %606 : vector<8x32xf32>
    %cst_213 = arith.constant 1.000000e+00 : f32
    %617 = vector.broadcast %cst_213 : f32 to vector<8x32xf32>
    %618 = arith.subf %617, %610 : vector<8x32xf32>
    %619 = arith.mulf %618, %589 : vector<8x32xf32>
    %620 = arith.addf %616, %619 : vector<8x32xf32>
    %621 = arith.mulf %610, %609 : vector<8x32xf32>
    %c24_214 = arith.constant 24 : index
    %c0_215 = arith.constant 0 : index
    %622 = vector.load %arg14[%c24_214, %c0_215] : memref<64x64xf32, #tpu.memory_space<vmem>>, vector<8x32xf32>
    tpu.vector_store %arg14[%c24_214, %c0_215], %621 {strides = array<i32>} : memref<64x64xf32, #tpu.memory_space<vmem>>, vector<8x32xf32>,
    %c32_216 = arith.constant 32 : index
    %c0_217 = arith.constant 0 : index
    %623 = vector.load %arg13[%c32_216, %c0_217] : memref<64x256xf32, #tpu.memory_space<vmem>>, vector<8x128xf32>
    %cst_218 = arith.constant dense<0.000000e+00> : vector<8x128xf32>
    %624 = tpu.matmul %615, %496, %cst_218 {dimension_numbers = #tpu.dot_dimension_numbers<[1], [0], [0], [1], [0, 0, 1, 1], [], []>} : vector<8x32xf32>, vector<32x128xf32>, vector<8x128xf32> -> vector<8x128xf32>
    %625 = arith.addf %623, %624 : vector<8x128xf32>
    %626 = arith.negf %625 : vector<8x128xf32>
    %627 = math.exp %626 : vector<8x128xf32>
    %cst_219 = arith.constant 1.000000e+00 : f32
    %628 = vector.broadcast %cst_219 : f32 to vector<8x128xf32>
    %629 = arith.addf %628, %627 : vector<8x128xf32>
    %630 = arith.divf %628, %629 : vector<8x128xf32>
    %631 = vector.extract_strided_slice %625 {offsets = [0, 64], sizes = [8, 32], strides = [1, 1]} : vector<8x128xf32> to vector<8x32xf32>
    %632 = math.tanh %631 : vector<8x32xf32>
    %633 = vector.extract_strided_slice %630 {offsets = [0, 32], sizes = [8, 32], strides = [1, 1]} : vector<8x128xf32> to vector<8x32xf32>
    %634 = arith.mulf %633, %620 : vector<8x32xf32>
    %635 = vector.extract_strided_slice %630 {offsets = [0, 0], sizes = [8, 32], strides = [1, 1]} : vector<8x128xf32> to vector<8x32xf32>
    %636 = arith.mulf %635, %632 : vector<8x32xf32>
    %637 = arith.addf %634, %636 : vector<8x32xf32>
    %638 = vector.extract_strided_slice %630 {offsets = [0, 96], sizes = [8, 32], strides = [1, 1]} : vector<8x128xf32> to vector<8x32xf32>
    %639 = math.tanh %637 : vector<8x32xf32>
    %640 = arith.mulf %638, %639 : vector<8x32xf32>
    %c32_220 = arith.constant 32 : index
    %c0_221 = arith.constant 0 : index
    %641 = vector.load %arg1[%c32_220, %c0_221] : memref<64x32xf32, #tpu.memory_space<vmem>>, vector<8x32xf32>
    %642 = arith.mulf %641, %640 : vector<8x32xf32>
    %cst_222 = arith.constant 1.000000e+00 : f32
    %643 = vector.broadcast %cst_222 : f32 to vector<8x32xf32>
    %644 = arith.subf %643, %641 : vector<8x32xf32>
    %645 = arith.mulf %644, %615 : vector<8x32xf32>
    %646 = arith.addf %642, %645 : vector<8x32xf32>
    %647 = arith.mulf %641, %637 : vector<8x32xf32>
    %cst_223 = arith.constant 1.000000e+00 : f32
    %648 = vector.broadcast %cst_223 : f32 to vector<8x32xf32>
    %649 = arith.subf %648, %641 : vector<8x32xf32>
    %650 = arith.mulf %649, %620 : vector<8x32xf32>
    %651 = arith.addf %647, %650 : vector<8x32xf32>
    %652 = arith.mulf %641, %640 : vector<8x32xf32>
    %c32_224 = arith.constant 32 : index
    %c0_225 = arith.constant 0 : index
    %653 = vector.load %arg14[%c32_224, %c0_225] : memref<64x64xf32, #tpu.memory_space<vmem>>, vector<8x32xf32>
    tpu.vector_store %arg14[%c32_224, %c0_225], %652 {strides = array<i32>} : memref<64x64xf32, #tpu.memory_space<vmem>>, vector<8x32xf32>,
    %c40_226 = arith.constant 40 : index
    %c0_227 = arith.constant 0 : index
    %654 = vector.load %arg13[%c40_226, %c0_227] : memref<64x256xf32, #tpu.memory_space<vmem>>, vector<8x128xf32>
    %cst_228 = arith.constant dense<0.000000e+00> : vector<8x128xf32>
    %655 = tpu.matmul %646, %496, %cst_228 {dimension_numbers = #tpu.dot_dimension_numbers<[1], [0], [0], [1], [0, 0, 1, 1], [], []>} : vector<8x32xf32>, vector<32x128xf32>, vector<8x128xf32> -> vector<8x128xf32>
    %656 = arith.addf %654, %655 : vector<8x128xf32>
    %657 = arith.negf %656 : vector<8x128xf32>
    %658 = math.exp %657 : vector<8x128xf32>
    %cst_229 = arith.constant 1.000000e+00 : f32
    %659 = vector.broadcast %cst_229 : f32 to vector<8x128xf32>
    %660 = arith.addf %659, %658 : vector<8x128xf32>
    %661 = arith.divf %659, %660 : vector<8x128xf32>
    %662 = vector.extract_strided_slice %656 {offsets = [0, 64], sizes = [8, 32], strides = [1, 1]} : vector<8x128xf32> to vector<8x32xf32>
    %663 = math.tanh %662 : vector<8x32xf32>
    %664 = vector.extract_strided_slice %661 {offsets = [0, 32], sizes = [8, 32], strides = [1, 1]} : vector<8x128xf32> to vector<8x32xf32>
    %665 = arith.mulf %664, %651 : vector<8x32xf32>
    %666 = vector.extract_strided_slice %661 {offsets = [0, 0], sizes = [8, 32], strides = [1, 1]} : vector<8x128xf32> to vector<8x32xf32>
    %667 = arith.mulf %666, %663 : vector<8x32xf32>
    %668 = arith.addf %665, %667 : vector<8x32xf32>
    %669 = vector.extract_strided_slice %661 {offsets = [0, 96], sizes = [8, 32], strides = [1, 1]} : vector<8x128xf32> to vector<8x32xf32>
    %670 = math.tanh %668 : vector<8x32xf32>
    %671 = arith.mulf %669, %670 : vector<8x32xf32>
    %c40_230 = arith.constant 40 : index
    %c0_231 = arith.constant 0 : index
    %672 = vector.load %arg1[%c40_230, %c0_231] : memref<64x32xf32, #tpu.memory_space<vmem>>, vector<8x32xf32>
    %673 = arith.mulf %672, %671 : vector<8x32xf32>
    %cst_232 = arith.constant 1.000000e+00 : f32
    %674 = vector.broadcast %cst_232 : f32 to vector<8x32xf32>
    %675 = arith.subf %674, %672 : vector<8x32xf32>
    %676 = arith.mulf %675, %646 : vector<8x32xf32>
    %677 = arith.addf %673, %676 : vector<8x32xf32>
    %678 = arith.mulf %672, %668 : vector<8x32xf32>
    %cst_233 = arith.constant 1.000000e+00 : f32
    %679 = vector.broadcast %cst_233 : f32 to vector<8x32xf32>
    %680 = arith.subf %679, %672 : vector<8x32xf32>
    %681 = arith.mulf %680, %651 : vector<8x32xf32>
    %682 = arith.addf %678, %681 : vector<8x32xf32>
    %683 = arith.mulf %672, %671 : vector<8x32xf32>
    %c40_234 = arith.constant 40 : index
    %c0_235 = arith.constant 0 : index
    %684 = vector.load %arg14[%c40_234, %c0_235] : memref<64x64xf32, #tpu.memory_space<vmem>>, vector<8x32xf32>
    tpu.vector_store %arg14[%c40_234, %c0_235], %683 {strides = array<i32>} : memref<64x64xf32, #tpu.memory_space<vmem>>, vector<8x32xf32>,
    %c48_236 = arith.constant 48 : index
    %c0_237 = arith.constant 0 : index
    %685 = vector.load %arg13[%c48_236, %c0_237] : memref<64x256xf32, #tpu.memory_space<vmem>>, vector<8x128xf32>
    %cst_238 = arith.constant dense<0.000000e+00> : vector<8x128xf32>
    %686 = tpu.matmul %677, %496, %cst_238 {dimension_numbers = #tpu.dot_dimension_numbers<[1], [0], [0], [1], [0, 0, 1, 1], [], []>} : vector<8x32xf32>, vector<32x128xf32>, vector<8x128xf32> -> vector<8x128xf32>
    %687 = arith.addf %685, %686 : vector<8x128xf32>
    %688 = arith.negf %687 : vector<8x128xf32>
    %689 = math.exp %688 : vector<8x128xf32>
    %cst_239 = arith.constant 1.000000e+00 : f32
    %690 = vector.broadcast %cst_239 : f32 to vector<8x128xf32>
    %691 = arith.addf %690, %689 : vector<8x128xf32>
    %692 = arith.divf %690, %691 : vector<8x128xf32>
    %693 = vector.extract_strided_slice %687 {offsets = [0, 64], sizes = [8, 32], strides = [1, 1]} : vector<8x128xf32> to vector<8x32xf32>
    %694 = math.tanh %693 : vector<8x32xf32>
    %695 = vector.extract_strided_slice %692 {offsets = [0, 32], sizes = [8, 32], strides = [1, 1]} : vector<8x128xf32> to vector<8x32xf32>
    %696 = arith.mulf %695, %682 : vector<8x32xf32>
    %697 = vector.extract_strided_slice %692 {offsets = [0, 0], sizes = [8, 32], strides = [1, 1]} : vector<8x128xf32> to vector<8x32xf32>
    %698 = arith.mulf %697, %694 : vector<8x32xf32>
    %699 = arith.addf %696, %698 : vector<8x32xf32>
    %700 = vector.extract_strided_slice %692 {offsets = [0, 96], sizes = [8, 32], strides = [1, 1]} : vector<8x128xf32> to vector<8x32xf32>
    %701 = math.tanh %699 : vector<8x32xf32>
    %702 = arith.mulf %700, %701 : vector<8x32xf32>
    %c48_240 = arith.constant 48 : index
    %c0_241 = arith.constant 0 : index
    %703 = vector.load %arg1[%c48_240, %c0_241] : memref<64x32xf32, #tpu.memory_space<vmem>>, vector<8x32xf32>
    %704 = arith.mulf %703, %702 : vector<8x32xf32>
    %cst_242 = arith.constant 1.000000e+00 : f32
    %705 = vector.broadcast %cst_242 : f32 to vector<8x32xf32>
    %706 = arith.subf %705, %703 : vector<8x32xf32>
    %707 = arith.mulf %706, %677 : vector<8x32xf32>
    %708 = arith.addf %704, %707 : vector<8x32xf32>
    %709 = arith.mulf %703, %699 : vector<8x32xf32>
    %cst_243 = arith.constant 1.000000e+00 : f32
    %710 = vector.broadcast %cst_243 : f32 to vector<8x32xf32>
    %711 = arith.subf %710, %703 : vector<8x32xf32>
    %712 = arith.mulf %711, %682 : vector<8x32xf32>
    %713 = arith.addf %709, %712 : vector<8x32xf32>
    %714 = arith.mulf %703, %702 : vector<8x32xf32>
    %c48_244 = arith.constant 48 : index
    %c0_245 = arith.constant 0 : index
    %715 = vector.load %arg14[%c48_244, %c0_245] : memref<64x64xf32, #tpu.memory_space<vmem>>, vector<8x32xf32>
    tpu.vector_store %arg14[%c48_244, %c0_245], %714 {strides = array<i32>} : memref<64x64xf32, #tpu.memory_space<vmem>>, vector<8x32xf32>,
    %c56_246 = arith.constant 56 : index
    %c0_247 = arith.constant 0 : index
    %716 = vector.load %arg13[%c56_246, %c0_247] : memref<64x256xf32, #tpu.memory_space<vmem>>, vector<8x128xf32>
    %cst_248 = arith.constant dense<0.000000e+00> : vector<8x128xf32>
    %717 = tpu.matmul %708, %496, %cst_248 {dimension_numbers = #tpu.dot_dimension_numbers<[1], [0], [0], [1], [0, 0, 1, 1], [], []>} : vector<8x32xf32>, vector<32x128xf32>, vector<8x128xf32> -> vector<8x128xf32>
    %718 = arith.addf %716, %717 : vector<8x128xf32>
    %719 = arith.negf %718 : vector<8x128xf32>
    %720 = math.exp %719 : vector<8x128xf32>
    %cst_249 = arith.constant 1.000000e+00 : f32
    %721 = vector.broadcast %cst_249 : f32 to vector<8x128xf32>
    %722 = arith.addf %721, %720 : vector<8x128xf32>
    %723 = arith.divf %721, %722 : vector<8x128xf32>
    %724 = vector.extract_strided_slice %718 {offsets = [0, 64], sizes = [8, 32], strides = [1, 1]} : vector<8x128xf32> to vector<8x32xf32>
    %725 = math.tanh %724 : vector<8x32xf32>
    %726 = vector.extract_strided_slice %723 {offsets = [0, 32], sizes = [8, 32], strides = [1, 1]} : vector<8x128xf32> to vector<8x32xf32>
    %727 = arith.mulf %726, %713 : vector<8x32xf32>
    %728 = vector.extract_strided_slice %723 {offsets = [0, 0], sizes = [8, 32], strides = [1, 1]} : vector<8x128xf32> to vector<8x32xf32>
    %729 = arith.mulf %728, %725 : vector<8x32xf32>
    %730 = arith.addf %727, %729 : vector<8x32xf32>
    %731 = vector.extract_strided_slice %723 {offsets = [0, 96], sizes = [8, 32], strides = [1, 1]} : vector<8x128xf32> to vector<8x32xf32>
    %732 = math.tanh %730 : vector<8x32xf32>
    %733 = arith.mulf %731, %732 : vector<8x32xf32>
    %c56_250 = arith.constant 56 : index
    %c0_251 = arith.constant 0 : index
    %734 = vector.load %arg1[%c56_250, %c0_251] : memref<64x32xf32, #tpu.memory_space<vmem>>, vector<8x32xf32>
    %735 = arith.mulf %734, %733 : vector<8x32xf32>
    %c56_252 = arith.constant 56 : index
    %c0_253 = arith.constant 0 : index
    %736 = vector.load %arg14[%c56_252, %c0_253] : memref<64x64xf32, #tpu.memory_space<vmem>>, vector<8x32xf32>
    tpu.vector_store %arg14[%c56_252, %c0_253], %735 {strides = array<i32>} : memref<64x64xf32, #tpu.memory_space<vmem>>, vector<8x32xf32>,
    %c0_254 = arith.constant 0 : index
    %c0_255 = arith.constant 0 : index
    %737 = vector.load %arg9[%c0_254, %c0_255] : memref<32x128xf32, #tpu.memory_space<vmem>>, vector<32x128xf32>
    %cst_256 = arith.constant 0.000000e+00 : f32
    %738 = vector.broadcast %cst_256 : f32 to vector<8x32xf32>
    %cst_257 = arith.constant 0.000000e+00 : f32
    %739 = vector.broadcast %cst_257 : f32 to vector<8x32xf32>
    %c56_258 = arith.constant 56 : index
    %c128_259 = arith.constant 128 : index
    %740 = vector.load %arg13[%c56_258, %c128_259] : memref<64x256xf32, #tpu.memory_space<vmem>>, vector<8x128xf32>
    %cst_260 = arith.constant dense<0.000000e+00> : vector<8x128xf32>
    %741 = tpu.matmul %738, %737, %cst_260 {dimension_numbers = #tpu.dot_dimension_numbers<[1], [0], [0], [1], [0, 0, 1, 1], [], []>} : vector<8x32xf32>, vector<32x128xf32>, vector<8x128xf32> -> vector<8x128xf32>
    %742 = arith.addf %740, %741 : vector<8x128xf32>
    %743 = arith.negf %742 : vector<8x128xf32>
    %744 = math.exp %743 : vector<8x128xf32>
    %cst_261 = arith.constant 1.000000e+00 : f32
    %745 = vector.broadcast %cst_261 : f32 to vector<8x128xf32>
    %746 = arith.addf %745, %744 : vector<8x128xf32>
    %747 = arith.divf %745, %746 : vector<8x128xf32>
    %748 = vector.extract_strided_slice %742 {offsets = [0, 64], sizes = [8, 32], strides = [1, 1]} : vector<8x128xf32> to vector<8x32xf32>
    %749 = math.tanh %748 : vector<8x32xf32>
    %750 = vector.extract_strided_slice %747 {offsets = [0, 32], sizes = [8, 32], strides = [1, 1]} : vector<8x128xf32> to vector<8x32xf32>
    %751 = arith.mulf %750, %739 : vector<8x32xf32>
    %752 = vector.extract_strided_slice %747 {offsets = [0, 0], sizes = [8, 32], strides = [1, 1]} : vector<8x128xf32> to vector<8x32xf32>
    %753 = arith.mulf %752, %749 : vector<8x32xf32>
    %754 = arith.addf %751, %753 : vector<8x32xf32>
    %755 = vector.extract_strided_slice %747 {offsets = [0, 96], sizes = [8, 32], strides = [1, 1]} : vector<8x128xf32> to vector<8x32xf32>
    %756 = math.tanh %754 : vector<8x32xf32>
    %757 = arith.mulf %755, %756 : vector<8x32xf32>
    %c56_262 = arith.constant 56 : index
    %c0_263 = arith.constant 0 : index
    %758 = vector.load %arg1[%c56_262, %c0_263] : memref<64x32xf32, #tpu.memory_space<vmem>>, vector<8x32xf32>
    %759 = arith.mulf %758, %757 : vector<8x32xf32>
    %cst_264 = arith.constant 1.000000e+00 : f32
    %760 = vector.broadcast %cst_264 : f32 to vector<8x32xf32>
    %761 = arith.subf %760, %758 : vector<8x32xf32>
    %762 = arith.mulf %761, %738 : vector<8x32xf32>
    %763 = arith.addf %759, %762 : vector<8x32xf32>
    %764 = arith.mulf %758, %754 : vector<8x32xf32>
    %cst_265 = arith.constant 1.000000e+00 : f32
    %765 = vector.broadcast %cst_265 : f32 to vector<8x32xf32>
    %766 = arith.subf %765, %758 : vector<8x32xf32>
    %767 = arith.mulf %766, %739 : vector<8x32xf32>
    %768 = arith.addf %764, %767 : vector<8x32xf32>
    %769 = arith.mulf %758, %757 : vector<8x32xf32>
    %c56_266 = arith.constant 56 : index
    %c32_267 = arith.constant 32 : index
    %770 = vector.load %arg14[%c56_266, %c32_267] : memref<64x64xf32, #tpu.memory_space<vmem>>, vector<8x32xf32>
    tpu.vector_store %arg14[%c56_266, %c32_267], %769 {strides = array<i32>} : memref<64x64xf32, #tpu.memory_space<vmem>>, vector<8x32xf32>,
    %c48_268 = arith.constant 48 : index
    %c128_269 = arith.constant 128 : index
    %771 = vector.load %arg13[%c48_268, %c128_269] : memref<64x256xf32, #tpu.memory_space<vmem>>, vector<8x128xf32>
    %cst_270 = arith.constant dense<0.000000e+00> : vector<8x128xf32>
    %772 = tpu.matmul %763, %737, %cst_270 {dimension_numbers = #tpu.dot_dimension_numbers<[1], [0], [0], [1], [0, 0, 1, 1], [], []>} : vector<8x32xf32>, vector<32x128xf32>, vector<8x128xf32> -> vector<8x128xf32>
    %773 = arith.addf %771, %772 : vector<8x128xf32>
    %774 = arith.negf %773 : vector<8x128xf32>
    %775 = math.exp %774 : vector<8x128xf32>
    %cst_271 = arith.constant 1.000000e+00 : f32
    %776 = vector.broadcast %cst_271 : f32 to vector<8x128xf32>
    %777 = arith.addf %776, %775 : vector<8x128xf32>
    %778 = arith.divf %776, %777 : vector<8x128xf32>
    %779 = vector.extract_strided_slice %773 {offsets = [0, 64], sizes = [8, 32], strides = [1, 1]} : vector<8x128xf32> to vector<8x32xf32>
    %780 = math.tanh %779 : vector<8x32xf32>
    %781 = vector.extract_strided_slice %778 {offsets = [0, 32], sizes = [8, 32], strides = [1, 1]} : vector<8x128xf32> to vector<8x32xf32>
    %782 = arith.mulf %781, %768 : vector<8x32xf32>
    %783 = vector.extract_strided_slice %778 {offsets = [0, 0], sizes = [8, 32], strides = [1, 1]} : vector<8x128xf32> to vector<8x32xf32>
    %784 = arith.mulf %783, %780 : vector<8x32xf32>
    %785 = arith.addf %782, %784 : vector<8x32xf32>
    %786 = vector.extract_strided_slice %778 {offsets = [0, 96], sizes = [8, 32], strides = [1, 1]} : vector<8x128xf32> to vector<8x32xf32>
    %787 = math.tanh %785 : vector<8x32xf32>
    %788 = arith.mulf %786, %787 : vector<8x32xf32>
    %c48_272 = arith.constant 48 : index
    %c0_273 = arith.constant 0 : index
    %789 = vector.load %arg1[%c48_272, %c0_273] : memref<64x32xf32, #tpu.memory_space<vmem>>, vector<8x32xf32>
    %790 = arith.mulf %789, %788 : vector<8x32xf32>
    %cst_274 = arith.constant 1.000000e+00 : f32
    %791 = vector.broadcast %cst_274 : f32 to vector<8x32xf32>
    %792 = arith.subf %791, %789 : vector<8x32xf32>
    %793 = arith.mulf %792, %763 : vector<8x32xf32>
    %794 = arith.addf %790, %793 : vector<8x32xf32>
    %795 = arith.mulf %789, %785 : vector<8x32xf32>
    %cst_275 = arith.constant 1.000000e+00 : f32
    %796 = vector.broadcast %cst_275 : f32 to vector<8x32xf32>
    %797 = arith.subf %796, %789 : vector<8x32xf32>
    %798 = arith.mulf %797, %768 : vector<8x32xf32>
    %799 = arith.addf %795, %798 : vector<8x32xf32>
    %800 = arith.mulf %789, %788 : vector<8x32xf32>
    %c48_276 = arith.constant 48 : index
    %c32_277 = arith.constant 32 : index
    %801 = vector.load %arg14[%c48_276, %c32_277] : memref<64x64xf32, #tpu.memory_space<vmem>>, vector<8x32xf32>
    tpu.vector_store %arg14[%c48_276, %c32_277], %800 {strides = array<i32>} : memref<64x64xf32, #tpu.memory_space<vmem>>, vector<8x32xf32>,
    %c40_278 = arith.constant 40 : index
    %c128_279 = arith.constant 128 : index
    %802 = vector.load %arg13[%c40_278, %c128_279] : memref<64x256xf32, #tpu.memory_space<vmem>>, vector<8x128xf32>
    %cst_280 = arith.constant dense<0.000000e+00> : vector<8x128xf32>
    %803 = tpu.matmul %794, %737, %cst_280 {dimension_numbers = #tpu.dot_dimension_numbers<[1], [0], [0], [1], [0, 0, 1, 1], [], []>} : vector<8x32xf32>, vector<32x128xf32>, vector<8x128xf32> -> vector<8x128xf32>
    %804 = arith.addf %802, %803 : vector<8x128xf32>
    %805 = arith.negf %804 : vector<8x128xf32>
    %806 = math.exp %805 : vector<8x128xf32>
    %cst_281 = arith.constant 1.000000e+00 : f32
    %807 = vector.broadcast %cst_281 : f32 to vector<8x128xf32>
    %808 = arith.addf %807, %806 : vector<8x128xf32>
    %809 = arith.divf %807, %808 : vector<8x128xf32>
    %810 = vector.extract_strided_slice %804 {offsets = [0, 64], sizes = [8, 32], strides = [1, 1]} : vector<8x128xf32> to vector<8x32xf32>
    %811 = math.tanh %810 : vector<8x32xf32>
    %812 = vector.extract_strided_slice %809 {offsets = [0, 32], sizes = [8, 32], strides = [1, 1]} : vector<8x128xf32> to vector<8x32xf32>
    %813 = arith.mulf %812, %799 : vector<8x32xf32>
    %814 = vector.extract_strided_slice %809 {offsets = [0, 0], sizes = [8, 32], strides = [1, 1]} : vector<8x128xf32> to vector<8x32xf32>
    %815 = arith.mulf %814, %811 : vector<8x32xf32>
    %816 = arith.addf %813, %815 : vector<8x32xf32>
    %817 = vector.extract_strided_slice %809 {offsets = [0, 96], sizes = [8, 32], strides = [1, 1]} : vector<8x128xf32> to vector<8x32xf32>
    %818 = math.tanh %816 : vector<8x32xf32>
    %819 = arith.mulf %817, %818 : vector<8x32xf32>
    %c40_282 = arith.constant 40 : index
    %c0_283 = arith.constant 0 : index
    %820 = vector.load %arg1[%c40_282, %c0_283] : memref<64x32xf32, #tpu.memory_space<vmem>>, vector<8x32xf32>
    %821 = arith.mulf %820, %819 : vector<8x32xf32>
    %cst_284 = arith.constant 1.000000e+00 : f32
    %822 = vector.broadcast %cst_284 : f32 to vector<8x32xf32>
    %823 = arith.subf %822, %820 : vector<8x32xf32>
    %824 = arith.mulf %823, %794 : vector<8x32xf32>
    %825 = arith.addf %821, %824 : vector<8x32xf32>
    %826 = arith.mulf %820, %816 : vector<8x32xf32>
    %cst_285 = arith.constant 1.000000e+00 : f32
    %827 = vector.broadcast %cst_285 : f32 to vector<8x32xf32>
    %828 = arith.subf %827, %820 : vector<8x32xf32>
    %829 = arith.mulf %828, %799 : vector<8x32xf32>
    %830 = arith.addf %826, %829 : vector<8x32xf32>
    %831 = arith.mulf %820, %819 : vector<8x32xf32>
    %c40_286 = arith.constant 40 : index
    %c32_287 = arith.constant 32 : index
    %832 = vector.load %arg14[%c40_286, %c32_287] : memref<64x64xf32, #tpu.memory_space<vmem>>, vector<8x32xf32>
    tpu.vector_store %arg14[%c40_286, %c32_287], %831 {strides = array<i32>} : memref<64x64xf32, #tpu.memory_space<vmem>>, vector<8x32xf32>,
    %c32_288 = arith.constant 32 : index
    %c128_289 = arith.constant 128 : index
    %833 = vector.load %arg13[%c32_288, %c128_289] : memref<64x256xf32, #tpu.memory_space<vmem>>, vector<8x128xf32>
    %cst_290 = arith.constant dense<0.000000e+00> : vector<8x128xf32>
    %834 = tpu.matmul %825, %737, %cst_290 {dimension_numbers = #tpu.dot_dimension_numbers<[1], [0], [0], [1], [0, 0, 1, 1], [], []>} : vector<8x32xf32>, vector<32x128xf32>, vector<8x128xf32> -> vector<8x128xf32>
    %835 = arith.addf %833, %834 : vector<8x128xf32>
    %836 = arith.negf %835 : vector<8x128xf32>
    %837 = math.exp %836 : vector<8x128xf32>
    %cst_291 = arith.constant 1.000000e+00 : f32
    %838 = vector.broadcast %cst_291 : f32 to vector<8x128xf32>
    %839 = arith.addf %838, %837 : vector<8x128xf32>
    %840 = arith.divf %838, %839 : vector<8x128xf32>
    %841 = vector.extract_strided_slice %835 {offsets = [0, 64], sizes = [8, 32], strides = [1, 1]} : vector<8x128xf32> to vector<8x32xf32>
    %842 = math.tanh %841 : vector<8x32xf32>
    %843 = vector.extract_strided_slice %840 {offsets = [0, 32], sizes = [8, 32], strides = [1, 1]} : vector<8x128xf32> to vector<8x32xf32>
    %844 = arith.mulf %843, %830 : vector<8x32xf32>
    %845 = vector.extract_strided_slice %840 {offsets = [0, 0], sizes = [8, 32], strides = [1, 1]} : vector<8x128xf32> to vector<8x32xf32>
    %846 = arith.mulf %845, %842 : vector<8x32xf32>
    %847 = arith.addf %844, %846 : vector<8x32xf32>
    %848 = vector.extract_strided_slice %840 {offsets = [0, 96], sizes = [8, 32], strides = [1, 1]} : vector<8x128xf32> to vector<8x32xf32>
    %849 = math.tanh %847 : vector<8x32xf32>
    %850 = arith.mulf %848, %849 : vector<8x32xf32>
    %c32_292 = arith.constant 32 : index
    %c0_293 = arith.constant 0 : index
    %851 = vector.load %arg1[%c32_292, %c0_293] : memref<64x32xf32, #tpu.memory_space<vmem>>, vector<8x32xf32>
    %852 = arith.mulf %851, %850 : vector<8x32xf32>
    %cst_294 = arith.constant 1.000000e+00 : f32
    %853 = vector.broadcast %cst_294 : f32 to vector<8x32xf32>
    %854 = arith.subf %853, %851 : vector<8x32xf32>
    %855 = arith.mulf %854, %825 : vector<8x32xf32>
    %856 = arith.addf %852, %855 : vector<8x32xf32>
    %857 = arith.mulf %851, %847 : vector<8x32xf32>
    %cst_295 = arith.constant 1.000000e+00 : f32
    %858 = vector.broadcast %cst_295 : f32 to vector<8x32xf32>
    %859 = arith.subf %858, %851 : vector<8x32xf32>
    %860 = arith.mulf %859, %830 : vector<8x32xf32>
    %861 = arith.addf %857, %860 : vector<8x32xf32>
    %862 = arith.mulf %851, %850 : vector<8x32xf32>
    %c32_296 = arith.constant 32 : index
    %c32_297 = arith.constant 32 : index
    %863 = vector.load %arg14[%c32_296, %c32_297] : memref<64x64xf32, #tpu.memory_space<vmem>>, vector<8x32xf32>
    tpu.vector_store %arg14[%c32_296, %c32_297], %862 {strides = array<i32>} : memref<64x64xf32, #tpu.memory_space<vmem>>, vector<8x32xf32>,
    %c24_298 = arith.constant 24 : index
    %c128_299 = arith.constant 128 : index
    %864 = vector.load %arg13[%c24_298, %c128_299] : memref<64x256xf32, #tpu.memory_space<vmem>>, vector<8x128xf32>
    %cst_300 = arith.constant dense<0.000000e+00> : vector<8x128xf32>
    %865 = tpu.matmul %856, %737, %cst_300 {dimension_numbers = #tpu.dot_dimension_numbers<[1], [0], [0], [1], [0, 0, 1, 1], [], []>} : vector<8x32xf32>, vector<32x128xf32>, vector<8x128xf32> -> vector<8x128xf32>
    %866 = arith.addf %864, %865 : vector<8x128xf32>
    %867 = arith.negf %866 : vector<8x128xf32>
    %868 = math.exp %867 : vector<8x128xf32>
    %cst_301 = arith.constant 1.000000e+00 : f32
    %869 = vector.broadcast %cst_301 : f32 to vector<8x128xf32>
    %870 = arith.addf %869, %868 : vector<8x128xf32>
    %871 = arith.divf %869, %870 : vector<8x128xf32>
    %872 = vector.extract_strided_slice %866 {offsets = [0, 64], sizes = [8, 32], strides = [1, 1]} : vector<8x128xf32> to vector<8x32xf32>
    %873 = math.tanh %872 : vector<8x32xf32>
    %874 = vector.extract_strided_slice %871 {offsets = [0, 32], sizes = [8, 32], strides = [1, 1]} : vector<8x128xf32> to vector<8x32xf32>
    %875 = arith.mulf %874, %861 : vector<8x32xf32>
    %876 = vector.extract_strided_slice %871 {offsets = [0, 0], sizes = [8, 32], strides = [1, 1]} : vector<8x128xf32> to vector<8x32xf32>
    %877 = arith.mulf %876, %873 : vector<8x32xf32>
    %878 = arith.addf %875, %877 : vector<8x32xf32>
    %879 = vector.extract_strided_slice %871 {offsets = [0, 96], sizes = [8, 32], strides = [1, 1]} : vector<8x128xf32> to vector<8x32xf32>
    %880 = math.tanh %878 : vector<8x32xf32>
    %881 = arith.mulf %879, %880 : vector<8x32xf32>
    %c24_302 = arith.constant 24 : index
    %c0_303 = arith.constant 0 : index
    %882 = vector.load %arg1[%c24_302, %c0_303] : memref<64x32xf32, #tpu.memory_space<vmem>>, vector<8x32xf32>
    %883 = arith.mulf %882, %881 : vector<8x32xf32>
    %cst_304 = arith.constant 1.000000e+00 : f32
    %884 = vector.broadcast %cst_304 : f32 to vector<8x32xf32>
    %885 = arith.subf %884, %882 : vector<8x32xf32>
    %886 = arith.mulf %885, %856 : vector<8x32xf32>
    %887 = arith.addf %883, %886 : vector<8x32xf32>
    %888 = arith.mulf %882, %878 : vector<8x32xf32>
    %cst_305 = arith.constant 1.000000e+00 : f32
    %889 = vector.broadcast %cst_305 : f32 to vector<8x32xf32>
    %890 = arith.subf %889, %882 : vector<8x32xf32>
    %891 = arith.mulf %890, %861 : vector<8x32xf32>
    %892 = arith.addf %888, %891 : vector<8x32xf32>
    %893 = arith.mulf %882, %881 : vector<8x32xf32>
    %c24_306 = arith.constant 24 : index
    %c32_307 = arith.constant 32 : index
    %894 = vector.load %arg14[%c24_306, %c32_307] : memref<64x64xf32, #tpu.memory_space<vmem>>, vector<8x32xf32>
    tpu.vector_store %arg14[%c24_306, %c32_307], %893 {strides = array<i32>} : memref<64x64xf32, #tpu.memory_space<vmem>>, vector<8x32xf32>,
    %c16_308 = arith.constant 16 : index
    %c128_309 = arith.constant 128 : index
    %895 = vector.load %arg13[%c16_308, %c128_309] : memref<64x256xf32, #tpu.memory_space<vmem>>, vector<8x128xf32>
    %cst_310 = arith.constant dense<0.000000e+00> : vector<8x128xf32>
    %896 = tpu.matmul %887, %737, %cst_310 {dimension_numbers = #tpu.dot_dimension_numbers<[1], [0], [0], [1], [0, 0, 1, 1], [], []>} : vector<8x32xf32>, vector<32x128xf32>, vector<8x128xf32> -> vector<8x128xf32>
    %897 = arith.addf %895, %896 : vector<8x128xf32>
    %898 = arith.negf %897 : vector<8x128xf32>
    %899 = math.exp %898 : vector<8x128xf32>
    %cst_311 = arith.constant 1.000000e+00 : f32
    %900 = vector.broadcast %cst_311 : f32 to vector<8x128xf32>
    %901 = arith.addf %900, %899 : vector<8x128xf32>
    %902 = arith.divf %900, %901 : vector<8x128xf32>
    %903 = vector.extract_strided_slice %897 {offsets = [0, 64], sizes = [8, 32], strides = [1, 1]} : vector<8x128xf32> to vector<8x32xf32>
    %904 = math.tanh %903 : vector<8x32xf32>
    %905 = vector.extract_strided_slice %902 {offsets = [0, 32], sizes = [8, 32], strides = [1, 1]} : vector<8x128xf32> to vector<8x32xf32>
    %906 = arith.mulf %905, %892 : vector<8x32xf32>
    %907 = vector.extract_strided_slice %902 {offsets = [0, 0], sizes = [8, 32], strides = [1, 1]} : vector<8x128xf32> to vector<8x32xf32>
    %908 = arith.mulf %907, %904 : vector<8x32xf32>
    %909 = arith.addf %906, %908 : vector<8x32xf32>
    %910 = vector.extract_strided_slice %902 {offsets = [0, 96], sizes = [8, 32], strides = [1, 1]} : vector<8x128xf32> to vector<8x32xf32>
    %911 = math.tanh %909 : vector<8x32xf32>
    %912 = arith.mulf %910, %911 : vector<8x32xf32>
    %c16_312 = arith.constant 16 : index
    %c0_313 = arith.constant 0 : index
    %913 = vector.load %arg1[%c16_312, %c0_313] : memref<64x32xf32, #tpu.memory_space<vmem>>, vector<8x32xf32>
    %914 = arith.mulf %913, %912 : vector<8x32xf32>
    %cst_314 = arith.constant 1.000000e+00 : f32
    %915 = vector.broadcast %cst_314 : f32 to vector<8x32xf32>
    %916 = arith.subf %915, %913 : vector<8x32xf32>
    %917 = arith.mulf %916, %887 : vector<8x32xf32>
    %918 = arith.addf %914, %917 : vector<8x32xf32>
    %919 = arith.mulf %913, %909 : vector<8x32xf32>
    %cst_315 = arith.constant 1.000000e+00 : f32
    %920 = vector.broadcast %cst_315 : f32 to vector<8x32xf32>
    %921 = arith.subf %920, %913 : vector<8x32xf32>
    %922 = arith.mulf %921, %892 : vector<8x32xf32>
    %923 = arith.addf %919, %922 : vector<8x32xf32>
    %924 = arith.mulf %913, %912 : vector<8x32xf32>
    %c16_316 = arith.constant 16 : index
    %c32_317 = arith.constant 32 : index
    %925 = vector.load %arg14[%c16_316, %c32_317] : memref<64x64xf32, #tpu.memory_space<vmem>>, vector<8x32xf32>
    tpu.vector_store %arg14[%c16_316, %c32_317], %924 {strides = array<i32>} : memref<64x64xf32, #tpu.memory_space<vmem>>, vector<8x32xf32>,
    %c8_318 = arith.constant 8 : index
    %c128_319 = arith.constant 128 : index
    %926 = vector.load %arg13[%c8_318, %c128_319] : memref<64x256xf32, #tpu.memory_space<vmem>>, vector<8x128xf32>
    %cst_320 = arith.constant dense<0.000000e+00> : vector<8x128xf32>
    %927 = tpu.matmul %918, %737, %cst_320 {dimension_numbers = #tpu.dot_dimension_numbers<[1], [0], [0], [1], [0, 0, 1, 1], [], []>} : vector<8x32xf32>, vector<32x128xf32>, vector<8x128xf32> -> vector<8x128xf32>
    %928 = arith.addf %926, %927 : vector<8x128xf32>
    %929 = arith.negf %928 : vector<8x128xf32>
    %930 = math.exp %929 : vector<8x128xf32>
    %cst_321 = arith.constant 1.000000e+00 : f32
    %931 = vector.broadcast %cst_321 : f32 to vector<8x128xf32>
    %932 = arith.addf %931, %930 : vector<8x128xf32>
    %933 = arith.divf %931, %932 : vector<8x128xf32>
    %934 = vector.extract_strided_slice %928 {offsets = [0, 64], sizes = [8, 32], strides = [1, 1]} : vector<8x128xf32> to vector<8x32xf32>
    %935 = math.tanh %934 : vector<8x32xf32>
    %936 = vector.extract_strided_slice %933 {offsets = [0, 32], sizes = [8, 32], strides = [1, 1]} : vector<8x128xf32> to vector<8x32xf32>
    %937 = arith.mulf %936, %923 : vector<8x32xf32>
    %938 = vector.extract_strided_slice %933 {offsets = [0, 0], sizes = [8, 32], strides = [1, 1]} : vector<8x128xf32> to vector<8x32xf32>
    %939 = arith.mulf %938, %935 : vector<8x32xf32>
    %940 = arith.addf %937, %939 : vector<8x32xf32>
    %941 = vector.extract_strided_slice %933 {offsets = [0, 96], sizes = [8, 32], strides = [1, 1]} : vector<8x128xf32> to vector<8x32xf32>
    %942 = math.tanh %940 : vector<8x32xf32>
    %943 = arith.mulf %941, %942 : vector<8x32xf32>
    %c8_322 = arith.constant 8 : index
    %c0_323 = arith.constant 0 : index
    %944 = vector.load %arg1[%c8_322, %c0_323] : memref<64x32xf32, #tpu.memory_space<vmem>>, vector<8x32xf32>
    %945 = arith.mulf %944, %943 : vector<8x32xf32>
    %cst_324 = arith.constant 1.000000e+00 : f32
    %946 = vector.broadcast %cst_324 : f32 to vector<8x32xf32>
    %947 = arith.subf %946, %944 : vector<8x32xf32>
    %948 = arith.mulf %947, %918 : vector<8x32xf32>
    %949 = arith.addf %945, %948 : vector<8x32xf32>
    %950 = arith.mulf %944, %940 : vector<8x32xf32>
    %cst_325 = arith.constant 1.000000e+00 : f32
    %951 = vector.broadcast %cst_325 : f32 to vector<8x32xf32>
    %952 = arith.subf %951, %944 : vector<8x32xf32>
    %953 = arith.mulf %952, %923 : vector<8x32xf32>
    %954 = arith.addf %950, %953 : vector<8x32xf32>
    %955 = arith.mulf %944, %943 : vector<8x32xf32>
    %c8_326 = arith.constant 8 : index
    %c32_327 = arith.constant 32 : index
    %956 = vector.load %arg14[%c8_326, %c32_327] : memref<64x64xf32, #tpu.memory_space<vmem>>, vector<8x32xf32>
    tpu.vector_store %arg14[%c8_326, %c32_327], %955 {strides = array<i32>} : memref<64x64xf32, #tpu.memory_space<vmem>>, vector<8x32xf32>,
    %c0_328 = arith.constant 0 : index
    %c128_329 = arith.constant 128 : index
    %957 = vector.load %arg13[%c0_328, %c128_329] : memref<64x256xf32, #tpu.memory_space<vmem>>, vector<8x128xf32>
    %cst_330 = arith.constant dense<0.000000e+00> : vector<8x128xf32>
    %958 = tpu.matmul %949, %737, %cst_330 {dimension_numbers = #tpu.dot_dimension_numbers<[1], [0], [0], [1], [0, 0, 1, 1], [], []>} : vector<8x32xf32>, vector<32x128xf32>, vector<8x128xf32> -> vector<8x128xf32>
    %959 = arith.addf %957, %958 : vector<8x128xf32>
    %960 = arith.negf %959 : vector<8x128xf32>
    %961 = math.exp %960 : vector<8x128xf32>
    %cst_331 = arith.constant 1.000000e+00 : f32
    %962 = vector.broadcast %cst_331 : f32 to vector<8x128xf32>
    %963 = arith.addf %962, %961 : vector<8x128xf32>
    %964 = arith.divf %962, %963 : vector<8x128xf32>
    %965 = vector.extract_strided_slice %959 {offsets = [0, 64], sizes = [8, 32], strides = [1, 1]} : vector<8x128xf32> to vector<8x32xf32>
    %966 = math.tanh %965 : vector<8x32xf32>
    %967 = vector.extract_strided_slice %964 {offsets = [0, 32], sizes = [8, 32], strides = [1, 1]} : vector<8x128xf32> to vector<8x32xf32>
    %968 = arith.mulf %967, %954 : vector<8x32xf32>
    %969 = vector.extract_strided_slice %964 {offsets = [0, 0], sizes = [8, 32], strides = [1, 1]} : vector<8x128xf32> to vector<8x32xf32>
    %970 = arith.mulf %969, %966 : vector<8x32xf32>
    %971 = arith.addf %968, %970 : vector<8x32xf32>
    %972 = vector.extract_strided_slice %964 {offsets = [0, 96], sizes = [8, 32], strides = [1, 1]} : vector<8x128xf32> to vector<8x32xf32>
    %973 = math.tanh %971 : vector<8x32xf32>
    %974 = arith.mulf %972, %973 : vector<8x32xf32>
    %c0_332 = arith.constant 0 : index
    %c0_333 = arith.constant 0 : index
    %975 = vector.load %arg1[%c0_332, %c0_333] : memref<64x32xf32, #tpu.memory_space<vmem>>, vector<8x32xf32>
    %976 = arith.mulf %975, %974 : vector<8x32xf32>
    %c0_334 = arith.constant 0 : index
    %c32_335 = arith.constant 32 : index
    %977 = vector.load %arg14[%c0_334, %c32_335] : memref<64x64xf32, #tpu.memory_space<vmem>>, vector<8x32xf32>
    tpu.vector_store %arg14[%c0_334, %c32_335], %976 {strides = array<i32>} : memref<64x64xf32, #tpu.memory_space<vmem>>, vector<8x32xf32>,
    %c0_336 = arith.constant 0 : index
    %c0_337 = arith.constant 0 : index
    %978 = vector.load %arg14[%c0_336, %c0_337] : memref<64x64xf32, #tpu.memory_space<vmem>>, vector<64x64xf32>
    %c0_338 = arith.constant 0 : index
    %c0_339 = arith.constant 0 : index
    %979 = vector.load %arg10[%c0_338, %c0_339] : memref<64x128xf32, #tpu.memory_space<vmem>>, vector<64x128xf32>
    %cst_340 = arith.constant dense<0.000000e+00> : vector<64x128xf32>
    %980 = tpu.matmul %978, %979, %cst_340 {dimension_numbers = #tpu.dot_dimension_numbers<[1], [0], [0], [1], [0, 0, 1, 1], [], []>} : vector<64x64xf32>, vector<64x128xf32>, vector<64x128xf32> -> vector<64x128xf32>
    %c0_341 = arith.constant 0 : index
    %c0_342 = arith.constant 0 : index
    %981 = vector.load %arg11[%c0_341, %c0_342] : memref<1x128xf32, #tpu.memory_space<vmem>>, vector<1x128xf32>
    %982 = vector.broadcast %981 : vector<1x128xf32> to vector<64x128xf32>
    %983 = arith.addf %980, %982 : vector<64x128xf32>
    %cst_343 = arith.constant dense<0xFF800000> : vector<64xf32>
    %984 = vector.multi_reduction <maximumf>, %983, %cst_343 [1] : vector<64x128xf32> to vector<64xf32>
    %985 = vector.shape_cast %984 : vector<64xf32> to vector<64x1xf32>
    %986 = vector.broadcast %985 : vector<64x1xf32> to vector<64x128xf32>
    %987 = arith.subf %983, %986 : vector<64x128xf32>
    %988 = math.exp %987 : vector<64x128xf32>
    %cst_344 = arith.constant dense<0.000000e+00> : vector<64xf32>
    %989 = vector.multi_reduction <add>, %988, %cst_344 [1] : vector<64x128xf32> to vector<64xf32>
    %990 = vector.shape_cast %989 : vector<64xf32> to vector<64x1xf32>
    %991 = math.log %990 : vector<64x1xf32>
    %992 = arith.addf %991, %985 : vector<64x1xf32>
    %993 = vector.broadcast %992 : vector<64x1xf32> to vector<64x128xf32>
    %994 = arith.subf %983, %993 : vector<64x128xf32>
    %c0_345 = arith.constant 0 : index
    %c0_346 = arith.constant 0 : index
    %995 = vector.load %arg12[%c0_345, %c0_346] : memref<64x128xf32, #tpu.memory_space<vmem>>, vector<64x128xf32>
    tpu.vector_store %arg12[%c0_345, %c0_346], %994 {strides = array<i32>} : memref<64x128xf32, #tpu.memory_space<vmem>>, vector<64x128xf32>,
    return
  }
}

</mosaic_0001>

<llo_original>
// kernel: tpu_custom_call.1
$region0: #{tpu_custom_call.1}
  #allocation0 [shape = 'u32[]', space=smem, size = 0x4, offset = 0x4, fixed_abs, tag = 'smem constant byte address 0x4 - core index']
  #allocation1 [shape = 'u32[72,128]{1,0:T(1,128)}', space=vmem, size = 0x9000, scoped, tag = 'internal scratch']
  #allocation2 [shape = 'f32[64,256]{1,0:T(8,128)}', space=vmem, size = 0x10000, scoped, tag = 'scratch operand']
  #allocation3 [shape = 'f32[64,64]{1,0:T(8,128)}', space=vmem, size = 0x8000, scoped, tag = 'scratch operand']
  %s0 = inlined_call_operand.vmem [shape: f32[64,32], index: 0, kind: input, shape index: {}]
  %s1 = inlined_call_operand.vmem [shape: f32[64,32], index: 1, kind: input, shape index: {}]
  %s2 = inlined_call_operand.hbm [shape: f32[32,256], index: 2, kind: input, shape index: {}]
  %s3 = inlined_call_operand.vmem [shape: f32[1,256], index: 3, kind: input, shape index: {}]
  %s4 = inlined_call_operand.vmem [shape: f32[32,128], index: 4, kind: input, shape index: {}]
  %s5 = inlined_call_operand.hbm [shape: f32[32,128], index: 5, kind: input, shape index: {}]
  %s6 = inlined_call_operand.vmem [shape: f32[64,256], index: 6, kind: input, shape index: {}]
  %s7 = inlined_call_operand.vmem [shape: f32[1,256], index: 7, kind: input, shape index: {}]
  %s8 = inlined_call_operand.hbm [shape: f32[32,128], index: 8, kind: input, shape index: {}]
  %s9 = inlined_call_operand.hbm [shape: f32[32,128], index: 9, kind: input, shape index: {}]
  %s10 = inlined_call_operand.hbm [shape: f32[64,128], index: 10, kind: input, shape index: {}]
  %s11 = inlined_call_operand.vmem [shape: f32[1,128], index: 11, kind: input, shape index: {}]
  %s12 = inlined_call_operand.hbm [shape: f32[64,128], index: 12, kind: output, shape index: {}]
  %s13 = sld [smem:[#allocation0]]
  $region78: #{tpu_custom_call.1} parent=0
    _
  %s15 = ssub.s32 1, %s13
  %s16 = scalar_select 0, %s15, %s13
  $region1: #{tpu_custom_call.1} parent=0
    #allocation4 [shape = 'u8[32768]{0}', space=vmem, size = 0x8000, scoped, tag = 'input window, operand 2, single buffered']
    #allocation5 [shape = 's32[1]{0}', space=sflag, size = 0x4, scoped, tag = 'scoped memory for tpu_custom_call.1']
    #allocation6 [shape = 's32[1]{0}', space=sflag, size = 0x4, scoped, tag = 'scoped memory for tpu_custom_call.1']
    #allocation7 [shape = 'u8[16384]{0}', space=vmem, size = 0x4000, scoped, tag = 'input window, operand 5, single buffered']
    #allocation8 [shape = 's32[1]{0}', space=sflag, size = 0x4, scoped, tag = 'scoped memory for tpu_custom_call.1']
    #allocation9 [shape = 'u8[16384]{0}', space=vmem, size = 0x4000, scoped, tag = 'input window, operand 8, single buffered']
    #allocation10 [shape = 'u8[16384]{0}', space=vmem, size = 0x4000, scoped, tag = 'input window, operand 9, single buffered']
    #allocation11 [shape = 's32[1]{0}', space=sflag, size = 0x4, scoped, tag = 'scoped memory for tpu_custom_call.1']
    #allocation12 [shape = 'u8[32768]{0}', space=vmem, size = 0x8000, scoped, tag = 'input window, operand 10, single buffered']
    #allocation13 [shape = 'u8[32768]{0}', space=vmem, size = 0x8000, scoped, tag = 'output window, operand 0, single buffered']
    %17 = vsyncpa [#allocation5], 0
    %18 = vsyncpa [#allocation8], 0
    %19 = vsyncpa [#allocation11], 0
    %20 = vsyncpa [#allocation6], 0
    // Predicated region
    $region2: #{tpu_custom_call.1} parent=1 // pred_check
      _
    $region3: #{tpu_custom_call.1} parent=1 // pred_check_branch
      %22 = sbr.rel (0) target = $region5
    $region4: #{tpu_custom_call.1} parent=1 // pred_region
      _
    $region5: #{tpu_custom_call.1} parent=1 // pred_fallthru
      _
    // Predicated region
    $region6: #{tpu_custom_call.1} parent=1 // pred_check
      _
    $region7: #{tpu_custom_call.1} parent=1 // pred_check_branch
      %24 = sbr.rel (0) target = $region9
    $region8: #{tpu_custom_call.1} parent=1 // pred_region
      _
    $region9: #{tpu_custom_call.1} parent=1 // pred_fallthru
      _
    // Predicated region
    $region10: #{tpu_custom_call.1} parent=1 // pred_check
      _
    $region11: #{tpu_custom_call.1} parent=1 // pred_check_branch
      %26 = sbr.rel (0) target = $region13
    $region12: #{tpu_custom_call.1} parent=1 // pred_region
      %28 = vsyncadd [#allocation5], 0
      %s29 = sshll.u32 %s2, 4
      %s30 = int_to_ptr.hbm [resolvable:$true] %s29
      %s31 = sshll.u32 [#allocation4], 4
      %s32 = int_to_ptr.vmem [resolvable:$true] %s31
      %37 = dma.hbm_to_vmem [thread:$0]  %s30, 1024, %s32, [#allocation5], 256, 256, 16
    $region13: #{tpu_custom_call.1} parent=1 // pred_fallthru
      _
    // Predicated region
    $region14: #{tpu_custom_call.1} parent=1 // pred_check
      _
    $region15: #{tpu_custom_call.1} parent=1 // pred_check_branch
      %39 = sbr.rel (0) target = $region17
    $region16: #{tpu_custom_call.1} parent=1 // pred_region
      _
    $region17: #{tpu_custom_call.1} parent=1 // pred_fallthru
      _
    // Predicated region
    $region18: #{tpu_custom_call.1} parent=1 // pred_check
      _
    $region19: #{tpu_custom_call.1} parent=1 // pred_check_branch
      %41 = sbr.rel (0) target = $region21
    $region20: #{tpu_custom_call.1} parent=1 // pred_region
      _
    $region21: #{tpu_custom_call.1} parent=1 // pred_fallthru
      _
    // Predicated region
    $region22: #{tpu_custom_call.1} parent=1 // pred_check
      _
    $region23: #{tpu_custom_call.1} parent=1 // pred_check_branch
      %43 = sbr.rel (0) target = $region25
    $region24: #{tpu_custom_call.1} parent=1 // pred_region
      %45 = vsyncadd [#allocation8], 0
      %s46 = sshll.u32 %s5, 4
      %s47 = int_to_ptr.hbm [resolvable:$true] %s46
      %s48 = sshll.u32 [#allocation7], 4
      %s49 = int_to_ptr.vmem [resolvable:$true] %s48
      %54 = dma.hbm_to_vmem [thread:$0]  %s47, 512, %s49, [#allocation8], 128, 128, 8
    $region25: #{tpu_custom_call.1} parent=1 // pred_fallthru
      _
    // Predicated region
    $region26: #{tpu_custom_call.1} parent=1 // pred_check
      _
    $region27: #{tpu_custom_call.1} parent=1 // pred_check_branch
      %56 = sbr.rel (0) target = $region29
    $region28: #{tpu_custom_call.1} parent=1 // pred_region
      _
    $region29: #{tpu_custom_call.1} parent=1 // pred_fallthru
      _
    // Predicated region
    $region30: #{tpu_custom_call.1} parent=1 // pred_check
      _
    $region31: #{tpu_custom_call.1} parent=1 // pred_check_branch
      %58 = sbr.rel (0) target = $region33
    $region32: #{tpu_custom_call.1} parent=1 // pred_region
      _
    $region33: #{tpu_custom_call.1} parent=1 // pred_fallthru
      _
    // Predicated region
    $region34: #{tpu_custom_call.1} parent=1 // pred_check
      _
    $region35: #{tpu_custom_call.1} parent=1 // pred_check_branch
      %60 = sbr.rel (0) target = $region37
    $region36: #{tpu_custom_call.1} parent=1 // pred_region
      %62 = vsyncadd [#allocation8], 0
      %s63 = sshll.u32 %s8, 4
      %s64 = int_to_ptr.hbm [resolvable:$true] %s63
      %s65 = sshll.u32 [#allocation9], 4
      %s66 = int_to_ptr.vmem [resolvable:$true] %s65
      %71 = dma.hbm_to_vmem [thread:$0]  %s64, 512, %s66, [#allocation8], 128, 128, 8
    $region37: #{tpu_custom_call.1} parent=1 // pred_fallthru
      _
    // Predicated region
    $region38: #{tpu_custom_call.1} parent=1 // pred_check
      _
    $region39: #{tpu_custom_call.1} parent=1 // pred_check_branch
      %73 = sbr.rel (0) target = $region41
    $region40: #{tpu_custom_call.1} parent=1 // pred_region
      %75 = vsyncadd [#allocation11], 0
      %s76 = sshll.u32 %s9, 4
      %s77 = int_to_ptr.hbm [resolvable:$true] %s76
      %s78 = sshll.u32 [#allocation10], 4
      %s79 = int_to_ptr.vmem [resolvable:$true] %s78
      %84 = dma.hbm_to_vmem [thread:$0]  %s77, 512, %s79, [#allocation11], 128, 128, 8
    $region41: #{tpu_custom_call.1} parent=1 // pred_fallthru
      _
    // Predicated region
    $region42: #{tpu_custom_call.1} parent=1 // pred_check
      _
    $region43: #{tpu_custom_call.1} parent=1 // pred_check_branch
      %86 = sbr.rel (0) target = $region45
    $region44: #{tpu_custom_call.1} parent=1 // pred_region
      %88 = vsyncadd [#allocation11], 0
      %s89 = sshll.u32 %s10, 4
      %s90 = int_to_ptr.hbm [resolvable:$true] %s89
      %s91 = sshll.u32 [#allocation12], 4
      %s92 = int_to_ptr.vmem [resolvable:$true] %s91
      %97 = dma.hbm_to_vmem [thread:$0]  %s90, 1024, %s92, [#allocation11], 128, 128, 8
    $region45: #{tpu_custom_call.1} parent=1 // pred_fallthru
      _
    // Predicated region
    $region46: #{tpu_custom_call.1} parent=1 // pred_check
      _
    $region47: #{tpu_custom_call.1} parent=1 // pred_check_branch
      %99 = sbr.rel (0) target = $region49
    $region48: #{tpu_custom_call.1} parent=1 // pred_region
      _
    $region49: #{tpu_custom_call.1} parent=1 // pred_fallthru
      _
    // Predicated region
    $region50: #{tpu_custom_call.1} parent=1 // pred_check
      _
    $region51: #{tpu_custom_call.1} parent=1 // pred_check_branch
      %101 = sbr.rel (0) target = $region53
    $region52: #{tpu_custom_call.1} parent=1 // pred_region
      %103 = dma.done [#allocation5], 1024
    $region53: #{tpu_custom_call.1} parent=1 // pred_fallthru
      _
    // Predicated region
    $region54: #{tpu_custom_call.1} parent=1 // pred_check
      _
    $region55: #{tpu_custom_call.1} parent=1 // pred_check_branch
      %105 = sbr.rel (0) target = $region57
    $region56: #{tpu_custom_call.1} parent=1 // pred_region
      %107 = dma.done [#allocation8], 512
    $region57: #{tpu_custom_call.1} parent=1 // pred_fallthru
      _
    // Predicated region
    $region58: #{tpu_custom_call.1} parent=1 // pred_check
      _
    $region59: #{tpu_custom_call.1} parent=1 // pred_check_branch
      %109 = sbr.rel (0) target = $region61
    $region60: #{tpu_custom_call.1} parent=1 // pred_region
      %111 = dma.done [#allocation8], 512
    $region61: #{tpu_custom_call.1} parent=1 // pred_fallthru
      _
    // Predicated region
    $region62: #{tpu_custom_call.1} parent=1 // pred_check
      _
    $region63: #{tpu_custom_call.1} parent=1 // pred_check_branch
      %113 = sbr.rel (0) target = $region65
    $region64: #{tpu_custom_call.1} parent=1 // pred_region
      %115 = dma.done [#allocation11], 512
    $region65: #{tpu_custom_call.1} parent=1 // pred_fallthru
      _
    // Predicated region
    $region66: #{tpu_custom_call.1} parent=1 // pred_check
      _
    $region67: #{tpu_custom_call.1} parent=1 // pred_check_branch
      %117 = sbr.rel (0) target = $region69
    $region68: #{tpu_custom_call.1} parent=1 // pred_region
      %119 = dma.done [#allocation11], 1024
    $region69: #{tpu_custom_call.1} parent=1 // pred_fallthru
      _
    %v120 = vld [vmem:[%s0] sm:$0xff]
    %v121 = vld [vmem:[%s0 + $0x8] sm:$0xff]
    %v122 = vld [vmem:[%s0 + $0x10] sm:$0xff]
    %v123 = vld [vmem:[%s0 + $0x18] sm:$0xff]
    %v124 = vld [vmem:[%s0 + $0x20] sm:$0xff]
    %v125 = vld [vmem:[%s0 + $0x28] sm:$0xff]
    %v126 = vld [vmem:[%s0 + $0x30] sm:$0xff]
    %v127 = vld [vmem:[%s0 + $0x38] sm:$0xff]
    %v128 = vld [vmem:[#allocation4] sm:$0xff]
    %v129 = vld [vmem:[#allocation4 + $0x8] sm:$0xff]
    %v130 = vld [vmem:[#allocation4 + $0x10] sm:$0xff]
    %v131 = vld [vmem:[#allocation4 + $0x18] sm:$0xff]
    %v132 = vld [vmem:[#allocation4 + $0x20] sm:$0xff]
    %v133 = vld [vmem:[#allocation4 + $0x28] sm:$0xff]
    %v134 = vld [vmem:[#allocation4 + $0x30] sm:$0xff]
    %v135 = vld [vmem:[#allocation4 + $0x38] sm:$0xff]
    %v136 = vld [vmem:[%s3] sm:$0x3]
    %v138 = vperm.slane %v136, 0
    %v139 = vperm.slane %v136, 1
    %vm142 = vcmask 261120
    %v144 = vsel %vm142, %v120, 0
    %v147 = vsel %vm142, %v121, 0
    %v150 = vsel %vm142, %v122, 0
    %v153 = vsel %vm142, %v123, 0
    %v156 = vsel %vm142, %v124, 0
    %v159 = vsel %vm142, %v125, 0
    %v162 = vsel %vm142, %v126, 0
    %v165 = vsel %vm142, %v127, 0
    %167 = vmatpush.msra.mxu0 0.0
    %168 = vmatpush.msra.mxu0 0.0
    %169 = vmatpush.msra.mxu0 0.0
    %170 = vmatpush.msra.mxu0 0.0
    %171 = vmatpush.msra.mxu0 0.0
    %172 = vmatpush.msra.mxu0 0.0
    %173 = vmatpush.msra.mxu0 0.0
    %174 = vmatpush.msra.mxu0 0.0
    %175 = vmatpush.msra.mxu0 0.0
    %176 = vmatpush.msra.mxu0 0.0
    %177 = vmatpush.msra.mxu0 0.0
    %178 = vmatpush.msra.mxu0 0.0
    %179 = vmatpush.msra.mxu0 %v134
    %180 = vmatpush.msra.mxu0 %v132
    %181 = vmatpush.msra.mxu0 %v130
    %182 = vmatpush.msra.mxu0 %v128
    %183 = vmatmul.f32.gmra.mxu0 %v144
    %v184 = vpop.f32.mrf.mxu0
    %v185 = vadd.f32 %v138, %v184
    %186 = vmatmul.f32.gmra.mxu0 %v147
    %v187 = vpop.f32.mrf.mxu0
    %v188 = vadd.f32 %v138, %v187
    %189 = vmatmul.f32.gmra.mxu0 %v150
    %v190 = vpop.f32.mrf.mxu0
    %v191 = vadd.f32 %v138, %v190
    %192 = vmatmul.f32.gmra.mxu0 %v153
    %v193 = vpop.f32.mrf.mxu0
    %v194 = vadd.f32 %v138, %v193
    %195 = vmatmul.f32.gmra.mxu0 %v156
    %v196 = vpop.f32.mrf.mxu0
    %v197 = vadd.f32 %v138, %v196
    %198 = vmatmul.f32.gmra.mxu0 %v159
    %v199 = vpop.f32.mrf.mxu0
    %v200 = vadd.f32 %v138, %v199
    %201 = vmatmul.f32.gmra.mxu0 %v162
    %v202 = vpop.f32.mrf.mxu0
    %v203 = vadd.f32 %v138, %v202
    %204 = vmatmul.f32.gmra.mxu0 %v165
    %v205 = vpop.f32.mrf.mxu0
    %v206 = vadd.f32 %v138, %v205
    %207 = vdwg.mxu0
    %208 = vmatpush.msra.mxu0 0.0
    %209 = vmatpush.msra.mxu0 0.0
    %210 = vmatpush.msra.mxu0 0.0
    %211 = vmatpush.msra.mxu0 0.0
    %212 = vmatpush.msra.mxu0 0.0
    %213 = vmatpush.msra.mxu0 0.0
    %214 = vmatpush.msra.mxu0 0.0
    %215 = vmatpush.msra.mxu0 0.0
    %216 = vmatpush.msra.mxu0 0.0
    %217 = vmatpush.msra.mxu0 0.0
    %218 = vmatpush.msra.mxu0 0.0
    %219 = vmatpush.msra.mxu0 0.0
    %220 = vmatpush.msra.mxu0 %v135
    %221 = vmatpush.msra.mxu0 %v133
    %222 = vmatpush.msra.mxu0 %v131
    %223 = vmatpush.msra.mxu0 %v129
    %224 = vmatmul.f32.gmra.mxu0 %v144
    %v225 = vpop.f32.mrf.mxu0
    %v226 = vadd.f32 %v139, %v225
    %227 = vmatmul.f32.gmra.mxu0 %v147
    %v228 = vpop.f32.mrf.mxu0
    %v229 = vadd.f32 %v139, %v228
    %230 = vmatmul.f32.gmra.mxu0 %v150
    %v231 = vpop.f32.mrf.mxu0
    %v232 = vadd.f32 %v139, %v231
    %233 = vmatmul.f32.gmra.mxu0 %v153
    %v234 = vpop.f32.mrf.mxu0
    %v235 = vadd.f32 %v139, %v234
    %236 = vmatmul.f32.gmra.mxu0 %v156
    %v237 = vpop.f32.mrf.mxu0
    %v238 = vadd.f32 %v139, %v237
    %239 = vmatmul.f32.gmra.mxu0 %v159
    %v240 = vpop.f32.mrf.mxu0
    %v241 = vadd.f32 %v139, %v240
    %242 = vmatmul.f32.gmra.mxu0 %v162
    %v243 = vpop.f32.mrf.mxu0
    %v244 = vadd.f32 %v139, %v243
    %245 = vmatmul.f32.gmra.mxu0 %v165
    %v246 = vpop.f32.mrf.mxu0
    %v247 = vadd.f32 %v139, %v246
    %248 = vdwg.mxu0
    %249 = vst [vmem:[#allocation2] sm:$0xff] %v185
    %250 = vst [vmem:[#allocation2 + $0x8] sm:$0xff] %v226
    %251 = vst [vmem:[#allocation2 + $0x10] sm:$0xff] %v188
    %252 = vst [vmem:[#allocation2 + $0x18] sm:$0xff] %v229
    %253 = vst [vmem:[#allocation2 + $0x20] sm:$0xff] %v191
    %254 = vst [vmem:[#allocation2 + $0x28] sm:$0xff] %v232
    %255 = vst [vmem:[#allocation2 + $0x30] sm:$0xff] %v194
    %256 = vst [vmem:[#allocation2 + $0x38] sm:$0xff] %v235
    %257 = vst [vmem:[#allocation2 + $0x40] sm:$0xff] %v197
    %258 = vst [vmem:[#allocation2 + $0x48] sm:$0xff] %v238
    %259 = vst [vmem:[#allocation2 + $0x50] sm:$0xff] %v200
    %260 = vst [vmem:[#allocation2 + $0x58] sm:$0xff] %v241
    %261 = vst [vmem:[#allocation2 + $0x60] sm:$0xff] %v203
    %262 = vst [vmem:[#allocation2 + $0x68] sm:$0xff] %v244
    %263 = vst [vmem:[#allocation2 + $0x70] sm:$0xff] %v206
    %264 = vst [vmem:[#allocation2 + $0x78] sm:$0xff] %v247
    %v265 = vld [vmem:[%s4] sm:$0xff]
    %v266 = vld [vmem:[%s4 + $0x8] sm:$0xff]
    %v267 = vld [vmem:[%s4 + $0x10] sm:$0xff]
    %v268 = vld [vmem:[%s4 + $0x18] sm:$0xff]
    %v269 = vld [vmem:[#allocation2] sm:$0xff]
    %v271 = vsel %vm142, 0.0, 0
    %273 = vmatpush.msra.mxu0 0.0
    %274 = vmatpush.msra.mxu0 0.0
    %275 = vmatpush.msra.mxu0 0.0
    %276 = vmatpush.msra.mxu0 0.0
    %277 = vmatpush.msra.mxu0 0.0
    %278 = vmatpush.msra.mxu0 0.0
    %279 = vmatpush.msra.mxu0 0.0
    %280 = vmatpush.msra.mxu0 0.0
    %281 = vmatpush.msra.mxu0 0.0
    %282 = vmatpush.msra.mxu0 0.0
    %283 = vmatpush.msra.mxu0 0.0
    %284 = vmatpush.msra.mxu0 0.0
    %285 = vmatpush.msra.mxu0 %v268
    %286 = vmatpush.msra.mxu0 %v267
    %287 = vmatpush.msra.mxu0 %v266
    %288 = vmatpush.msra.mxu0 %v265
    %289 = vmatmul.f32.gmra.mxu0 %v271
    %v290 = vpop.f32.mrf.mxu0
    %v291 = vadd.f32 0.0, %v290
    %292 = vdwg.mxu0
    %v293 = vadd.f32 %v269, %v291
    %v294 = vxor.u32 %v293, 2147483648
    %v295 = vmul.f32 %v294, 1.442695
    %v296 = vpow.pop %v295
    %v297 = vadd.f32 %v296, 1.0
    %v298 = vrcp.pop %v297
    %v299 = vmul.f32 %v297, %v298
    %v300 = vsub.f32 1.0, %v299
    %v301 = vmul.f32 %v298, %v300
    %v302 = vadd.f32 %v298, %v301
    %vm303 = vweird.f32 %v297
    %vm304 = vweird.f32 %v298
    %vm305 = vmor %vm303, %vm304
    %v306 = vsel %vm305, %v298, %v302
    %v307 = vand.u32 2147483647, %v297
    %vm308 = vcmp.eq.f32.partialorder %v307, 8.507059e+37
    %v309 = vand.u32 %v297, 2147483648
    %v310 = vor.u32 1.1754944e-38, %v309
    %v311 = vsel %vm308, %v310, %v306
    %v312 = vmul.f32 1.0, %v311
    %v313 = vtanh.pop %v293
    %v314 = vmul.f32 %v312, 0.0
    %316 = vrot.lane.b32.xlu0 %v313, 64
    %v317 = vpop.permute.xlu0 %316
    %v319 = vmul.f32 %v312, %v317
    %321 = vrot.lane.b32.xlu0 %v319, 32
    %v322 = vpop.permute.xlu0 %321
    %v324 = vadd.f32 %v314, %v322
    %v325 = vtanh.pop %v324
    %327 = vrot.lane.b32.xlu0 %v325, 64
    %v328 = vpop.permute.xlu0 %327
    %v330 = vmul.f32 %v312, %v328
    %v331 = vld [vmem:[%s1] sm:$0xff]
    %333 = vrot.lane.b32.xlu0 %v330, 32
    %v334 = vpop.permute.xlu0 %333
    %v336 = vmul.f32 %v331, %v334
    %v337 = vsub.f32 1.0, %v331
    %v338 = vmul.f32 %v337, 0.0
    %v339 = vadd.f32 %v336, %v338
    %341 = vrot.lane.b32.xlu0 %v324, 96
    %v342 = vpop.permute.xlu0 %341
    %v344 = vmul.f32 %v331, %v342
    %v345 = vadd.f32 %v344, %v338
    %346 = vst.msk [vmem:[#allocation3] sm:$0xff] %vm142, %v336
    %v347 = vld [vmem:[#allocation2 + $0x10] sm:$0xff]
    %v349 = vsel %vm142, %v339, 0
    %351 = vmatpush.msra.mxu0 0.0
    %352 = vmatpush.msra.mxu0 0.0
    %353 = vmatpush.msra.mxu0 0.0
    %354 = vmatpush.msra.mxu0 0.0
    %355 = vmatpush.msra.mxu0 0.0
    %356 = vmatpush.msra.mxu0 0.0
    %357 = vmatpush.msra.mxu0 0.0
    %358 = vmatpush.msra.mxu0 0.0
    %359 = vmatpush.msra.mxu0 0.0
    %360 = vmatpush.msra.mxu0 0.0
    %361 = vmatpush.msra.mxu0 0.0
    %362 = vmatpush.msra.mxu0 0.0
    %363 = vmatpush.msra.mxu0 %v268
    %364 = vmatpush.msra.mxu0 %v267
    %365 = vmatpush.msra.mxu0 %v266
    %366 = vmatpush.msra.mxu0 %v265
    %367 = vmatmul.f32.gmra.mxu0 %v349
    %v368 = vpop.f32.mrf.mxu0
    %v369 = vadd.f32 0.0, %v368
    %370 = vdwg.mxu0
    %v371 = vadd.f32 %v347, %v369
    %v372 = vxor.u32 %v371, 2147483648
    %v373 = vmul.f32 %v372, 1.442695
    %v374 = vpow.pop %v373
    %v375 = vadd.f32 %v374, 1.0
    %v376 = vrcp.pop %v375
    %v377 = vmul.f32 %v375, %v376
    %v378 = vsub.f32 1.0, %v377
    %v379 = vmul.f32 %v376, %v378
    %v380 = vadd.f32 %v376, %v379
    %vm381 = vweird.f32 %v375
    %vm382 = vweird.f32 %v376
    %vm383 = vmor %vm381, %vm382
    %v384 = vsel %vm383, %v376, %v380
    %v385 = vand.u32 2147483647, %v375
    %vm386 = vcmp.eq.f32.partialorder %v385, 8.507059e+37
    %v387 = vand.u32 %v375, 2147483648
    %v388 = vor.u32 1.1754944e-38, %v387
    %v389 = vsel %vm386, %v388, %v384
    %v390 = vmul.f32 1.0, %v389
    %v391 = vtanh.pop %v371
    %393 = vrot.lane.b32.xlu0 %v345, 32
    %v394 = vpop.permute.xlu0 %393
    %v396 = vmul.f32 %v390, %v394
    %398 = vrot.lane.b32.xlu0 %v391, 64
    %v399 = vpop.permute.xlu0 %398
    %v401 = vmul.f32 %v390, %v399
    %403 = vrot.lane.b32.xlu0 %v401, 32
    %v404 = vpop.permute.xlu0 %403
    %v406 = vadd.f32 %v396, %v404
    %v407 = vtanh.pop %v406
    %409 = vrot.lane.b32.xlu0 %v407, 64
    %v410 = vpop.permute.xlu0 %409
    %v412 = vmul.f32 %v390, %v410
    %v413 = vld [vmem:[%s1 + $0x8] sm:$0xff]
    %415 = vrot.lane.b32.xlu0 %v412, 32
    %v416 = vpop.permute.xlu0 %415
    %v418 = vmul.f32 %v413, %v416
    %v419 = vsub.f32 1.0, %v413
    %v420 = vmul.f32 %v419, %v339
    %v421 = vadd.f32 %v418, %v420
    %423 = vrot.lane.b32.xlu0 %v406, 96
    %v424 = vpop.permute.xlu0 %423
    %v426 = vmul.f32 %v413, %v424
    %v427 = vmul.f32 %v419, %v345
    %v428 = vadd.f32 %v426, %v427
    %429 = vst.msk [vmem:[#allocation3 + $0x8] sm:$0xff] %vm142, %v418
    %v430 = vld [vmem:[#allocation2 + $0x20] sm:$0xff]
    %v432 = vsel %vm142, %v421, 0
    %434 = vmatpush.msra.mxu0 0.0
    %435 = vmatpush.msra.mxu0 0.0
    %436 = vmatpush.msra.mxu0 0.0
    %437 = vmatpush.msra.mxu0 0.0
    %438 = vmatpush.msra.mxu0 0.0
    %439 = vmatpush.msra.mxu0 0.0
    %440 = vmatpush.msra.mxu0 0.0
    %441 = vmatpush.msra.mxu0 0.0
    %442 = vmatpush.msra.mxu0 0.0
    %443 = vmatpush.msra.mxu0 0.0
    %444 = vmatpush.msra.mxu0 0.0
    %445 = vmatpush.msra.mxu0 0.0
    %446 = vmatpush.msra.mxu0 %v268
    %447 = vmatpush.msra.mxu0 %v267
    %448 = vmatpush.msra.mxu0 %v266
    %449 = vmatpush.msra.mxu0 %v265
    %450 = vmatmul.f32.gmra.mxu0 %v432
    %v451 = vpop.f32.mrf.mxu0
    %v452 = vadd.f32 0.0, %v451
    %453 = vdwg.mxu0
    %v454 = vadd.f32 %v430, %v452
    %v455 = vxor.u32 %v454, 2147483648
    %v456 = vmul.f32 %v455, 1.442695
    %v457 = vpow.pop %v456
    %v458 = vadd.f32 %v457, 1.0
    %v459 = vrcp.pop %v458
    %v460 = vmul.f32 %v458, %v459
    %v461 = vsub.f32 1.0, %v460
    %v462 = vmul.f32 %v459, %v461
    %v463 = vadd.f32 %v459, %v462
    %vm464 = vweird.f32 %v458
    %vm465 = vweird.f32 %v459
    %vm466 = vmor %vm464, %vm465
    %v467 = vsel %vm466, %v459, %v463
    %v468 = vand.u32 2147483647, %v458
    %vm469 = vcmp.eq.f32.partialorder %v468, 8.507059e+37
    %v470 = vand.u32 %v458, 2147483648
    %v471 = vor.u32 1.1754944e-38, %v470
    %v472 = vsel %vm469, %v471, %v467
    %v473 = vmul.f32 1.0, %v472
    %v474 = vtanh.pop %v454
    %476 = vrot.lane.b32.xlu0 %v428, 32
    %v477 = vpop.permute.xlu0 %476
    %v479 = vmul.f32 %v473, %v477
    %481 = vrot.lane.b32.xlu0 %v474, 64
    %v482 = vpop.permute.xlu0 %481
    %v484 = vmul.f32 %v473, %v482
    %486 = vrot.lane.b32.xlu0 %v484, 32
    %v487 = vpop.permute.xlu0 %486
    %v489 = vadd.f32 %v479, %v487
    %v490 = vtanh.pop %v489
    %492 = vrot.lane.b32.xlu0 %v490, 64
    %v493 = vpop.permute.xlu0 %492
    %v495 = vmul.f32 %v473, %v493
    %v496 = vld [vmem:[%s1 + $0x10] sm:$0xff]
    %498 = vrot.lane.b32.xlu0 %v495, 32
    %v499 = vpop.permute.xlu0 %498
    %v501 = vmul.f32 %v496, %v499
    %v502 = vsub.f32 1.0, %v496
    %v503 = vmul.f32 %v502, %v421
    %v504 = vadd.f32 %v501, %v503
    %506 = vrot.lane.b32.xlu0 %v489, 96
    %v507 = vpop.permute.xlu0 %506
    %v509 = vmul.f32 %v496, %v507
    %v510 = vmul.f32 %v502, %v428
    %v511 = vadd.f32 %v509, %v510
    %512 = vst.msk [vmem:[#allocation3 + $0x10] sm:$0xff] %vm142, %v501
    %v513 = vld [vmem:[#allocation2 + $0x30] sm:$0xff]
    %v515 = vsel %vm142, %v504, 0
    %517 = vmatpush.msra.mxu0 0.0
    %518 = vmatpush.msra.mxu0 0.0
    %519 = vmatpush.msra.mxu0 0.0
    %520 = vmatpush.msra.mxu0 0.0
    %521 = vmatpush.msra.mxu0 0.0
    %522 = vmatpush.msra.mxu0 0.0
    %523 = vmatpush.msra.mxu0 0.0
    %524 = vmatpush.msra.mxu0 0.0
    %525 = vmatpush.msra.mxu0 0.0
    %526 = vmatpush.msra.mxu0 0.0
    %527 = vmatpush.msra.mxu0 0.0
    %528 = vmatpush.msra.mxu0 0.0
    %529 = vmatpush.msra.mxu0 %v268
    %530 = vmatpush.msra.mxu0 %v267
    %531 = vmatpush.msra.mxu0 %v266
    %532 = vmatpush.msra.mxu0 %v265
    %533 = vmatmul.f32.gmra.mxu0 %v515
    %v534 = vpop.f32.mrf.mxu0
    %v535 = vadd.f32 0.0, %v534
    %536 = vdwg.mxu0
    %v537 = vadd.f32 %v513, %v535
    %v538 = vxor.u32 %v537, 2147483648
    %v539 = vmul.f32 %v538, 1.442695
    %v540 = vpow.pop %v539
    %v541 = vadd.f32 %v540, 1.0
    %v542 = vrcp.pop %v541
    %v543 = vmul.f32 %v541, %v542
    %v544 = vsub.f32 1.0, %v543
    %v545 = vmul.f32 %v542, %v544
    %v546 = vadd.f32 %v542, %v545
    %vm547 = vweird.f32 %v541
    %vm548 = vweird.f32 %v542
    %vm549 = vmor %vm547, %vm548
    %v550 = vsel %vm549, %v542, %v546
    %v551 = vand.u32 2147483647, %v541
    %vm552 = vcmp.eq.f32.partialorder %v551, 8.507059e+37
    %v553 = vand.u32 %v541, 2147483648
    %v554 = vor.u32 1.1754944e-38, %v553
    %v555 = vsel %vm552, %v554, %v550
    %v556 = vmul.f32 1.0, %v555
    %v557 = vtanh.pop %v537
    %559 = vrot.lane.b32.xlu0 %v511, 32
    %v560 = vpop.permute.xlu0 %559
    %v562 = vmul.f32 %v556, %v560
    %564 = vrot.lane.b32.xlu0 %v557, 64
    %v565 = vpop.permute.xlu0 %564
    %v567 = vmul.f32 %v556, %v565
    %569 = vrot.lane.b32.xlu0 %v567, 32
    %v570 = vpop.permute.xlu0 %569
    %v572 = vadd.f32 %v562, %v570
    %v573 = vtanh.pop %v572
    %575 = vrot.lane.b32.xlu0 %v573, 64
    %v576 = vpop.permute.xlu0 %575
    %v578 = vmul.f32 %v556, %v576
    %v579 = vld [vmem:[%s1 + $0x18] sm:$0xff]
    %581 = vrot.lane.b32.xlu0 %v578, 32
    %v582 = vpop.permute.xlu0 %581
    %v584 = vmul.f32 %v579, %v582
    %v585 = vsub.f32 1.0, %v579
    %v586 = vmul.f32 %v585, %v504
    %v587 = vadd.f32 %v584, %v586
    %589 = vrot.lane.b32.xlu0 %v572, 96
    %v590 = vpop.permute.xlu0 %589
    %v592 = vmul.f32 %v579, %v590
    %v593 = vmul.f32 %v585, %v511
    %v594 = vadd.f32 %v592, %v593
    %595 = vst.msk [vmem:[#allocation3 + $0x18] sm:$0xff] %vm142, %v584
    %v596 = vld [vmem:[#allocation2 + $0x40] sm:$0xff]
    %v598 = vsel %vm142, %v587, 0
    %600 = vmatpush.msra.mxu0 0.0
    %601 = vmatpush.msra.mxu0 0.0
    %602 = vmatpush.msra.mxu0 0.0
    %603 = vmatpush.msra.mxu0 0.0
    %604 = vmatpush.msra.mxu0 0.0
    %605 = vmatpush.msra.mxu0 0.0
    %606 = vmatpush.msra.mxu0 0.0
    %607 = vmatpush.msra.mxu0 0.0
    %608 = vmatpush.msra.mxu0 0.0
    %609 = vmatpush.msra.mxu0 0.0
    %610 = vmatpush.msra.mxu0 0.0
    %611 = vmatpush.msra.mxu0 0.0
    %612 = vmatpush.msra.mxu0 %v268
    %613 = vmatpush.msra.mxu0 %v267
    %614 = vmatpush.msra.mxu0 %v266
    %615 = vmatpush.msra.mxu0 %v265
    %616 = vmatmul.f32.gmra.mxu0 %v598
    %v617 = vpop.f32.mrf.mxu0
    %v618 = vadd.f32 0.0, %v617
    %619 = vdwg.mxu0
    %v620 = vadd.f32 %v596, %v618
    %v621 = vxor.u32 %v620, 2147483648
    %v622 = vmul.f32 %v621, 1.442695
    %v623 = vpow.pop %v622
    %v624 = vadd.f32 %v623, 1.0
    %v625 = vrcp.pop %v624
    %v626 = vmul.f32 %v624, %v625
    %v627 = vsub.f32 1.0, %v626
    %v628 = vmul.f32 %v625, %v627
    %v629 = vadd.f32 %v625, %v628
    %vm630 = vweird.f32 %v624
    %vm631 = vweird.f32 %v625
    %vm632 = vmor %vm630, %vm631
    %v633 = vsel %vm632, %v625, %v629
    %v634 = vand.u32 2147483647, %v624
    %vm635 = vcmp.eq.f32.partialorder %v634, 8.507059e+37
    %v636 = vand.u32 %v624, 2147483648
    %v637 = vor.u32 1.1754944e-38, %v636
    %v638 = vsel %vm635, %v637, %v633
    %v639 = vmul.f32 1.0, %v638
    %v640 = vtanh.pop %v620
    %642 = vrot.lane.b32.xlu0 %v594, 32
    %v643 = vpop.permute.xlu0 %642
    %v645 = vmul.f32 %v639, %v643
    %647 = vrot.lane.b32.xlu0 %v640, 64
    %v648 = vpop.permute.xlu0 %647
    %v650 = vmul.f32 %v639, %v648
    %652 = vrot.lane.b32.xlu0 %v650, 32
    %v653 = vpop.permute.xlu0 %652
    %v655 = vadd.f32 %v645, %v653
    %v656 = vtanh.pop %v655
    %658 = vrot.lane.b32.xlu0 %v656, 64
    %v659 = vpop.permute.xlu0 %658
    %v661 = vmul.f32 %v639, %v659
    %v662 = vld [vmem:[%s1 + $0x20] sm:$0xff]
    %664 = vrot.lane.b32.xlu0 %v661, 32
    %v665 = vpop.permute.xlu0 %664
    %v667 = vmul.f32 %v662, %v665
    %v668 = vsub.f32 1.0, %v662
    %v669 = vmul.f32 %v668, %v587
    %v670 = vadd.f32 %v667, %v669
    %672 = vrot.lane.b32.xlu0 %v655, 96
    %v673 = vpop.permute.xlu0 %672
    %v675 = vmul.f32 %v662, %v673
    %v676 = vmul.f32 %v668, %v594
    %v677 = vadd.f32 %v675, %v676
    %678 = vst.msk [vmem:[#allocation3 + $0x20] sm:$0xff] %vm142, %v667
    %v679 = vld [vmem:[#allocation2 + $0x50] sm:$0xff]
    %v681 = vsel %vm142, %v670, 0
    %683 = vmatpush.msra.mxu0 0.0
    %684 = vmatpush.msra.mxu0 0.0
    %685 = vmatpush.msra.mxu0 0.0
    %686 = vmatpush.msra.mxu0 0.0
    %687 = vmatpush.msra.mxu0 0.0
    %688 = vmatpush.msra.mxu0 0.0
    %689 = vmatpush.msra.mxu0 0.0
    %690 = vmatpush.msra.mxu0 0.0
    %691 = vmatpush.msra.mxu0 0.0
    %692 = vmatpush.msra.mxu0 0.0
    %693 = vmatpush.msra.mxu0 0.0
    %694 = vmatpush.msra.mxu0 0.0
    %695 = vmatpush.msra.mxu0 %v268
    %696 = vmatpush.msra.mxu0 %v267
    %697 = vmatpush.msra.mxu0 %v266
    %698 = vmatpush.msra.mxu0 %v265
    %699 = vmatmul.f32.gmra.mxu0 %v681
    %v700 = vpop.f32.mrf.mxu0
    %v701 = vadd.f32 0.0, %v700
    %702 = vdwg.mxu0
    %v703 = vadd.f32 %v679, %v701
    %v704 = vxor.u32 %v703, 2147483648
    %v705 = vmul.f32 %v704, 1.442695
    %v706 = vpow.pop %v705
    %v707 = vadd.f32 %v706, 1.0
    %v708 = vrcp.pop %v707
    %v709 = vmul.f32 %v707, %v708
    %v710 = vsub.f32 1.0, %v709
    %v711 = vmul.f32 %v708, %v710
    %v712 = vadd.f32 %v708, %v711
    %vm713 = vweird.f32 %v707
    %vm714 = vweird.f32 %v708
    %vm715 = vmor %vm713, %vm714
    %v716 = vsel %vm715, %v708, %v712
    %v717 = vand.u32 2147483647, %v707
    %vm718 = vcmp.eq.f32.partialorder %v717, 8.507059e+37
    %v719 = vand.u32 %v707, 2147483648
    %v720 = vor.u32 1.1754944e-38, %v719
    %v721 = vsel %vm718, %v720, %v716
    %v722 = vmul.f32 1.0, %v721
    %v723 = vtanh.pop %v703
    %725 = vrot.lane.b32.xlu0 %v677, 32
    %v726 = vpop.permute.xlu0 %725
    %v728 = vmul.f32 %v722, %v726
    %730 = vrot.lane.b32.xlu0 %v723, 64
    %v731 = vpop.permute.xlu0 %730
    %v733 = vmul.f32 %v722, %v731
    %735 = vrot.lane.b32.xlu0 %v733, 32
    %v736 = vpop.permute.xlu0 %735
    %v738 = vadd.f32 %v728, %v736
    %v739 = vtanh.pop %v738
    %741 = vrot.lane.b32.xlu0 %v739, 64
    %v742 = vpop.permute.xlu0 %741
    %v744 = vmul.f32 %v722, %v742
    %v745 = vld [vmem:[%s1 + $0x28] sm:$0xff]
    %747 = vrot.lane.b32.xlu0 %v744, 32
    %v748 = vpop.permute.xlu0 %747
    %v750 = vmul.f32 %v745, %v748
    %v751 = vsub.f32 1.0, %v745
    %v752 = vmul.f32 %v751, %v670
    %v753 = vadd.f32 %v750, %v752
    %755 = vrot.lane.b32.xlu0 %v738, 96
    %v756 = vpop.permute.xlu0 %755
    %v758 = vmul.f32 %v745, %v756
    %v759 = vmul.f32 %v751, %v677
    %v760 = vadd.f32 %v758, %v759
    %761 = vst.msk [vmem:[#allocation3 + $0x28] sm:$0xff] %vm142, %v750
    %v762 = vld [vmem:[#allocation2 + $0x60] sm:$0xff]
    %v764 = vsel %vm142, %v753, 0
    %766 = vmatpush.msra.mxu0 0.0
    %767 = vmatpush.msra.mxu0 0.0
    %768 = vmatpush.msra.mxu0 0.0
    %769 = vmatpush.msra.mxu0 0.0
    %770 = vmatpush.msra.mxu0 0.0
    %771 = vmatpush.msra.mxu0 0.0
    %772 = vmatpush.msra.mxu0 0.0
    %773 = vmatpush.msra.mxu0 0.0
    %774 = vmatpush.msra.mxu0 0.0
    %775 = vmatpush.msra.mxu0 0.0
    %776 = vmatpush.msra.mxu0 0.0
    %777 = vmatpush.msra.mxu0 0.0
    %778 = vmatpush.msra.mxu0 %v268
    %779 = vmatpush.msra.mxu0 %v267
    %780 = vmatpush.msra.mxu0 %v266
    %781 = vmatpush.msra.mxu0 %v265
    %782 = vmatmul.f32.gmra.mxu0 %v764
    %v783 = vpop.f32.mrf.mxu0
    %v784 = vadd.f32 0.0, %v783
    %785 = vdwg.mxu0
    %v786 = vadd.f32 %v762, %v784
    %v787 = vxor.u32 %v786, 2147483648
    %v788 = vmul.f32 %v787, 1.442695
    %v789 = vpow.pop %v788
    %v790 = vadd.f32 %v789, 1.0
    %v791 = vrcp.pop %v790
    %v792 = vmul.f32 %v790, %v791
    %v793 = vsub.f32 1.0, %v792
    %v794 = vmul.f32 %v791, %v793
    %v795 = vadd.f32 %v791, %v794
    %vm796 = vweird.f32 %v790
    %vm797 = vweird.f32 %v791
    %vm798 = vmor %vm796, %vm797
    %v799 = vsel %vm798, %v791, %v795
    %v800 = vand.u32 2147483647, %v790
    %vm801 = vcmp.eq.f32.partialorder %v800, 8.507059e+37
    %v802 = vand.u32 %v790, 2147483648
    %v803 = vor.u32 1.1754944e-38, %v802
    %v804 = vsel %vm801, %v803, %v799
    %v805 = vmul.f32 1.0, %v804
    %v806 = vtanh.pop %v786
    %808 = vrot.lane.b32.xlu0 %v760, 32
    %v809 = vpop.permute.xlu0 %808
    %v811 = vmul.f32 %v805, %v809
    %813 = vrot.lane.b32.xlu0 %v806, 64
    %v814 = vpop.permute.xlu0 %813
    %v816 = vmul.f32 %v805, %v814
    %818 = vrot.lane.b32.xlu0 %v816, 32
    %v819 = vpop.permute.xlu0 %818
    %v821 = vadd.f32 %v811, %v819
    %v822 = vtanh.pop %v821
    %824 = vrot.lane.b32.xlu0 %v822, 64
    %v825 = vpop.permute.xlu0 %824
    %v827 = vmul.f32 %v805, %v825
    %v828 = vld [vmem:[%s1 + $0x30] sm:$0xff]
    %830 = vrot.lane.b32.xlu0 %v827, 32
    %v831 = vpop.permute.xlu0 %830
    %v833 = vmul.f32 %v828, %v831
    %v834 = vsub.f32 1.0, %v828
    %v835 = vmul.f32 %v834, %v753
    %v836 = vadd.f32 %v833, %v835
    %838 = vrot.lane.b32.xlu0 %v821, 96
    %v839 = vpop.permute.xlu0 %838
    %v841 = vmul.f32 %v828, %v839
    %v842 = vmul.f32 %v834, %v760
    %v843 = vadd.f32 %v841, %v842
    %844 = vst.msk [vmem:[#allocation3 + $0x30] sm:$0xff] %vm142, %v833
    %v845 = vld [vmem:[#allocation2 + $0x70] sm:$0xff]
    %v847 = vsel %vm142, %v836, 0
    %849 = vmatpush.msra.mxu0 0.0
    %850 = vmatpush.msra.mxu0 0.0
    %851 = vmatpush.msra.mxu0 0.0
    %852 = vmatpush.msra.mxu0 0.0
    %853 = vmatpush.msra.mxu0 0.0
    %854 = vmatpush.msra.mxu0 0.0
    %855 = vmatpush.msra.mxu0 0.0
    %856 = vmatpush.msra.mxu0 0.0
    %857 = vmatpush.msra.mxu0 0.0
    %858 = vmatpush.msra.mxu0 0.0
    %859 = vmatpush.msra.mxu0 0.0
    %860 = vmatpush.msra.mxu0 0.0
    %861 = vmatpush.msra.mxu0 %v268
    %862 = vmatpush.msra.mxu0 %v267
    %863 = vmatpush.msra.mxu0 %v266
    %864 = vmatpush.msra.mxu0 %v265
    %865 = vmatmul.f32.gmra.mxu0 %v847
    %v866 = vpop.f32.mrf.mxu0
    %v867 = vadd.f32 0.0, %v866
    %868 = vdwg.mxu0
    %v869 = vadd.f32 %v845, %v867
    %v870 = vxor.u32 %v869, 2147483648
    %v871 = vmul.f32 %v870, 1.442695
    %v872 = vpow.pop %v871
    %v873 = vadd.f32 %v872, 1.0
    %v874 = vrcp.pop %v873
    %v875 = vmul.f32 %v873, %v874
    %v876 = vsub.f32 1.0, %v875
    %v877 = vmul.f32 %v874, %v876
    %v878 = vadd.f32 %v874, %v877
    %vm879 = vweird.f32 %v873
    %vm880 = vweird.f32 %v874
    %vm881 = vmor %vm879, %vm880
    %v882 = vsel %vm881, %v874, %v878
    %v883 = vand.u32 2147483647, %v873
    %vm884 = vcmp.eq.f32.partialorder %v883, 8.507059e+37
    %v885 = vand.u32 %v873, 2147483648
    %v886 = vor.u32 1.1754944e-38, %v885
    %v887 = vsel %vm884, %v886, %v882
    %v888 = vmul.f32 1.0, %v887
    %v889 = vtanh.pop %v869
    %891 = vrot.lane.b32.xlu0 %v843, 32
    %v892 = vpop.permute.xlu0 %891
    %v894 = vmul.f32 %v888, %v892
    %896 = vrot.lane.b32.xlu0 %v889, 64
    %v897 = vpop.permute.xlu0 %896
    %v899 = vmul.f32 %v888, %v897
    %901 = vrot.lane.b32.xlu0 %v899, 32
    %v902 = vpop.permute.xlu0 %901
    %v904 = vadd.f32 %v894, %v902
    %v905 = vtanh.pop %v904
    %907 = vrot.lane.b32.xlu0 %v905, 64
    %v908 = vpop.permute.xlu0 %907
    %v910 = vmul.f32 %v888, %v908
    %v911 = vld [vmem:[%s1 + $0x38] sm:$0xff]
    %913 = vrot.lane.b32.xlu0 %v910, 32
    %v914 = vpop.permute.xlu0 %913
    %v916 = vmul.f32 %v911, %v914
    %917 = vst.msk [vmem:[#allocation3 + $0x38] sm:$0xff] %vm142, %v916
    %v918 = vld [vmem:[#allocation7] sm:$0xff]
    %v919 = vld [vmem:[#allocation7 + $0x8] sm:$0xff]
    %v920 = vld [vmem:[#allocation7 + $0x10] sm:$0xff]
    %v921 = vld [vmem:[#allocation7 + $0x18] sm:$0xff]
    %v922 = vld [vmem:[#allocation2 + $0x78] sm:$0xff]
    %923 = vmatpush.msra.mxu0 0.0
    %924 = vmatpush.msra.mxu0 0.0
    %925 = vmatpush.msra.mxu0 0.0
    %926 = vmatpush.msra.mxu0 0.0
    %927 = vmatpush.msra.mxu0 0.0
    %928 = vmatpush.msra.mxu0 0.0
    %929 = vmatpush.msra.mxu0 0.0
    %930 = vmatpush.msra.mxu0 0.0
    %931 = vmatpush.msra.mxu0 0.0
    %932 = vmatpush.msra.mxu0 0.0
    %933 = vmatpush.msra.mxu0 0.0
    %934 = vmatpush.msra.mxu0 0.0
    %935 = vmatpush.msra.mxu0 %v921
    %936 = vmatpush.msra.mxu0 %v920
    %937 = vmatpush.msra.mxu0 %v919
    %938 = vmatpush.msra.mxu0 %v918
    %939 = vmatmul.f32.gmra.mxu0 %v271
    %v940 = vpop.f32.mrf.mxu0
    %v941 = vadd.f32 0.0, %v940
    %942 = vdwg.mxu0
    %v943 = vadd.f32 %v922, %v941
    %v944 = vxor.u32 %v943, 2147483648
    %v945 = vmul.f32 %v944, 1.442695
    %v946 = vpow.pop %v945
    %v947 = vadd.f32 %v946, 1.0
    %v948 = vrcp.pop %v947
    %v949 = vmul.f32 %v947, %v948
    %v950 = vsub.f32 1.0, %v949
    %v951 = vmul.f32 %v948, %v950
    %v952 = vadd.f32 %v948, %v951
    %vm953 = vweird.f32 %v947
    %vm954 = vweird.f32 %v948
    %vm955 = vmor %vm953, %vm954
    %v956 = vsel %vm955, %v948, %v952
    %v957 = vand.u32 2147483647, %v947
    %vm958 = vcmp.eq.f32.partialorder %v957, 8.507059e+37
    %v959 = vand.u32 %v947, 2147483648
    %v960 = vor.u32 1.1754944e-38, %v959
    %v961 = vsel %vm958, %v960, %v956
    %v962 = vmul.f32 1.0, %v961
    %v963 = vtanh.pop %v943
    %v964 = vmul.f32 %v962, 0.0
    %966 = vrot.lane.b32.xlu0 %v963, 64
    %v967 = vpop.permute.xlu0 %966
    %v969 = vmul.f32 %v962, %v967
    %971 = vrot.lane.b32.xlu0 %v969, 32
    %v972 = vpop.permute.xlu0 %971
    %v974 = vadd.f32 %v964, %v972
    %v975 = vtanh.pop %v974
    %977 = vrot.lane.b32.xlu0 %v975, 64
    %v978 = vpop.permute.xlu0 %977
    %v980 = vmul.f32 %v962, %v978
    %v981 = vld [vmem:[%s1 + $0x38] sm:$0xff]
    %983 = vrot.lane.b32.xlu0 %v980, 32
    %v984 = vpop.permute.xlu0 %983
    %v986 = vmul.f32 %v981, %v984
    %v987 = vsub.f32 1.0, %v981
    %v988 = vmul.f32 %v987, 0.0
    %v989 = vadd.f32 %v986, %v988
    %991 = vrot.lane.b32.xlu0 %v974, 96
    %v992 = vpop.permute.xlu0 %991
    %v994 = vmul.f32 %v981, %v992
    %v995 = vadd.f32 %v994, %v988
    %997 = vrot.lane.b32.xlu0 %v986, 32
    %v998 = vpop.permute.xlu0 %997
    %vm1000 = vcmask 523520
    %1001 = vst.msk [vmem:[#allocation3 + $0x38] sm:$0xff] %vm1000, %v998
    %v1002 = vld [vmem:[#allocation2 + $0x68] sm:$0xff]
    %v1004 = vsel %vm142, %v989, 0
    %1006 = vmatpush.msra.mxu0 0.0
    %1007 = vmatpush.msra.mxu0 0.0
    %1008 = vmatpush.msra.mxu0 0.0
    %1009 = vmatpush.msra.mxu0 0.0
    %1010 = vmatpush.msra.mxu0 0.0
    %1011 = vmatpush.msra.mxu0 0.0
    %1012 = vmatpush.msra.mxu0 0.0
    %1013 = vmatpush.msra.mxu0 0.0
    %1014 = vmatpush.msra.mxu0 0.0
    %1015 = vmatpush.msra.mxu0 0.0
    %1016 = vmatpush.msra.mxu0 0.0
    %1017 = vmatpush.msra.mxu0 0.0
    %1018 = vmatpush.msra.mxu0 %v921
    %1019 = vmatpush.msra.mxu0 %v920
    %1020 = vmatpush.msra.mxu0 %v919
    %1021 = vmatpush.msra.mxu0 %v918
    %1022 = vmatmul.f32.gmra.mxu0 %v1004
    %v1023 = vpop.f32.mrf.mxu0
    %v1024 = vadd.f32 0.0, %v1023
    %1025 = vdwg.mxu0
    %v1026 = vadd.f32 %v1002, %v1024
    %v1027 = vxor.u32 %v1026, 2147483648
    %v1028 = vmul.f32 %v1027, 1.442695
    %v1029 = vpow.pop %v1028
    %v1030 = vadd.f32 %v1029, 1.0
    %v1031 = vrcp.pop %v1030
    %v1032 = vmul.f32 %v1030, %v1031
    %v1033 = vsub.f32 1.0, %v1032
    %v1034 = vmul.f32 %v1031, %v1033
    %v1035 = vadd.f32 %v1031, %v1034
    %vm1036 = vweird.f32 %v1030
    %vm1037 = vweird.f32 %v1031
    %vm1038 = vmor %vm1036, %vm1037
    %v1039 = vsel %vm1038, %v1031, %v1035
    %v1040 = vand.u32 2147483647, %v1030
    %vm1041 = vcmp.eq.f32.partialorder %v1040, 8.507059e+37
    %v1042 = vand.u32 %v1030, 2147483648
    %v1043 = vor.u32 1.1754944e-38, %v1042
    %v1044 = vsel %vm1041, %v1043, %v1039
    %v1045 = vmul.f32 1.0, %v1044
    %v1046 = vtanh.pop %v1026
    %1048 = vrot.lane.b32.xlu0 %v995, 32
    %v1049 = vpop.permute.xlu0 %1048
    %v1051 = vmul.f32 %v1045, %v1049
    %1053 = vrot.lane.b32.xlu0 %v1046, 64
    %v1054 = vpop.permute.xlu0 %1053
    %v1056 = vmul.f32 %v1045, %v1054
    %1058 = vrot.lane.b32.xlu0 %v1056, 32
    %v1059 = vpop.permute.xlu0 %1058
    %v1061 = vadd.f32 %v1051, %v1059
    %v1062 = vtanh.pop %v1061
    %1064 = vrot.lane.b32.xlu0 %v1062, 64
    %v1065 = vpop.permute.xlu0 %1064
    %v1067 = vmul.f32 %v1045, %v1065
    %v1068 = vld [vmem:[%s1 + $0x30] sm:$0xff]
    %1070 = vrot.lane.b32.xlu0 %v1067, 32
    %v1071 = vpop.permute.xlu0 %1070
    %v1073 = vmul.f32 %v1068, %v1071
    %v1074 = vsub.f32 1.0, %v1068
    %v1075 = vmul.f32 %v1074, %v989
    %v1076 = vadd.f32 %v1073, %v1075
    %1078 = vrot.lane.b32.xlu0 %v1061, 96
    %v1079 = vpop.permute.xlu0 %1078
    %v1081 = vmul.f32 %v1068, %v1079
    %v1082 = vmul.f32 %v1074, %v995
    %v1083 = vadd.f32 %v1081, %v1082
    %1085 = vrot.lane.b32.xlu0 %v1073, 32
    %v1086 = vpop.permute.xlu0 %1085
    %1088 = vst.msk [vmem:[#allocation3 + $0x30] sm:$0xff] %vm1000, %v1086
    %v1089 = vld [vmem:[#allocation2 + $0x58] sm:$0xff]
    %v1091 = vsel %vm142, %v1076, 0
    %1093 = vmatpush.msra.mxu0 0.0
    %1094 = vmatpush.msra.mxu0 0.0
    %1095 = vmatpush.msra.mxu0 0.0
    %1096 = vmatpush.msra.mxu0 0.0
    %1097 = vmatpush.msra.mxu0 0.0
    %1098 = vmatpush.msra.mxu0 0.0
    %1099 = vmatpush.msra.mxu0 0.0
    %1100 = vmatpush.msra.mxu0 0.0
    %1101 = vmatpush.msra.mxu0 0.0
    %1102 = vmatpush.msra.mxu0 0.0
    %1103 = vmatpush.msra.mxu0 0.0
    %1104 = vmatpush.msra.mxu0 0.0
    %1105 = vmatpush.msra.mxu0 %v921
    %1106 = vmatpush.msra.mxu0 %v920
    %1107 = vmatpush.msra.mxu0 %v919
    %1108 = vmatpush.msra.mxu0 %v918
    %1109 = vmatmul.f32.gmra.mxu0 %v1091
    %v1110 = vpop.f32.mrf.mxu0
    %v1111 = vadd.f32 0.0, %v1110
    %1112 = vdwg.mxu0
    %v1113 = vadd.f32 %v1089, %v1111
    %v1114 = vxor.u32 %v1113, 2147483648
    %v1115 = vmul.f32 %v1114, 1.442695
    %v1116 = vpow.pop %v1115
    %v1117 = vadd.f32 %v1116, 1.0
    %v1118 = vrcp.pop %v1117
    %v1119 = vmul.f32 %v1117, %v1118
    %v1120 = vsub.f32 1.0, %v1119
    %v1121 = vmul.f32 %v1118, %v1120
    %v1122 = vadd.f32 %v1118, %v1121
    %vm1123 = vweird.f32 %v1117
    %vm1124 = vweird.f32 %v1118
    %vm1125 = vmor %vm1123, %vm1124
    %v1126 = vsel %vm1125, %v1118, %v1122
    %v1127 = vand.u32 2147483647, %v1117
    %vm1128 = vcmp.eq.f32.partialorder %v1127, 8.507059e+37
    %v1129 = vand.u32 %v1117, 2147483648
    %v1130 = vor.u32 1.1754944e-38, %v1129
    %v1131 = vsel %vm1128, %v1130, %v1126
    %v1132 = vmul.f32 1.0, %v1131
    %v1133 = vtanh.pop %v1113
    %1135 = vrot.lane.b32.xlu0 %v1083, 32
    %v1136 = vpop.permute.xlu0 %1135
    %v1138 = vmul.f32 %v1132, %v1136
    %1140 = vrot.lane.b32.xlu0 %v1133, 64
    %v1141 = vpop.permute.xlu0 %1140
    %v1143 = vmul.f32 %v1132, %v1141
    %1145 = vrot.lane.b32.xlu0 %v1143, 32
    %v1146 = vpop.permute.xlu0 %1145
    %v1148 = vadd.f32 %v1138, %v1146
    %v1149 = vtanh.pop %v1148
    %1151 = vrot.lane.b32.xlu0 %v1149, 64
    %v1152 = vpop.permute.xlu0 %1151
    %v1154 = vmul.f32 %v1132, %v1152
    %v1155 = vld [vmem:[%s1 + $0x28] sm:$0xff]
    %1157 = vrot.lane.b32.xlu0 %v1154, 32
    %v1158 = vpop.permute.xlu0 %1157
    %v1160 = vmul.f32 %v1155, %v1158
    %v1161 = vsub.f32 1.0, %v1155
    %v1162 = vmul.f32 %v1161, %v1076
    %v1163 = vadd.f32 %v1160, %v1162
    %1165 = vrot.lane.b32.xlu0 %v1148, 96
    %v1166 = vpop.permute.xlu0 %1165
    %v1168 = vmul.f32 %v1155, %v1166
    %v1169 = vmul.f32 %v1161, %v1083
    %v1170 = vadd.f32 %v1168, %v1169
    %1172 = vrot.lane.b32.xlu0 %v1160, 32
    %v1173 = vpop.permute.xlu0 %1172
    %1175 = vst.msk [vmem:[#allocation3 + $0x28] sm:$0xff] %vm1000, %v1173
    %v1176 = vld [vmem:[#allocation2 + $0x48] sm:$0xff]
    %v1178 = vsel %vm142, %v1163, 0
    %1180 = vmatpush.msra.mxu0 0.0
    %1181 = vmatpush.msra.mxu0 0.0
    %1182 = vmatpush.msra.mxu0 0.0
    %1183 = vmatpush.msra.mxu0 0.0
    %1184 = vmatpush.msra.mxu0 0.0
    %1185 = vmatpush.msra.mxu0 0.0
    %1186 = vmatpush.msra.mxu0 0.0
    %1187 = vmatpush.msra.mxu0 0.0
    %1188 = vmatpush.msra.mxu0 0.0
    %1189 = vmatpush.msra.mxu0 0.0
    %1190 = vmatpush.msra.mxu0 0.0
    %1191 = vmatpush.msra.mxu0 0.0
    %1192 = vmatpush.msra.mxu0 %v921
    %1193 = vmatpush.msra.mxu0 %v920
    %1194 = vmatpush.msra.mxu0 %v919
    %1195 = vmatpush.msra.mxu0 %v918
    %1196 = vmatmul.f32.gmra.mxu0 %v1178
    %v1197 = vpop.f32.mrf.mxu0
    %v1198 = vadd.f32 0.0, %v1197
    %1199 = vdwg.mxu0
    %v1200 = vadd.f32 %v1176, %v1198
    %v1201 = vxor.u32 %v1200, 2147483648
    %v1202 = vmul.f32 %v1201, 1.442695
    %v1203 = vpow.pop %v1202
    %v1204 = vadd.f32 %v1203, 1.0
    %v1205 = vrcp.pop %v1204
    %v1206 = vmul.f32 %v1204, %v1205
    %v1207 = vsub.f32 1.0, %v1206
    %v1208 = vmul.f32 %v1205, %v1207
    %v1209 = vadd.f32 %v1205, %v1208
    %vm1210 = vweird.f32 %v1204
    %vm1211 = vweird.f32 %v1205
    %vm1212 = vmor %vm1210, %vm1211
    %v1213 = vsel %vm1212, %v1205, %v1209
    %v1214 = vand.u32 2147483647, %v1204
    %vm1215 = vcmp.eq.f32.partialorder %v1214, 8.507059e+37
    %v1216 = vand.u32 %v1204, 2147483648
    %v1217 = vor.u32 1.1754944e-38, %v1216
    %v1218 = vsel %vm1215, %v1217, %v1213
    %v1219 = vmul.f32 1.0, %v1218
    %v1220 = vtanh.pop %v1200
    %1222 = vrot.lane.b32.xlu0 %v1170, 32
    %v1223 = vpop.permute.xlu0 %1222
    %v1225 = vmul.f32 %v1219, %v1223
    %1227 = vrot.lane.b32.xlu0 %v1220, 64
    %v1228 = vpop.permute.xlu0 %1227
    %v1230 = vmul.f32 %v1219, %v1228
    %1232 = vrot.lane.b32.xlu0 %v1230, 32
    %v1233 = vpop.permute.xlu0 %1232
    %v1235 = vadd.f32 %v1225, %v1233
    %v1236 = vtanh.pop %v1235
    %1238 = vrot.lane.b32.xlu0 %v1236, 64
    %v1239 = vpop.permute.xlu0 %1238
    %v1241 = vmul.f32 %v1219, %v1239
    %v1242 = vld [vmem:[%s1 + $0x20] sm:$0xff]
    %1244 = vrot.lane.b32.xlu0 %v1241, 32
    %v1245 = vpop.permute.xlu0 %1244
    %v1247 = vmul.f32 %v1242, %v1245
    %v1248 = vsub.f32 1.0, %v1242
    %v1249 = vmul.f32 %v1248, %v1163
    %v1250 = vadd.f32 %v1247, %v1249
    %1252 = vrot.lane.b32.xlu0 %v1235, 96
    %v1253 = vpop.permute.xlu0 %1252
    %v1255 = vmul.f32 %v1242, %v1253
    %v1256 = vmul.f32 %v1248, %v1170
    %v1257 = vadd.f32 %v1255, %v1256
    %1259 = vrot.lane.b32.xlu0 %v1247, 32
    %v1260 = vpop.permute.xlu0 %1259
    %1262 = vst.msk [vmem:[#allocation3 + $0x20] sm:$0xff] %vm1000, %v1260
    %v1263 = vld [vmem:[#allocation2 + $0x38] sm:$0xff]
    %v1265 = vsel %vm142, %v1250, 0
    %1267 = vmatpush.msra.mxu0 0.0
    %1268 = vmatpush.msra.mxu0 0.0
    %1269 = vmatpush.msra.mxu0 0.0
    %1270 = vmatpush.msra.mxu0 0.0
    %1271 = vmatpush.msra.mxu0 0.0
    %1272 = vmatpush.msra.mxu0 0.0
    %1273 = vmatpush.msra.mxu0 0.0
    %1274 = vmatpush.msra.mxu0 0.0
    %1275 = vmatpush.msra.mxu0 0.0
    %1276 = vmatpush.msra.mxu0 0.0
    %1277 = vmatpush.msra.mxu0 0.0
    %1278 = vmatpush.msra.mxu0 0.0
    %1279 = vmatpush.msra.mxu0 %v921
    %1280 = vmatpush.msra.mxu0 %v920
    %1281 = vmatpush.msra.mxu0 %v919
    %1282 = vmatpush.msra.mxu0 %v918
    %1283 = vmatmul.f32.gmra.mxu0 %v1265
    %v1284 = vpop.f32.mrf.mxu0
    %v1285 = vadd.f32 0.0, %v1284
    %1286 = vdwg.mxu0
    %v1287 = vadd.f32 %v1263, %v1285
    %v1288 = vxor.u32 %v1287, 2147483648
    %v1289 = vmul.f32 %v1288, 1.442695
    %v1290 = vpow.pop %v1289
    %v1291 = vadd.f32 %v1290, 1.0
    %v1292 = vrcp.pop %v1291
    %v1293 = vmul.f32 %v1291, %v1292
    %v1294 = vsub.f32 1.0, %v1293
    %v1295 = vmul.f32 %v1292, %v1294
    %v1296 = vadd.f32 %v1292, %v1295
    %vm1297 = vweird.f32 %v1291
    %vm1298 = vweird.f32 %v1292
    %vm1299 = vmor %vm1297, %vm1298
    %v1300 = vsel %vm1299, %v1292, %v1296
    %v1301 = vand.u32 2147483647, %v1291
    %vm1302 = vcmp.eq.f32.partialorder %v1301, 8.507059e+37
    %v1303 = vand.u32 %v1291, 2147483648
    %v1304 = vor.u32 1.1754944e-38, %v1303
    %v1305 = vsel %vm1302, %v1304, %v1300
    %v1306 = vmul.f32 1.0, %v1305
    %v1307 = vtanh.pop %v1287
    %1309 = vrot.lane.b32.xlu0 %v1257, 32
    %v1310 = vpop.permute.xlu0 %1309
    %v1312 = vmul.f32 %v1306, %v1310
    %1314 = vrot.lane.b32.xlu0 %v1307, 64
    %v1315 = vpop.permute.xlu0 %1314
    %v1317 = vmul.f32 %v1306, %v1315
    %1319 = vrot.lane.b32.xlu0 %v1317, 32
    %v1320 = vpop.permute.xlu0 %1319
    %v1322 = vadd.f32 %v1312, %v1320
    %v1323 = vtanh.pop %v1322
    %1325 = vrot.lane.b32.xlu0 %v1323, 64
    %v1326 = vpop.permute.xlu0 %1325
    %v1328 = vmul.f32 %v1306, %v1326
    %v1329 = vld [vmem:[%s1 + $0x18] sm:$0xff]
    %1331 = vrot.lane.b32.xlu0 %v1328, 32
    %v1332 = vpop.permute.xlu0 %1331
    %v1334 = vmul.f32 %v1329, %v1332
    %v1335 = vsub.f32 1.0, %v1329
    %v1336 = vmul.f32 %v1335, %v1250
    %v1337 = vadd.f32 %v1334, %v1336
    %1339 = vrot.lane.b32.xlu0 %v1322, 96
    %v1340 = vpop.permute.xlu0 %1339
    %v1342 = vmul.f32 %v1329, %v1340
    %v1343 = vmul.f32 %v1335, %v1257
    %v1344 = vadd.f32 %v1342, %v1343
    %1346 = vrot.lane.b32.xlu0 %v1334, 32
    %v1347 = vpop.permute.xlu0 %1346
    %1349 = vst.msk [vmem:[#allocation3 + $0x18] sm:$0xff] %vm1000, %v1347
    %v1350 = vld [vmem:[#allocation2 + $0x28] sm:$0xff]
    %v1352 = vsel %vm142, %v1337, 0
    %1354 = vmatpush.msra.mxu0 0.0
    %1355 = vmatpush.msra.mxu0 0.0
    %1356 = vmatpush.msra.mxu0 0.0
    %1357 = vmatpush.msra.mxu0 0.0
    %1358 = vmatpush.msra.mxu0 0.0
    %1359 = vmatpush.msra.mxu0 0.0
    %1360 = vmatpush.msra.mxu0 0.0
    %1361 = vmatpush.msra.mxu0 0.0
    %1362 = vmatpush.msra.mxu0 0.0
    %1363 = vmatpush.msra.mxu0 0.0
    %1364 = vmatpush.msra.mxu0 0.0
    %1365 = vmatpush.msra.mxu0 0.0
    %1366 = vmatpush.msra.mxu0 %v921
    %1367 = vmatpush.msra.mxu0 %v920
    %1368 = vmatpush.msra.mxu0 %v919
    %1369 = vmatpush.msra.mxu0 %v918
    %1370 = vmatmul.f32.gmra.mxu0 %v1352
    %v1371 = vpop.f32.mrf.mxu0
    %v1372 = vadd.f32 0.0, %v1371
    %1373 = vdwg.mxu0
    %v1374 = vadd.f32 %v1350, %v1372
    %v1375 = vxor.u32 %v1374, 2147483648
    %v1376 = vmul.f32 %v1375, 1.442695
    %v1377 = vpow.pop %v1376
    %v1378 = vadd.f32 %v1377, 1.0
    %v1379 = vrcp.pop %v1378
    %v1380 = vmul.f32 %v1378, %v1379
    %v1381 = vsub.f32 1.0, %v1380
    %v1382 = vmul.f32 %v1379, %v1381
    %v1383 = vadd.f32 %v1379, %v1382
    %vm1384 = vweird.f32 %v1378
    %vm1385 = vweird.f32 %v1379
    %vm1386 = vmor %vm1384, %vm1385
    %v1387 = vsel %vm1386, %v1379, %v1383
    %v1388 = vand.u32 2147483647, %v1378
    %vm1389 = vcmp.eq.f32.partialorder %v1388, 8.507059e+37
    %v1390 = vand.u32 %v1378, 2147483648
    %v1391 = vor.u32 1.1754944e-38, %v1390
    %v1392 = vsel %vm1389, %v1391, %v1387
    %v1393 = vmul.f32 1.0, %v1392
    %v1394 = vtanh.pop %v1374
    %1396 = vrot.lane.b32.xlu0 %v1344, 32
    %v1397 = vpop.permute.xlu0 %1396
    %v1399 = vmul.f32 %v1393, %v1397
    %1401 = vrot.lane.b32.xlu0 %v1394, 64
    %v1402 = vpop.permute.xlu0 %1401
    %v1404 = vmul.f32 %v1393, %v1402
    %1406 = vrot.lane.b32.xlu0 %v1404, 32
    %v1407 = vpop.permute.xlu0 %1406
    %v1409 = vadd.f32 %v1399, %v1407
    %v1410 = vtanh.pop %v1409
    %1412 = vrot.lane.b32.xlu0 %v1410, 64
    %v1413 = vpop.permute.xlu0 %1412
    %v1415 = vmul.f32 %v1393, %v1413
    %v1416 = vld [vmem:[%s1 + $0x10] sm:$0xff]
    %1418 = vrot.lane.b32.xlu0 %v1415, 32
    %v1419 = vpop.permute.xlu0 %1418
    %v1421 = vmul.f32 %v1416, %v1419
    %v1422 = vsub.f32 1.0, %v1416
    %v1423 = vmul.f32 %v1422, %v1337
    %v1424 = vadd.f32 %v1421, %v1423
    %1426 = vrot.lane.b32.xlu0 %v1409, 96
    %v1427 = vpop.permute.xlu0 %1426
    %v1429 = vmul.f32 %v1416, %v1427
    %v1430 = vmul.f32 %v1422, %v1344
    %v1431 = vadd.f32 %v1429, %v1430
    %1433 = vrot.lane.b32.xlu0 %v1421, 32
    %v1434 = vpop.permute.xlu0 %1433
    %1436 = vst.msk [vmem:[#allocation3 + $0x10] sm:$0xff] %vm1000, %v1434
    %v1437 = vld [vmem:[#allocation2 + $0x18] sm:$0xff]
    %v1439 = vsel %vm142, %v1424, 0
    %1441 = vmatpush.msra.mxu0 0.0
    %1442 = vmatpush.msra.mxu0 0.0
    %1443 = vmatpush.msra.mxu0 0.0
    %1444 = vmatpush.msra.mxu0 0.0
    %1445 = vmatpush.msra.mxu0 0.0
    %1446 = vmatpush.msra.mxu0 0.0
    %1447 = vmatpush.msra.mxu0 0.0
    %1448 = vmatpush.msra.mxu0 0.0
    %1449 = vmatpush.msra.mxu0 0.0
    %1450 = vmatpush.msra.mxu0 0.0
    %1451 = vmatpush.msra.mxu0 0.0
    %1452 = vmatpush.msra.mxu0 0.0
    %1453 = vmatpush.msra.mxu0 %v921
    %1454 = vmatpush.msra.mxu0 %v920
    %1455 = vmatpush.msra.mxu0 %v919
    %1456 = vmatpush.msra.mxu0 %v918
    %1457 = vmatmul.f32.gmra.mxu0 %v1439
    %v1458 = vpop.f32.mrf.mxu0
    %v1459 = vadd.f32 0.0, %v1458
    %1460 = vdwg.mxu0
    %v1461 = vadd.f32 %v1437, %v1459
    %v1462 = vxor.u32 %v1461, 2147483648
    %v1463 = vmul.f32 %v1462, 1.442695
    %v1464 = vpow.pop %v1463
    %v1465 = vadd.f32 %v1464, 1.0
    %v1466 = vrcp.pop %v1465
    %v1467 = vmul.f32 %v1465, %v1466
    %v1468 = vsub.f32 1.0, %v1467
    %v1469 = vmul.f32 %v1466, %v1468
    %v1470 = vadd.f32 %v1466, %v1469
    %vm1471 = vweird.f32 %v1465
    %vm1472 = vweird.f32 %v1466
    %vm1473 = vmor %vm1471, %vm1472
    %v1474 = vsel %vm1473, %v1466, %v1470
    %v1475 = vand.u32 2147483647, %v1465
    %vm1476 = vcmp.eq.f32.partialorder %v1475, 8.507059e+37
    %v1477 = vand.u32 %v1465, 2147483648
    %v1478 = vor.u32 1.1754944e-38, %v1477
    %v1479 = vsel %vm1476, %v1478, %v1474
    %v1480 = vmul.f32 1.0, %v1479
    %v1481 = vtanh.pop %v1461
    %1483 = vrot.lane.b32.xlu0 %v1431, 32
    %v1484 = vpop.permute.xlu0 %1483
    %v1486 = vmul.f32 %v1480, %v1484
    %1488 = vrot.lane.b32.xlu0 %v1481, 64
    %v1489 = vpop.permute.xlu0 %1488
    %v1491 = vmul.f32 %v1480, %v1489
    %1493 = vrot.lane.b32.xlu0 %v1491, 32
    %v1494 = vpop.permute.xlu0 %1493
    %v1496 = vadd.f32 %v1486, %v1494
    %v1497 = vtanh.pop %v1496
    %1499 = vrot.lane.b32.xlu0 %v1497, 64
    %v1500 = vpop.permute.xlu0 %1499
    %v1502 = vmul.f32 %v1480, %v1500
    %v1503 = vld [vmem:[%s1 + $0x8] sm:$0xff]
    %1505 = vrot.lane.b32.xlu0 %v1502, 32
    %v1506 = vpop.permute.xlu0 %1505
    %v1508 = vmul.f32 %v1503, %v1506
    %v1509 = vsub.f32 1.0, %v1503
    %v1510 = vmul.f32 %v1509, %v1424
    %v1511 = vadd.f32 %v1508, %v1510
    %1513 = vrot.lane.b32.xlu0 %v1496, 96
    %v1514 = vpop.permute.xlu0 %1513
    %v1516 = vmul.f32 %v1503, %v1514
    %v1517 = vmul.f32 %v1509, %v1431
    %v1518 = vadd.f32 %v1516, %v1517
    %1520 = vrot.lane.b32.xlu0 %v1508, 32
    %v1521 = vpop.permute.xlu0 %1520
    %1523 = vst.msk [vmem:[#allocation3 + $0x8] sm:$0xff] %vm1000, %v1521
    %v1524 = vld [vmem:[#allocation2 + $0x8] sm:$0xff]
    %v1526 = vsel %vm142, %v1511, 0
    %1528 = vmatpush.msra.mxu0 0.0
    %1529 = vmatpush.msra.mxu0 0.0
    %1530 = vmatpush.msra.mxu0 0.0
    %1531 = vmatpush.msra.mxu0 0.0
    %1532 = vmatpush.msra.mxu0 0.0
    %1533 = vmatpush.msra.mxu0 0.0
    %1534 = vmatpush.msra.mxu0 0.0
    %1535 = vmatpush.msra.mxu0 0.0
    %1536 = vmatpush.msra.mxu0 0.0
    %1537 = vmatpush.msra.mxu0 0.0
    %1538 = vmatpush.msra.mxu0 0.0
    %1539 = vmatpush.msra.mxu0 0.0
    %1540 = vmatpush.msra.mxu0 %v921
    %1541 = vmatpush.msra.mxu0 %v920
    %1542 = vmatpush.msra.mxu0 %v919
    %1543 = vmatpush.msra.mxu0 %v918
    %1544 = vmatmul.f32.gmra.mxu0 %v1526
    %v1545 = vpop.f32.mrf.mxu0
    %v1546 = vadd.f32 0.0, %v1545
    %1547 = vdwg.mxu0
    %v1548 = vadd.f32 %v1524, %v1546
    %v1549 = vxor.u32 %v1548, 2147483648
    %v1550 = vmul.f32 %v1549, 1.442695
    %v1551 = vpow.pop %v1550
    %v1552 = vadd.f32 %v1551, 1.0
    %v1553 = vrcp.pop %v1552
    %v1554 = vmul.f32 %v1552, %v1553
    %v1555 = vsub.f32 1.0, %v1554
    %v1556 = vmul.f32 %v1553, %v1555
    %v1557 = vadd.f32 %v1553, %v1556
    %vm1558 = vweird.f32 %v1552
    %vm1559 = vweird.f32 %v1553
    %vm1560 = vmor %vm1558, %vm1559
    %v1561 = vsel %vm1560, %v1553, %v1557
    %v1562 = vand.u32 2147483647, %v1552
    %vm1563 = vcmp.eq.f32.partialorder %v1562, 8.507059e+37
    %v1564 = vand.u32 %v1552, 2147483648
    %v1565 = vor.u32 1.1754944e-38, %v1564
    %v1566 = vsel %vm1563, %v1565, %v1561
    %v1567 = vmul.f32 1.0, %v1566
    %v1568 = vtanh.pop %v1548
    %1570 = vrot.lane.b32.xlu0 %v1518, 32
    %v1571 = vpop.permute.xlu0 %1570
    %v1573 = vmul.f32 %v1567, %v1571
    %1575 = vrot.lane.b32.xlu0 %v1568, 64
    %v1576 = vpop.permute.xlu0 %1575
    %v1578 = vmul.f32 %v1567, %v1576
    %1580 = vrot.lane.b32.xlu0 %v1578, 32
    %v1581 = vpop.permute.xlu0 %1580
    %v1583 = vadd.f32 %v1573, %v1581
    %v1584 = vtanh.pop %v1583
    %1586 = vrot.lane.b32.xlu0 %v1584, 64
    %v1587 = vpop.permute.xlu0 %1586
    %v1589 = vmul.f32 %v1567, %v1587
    %v1590 = vld [vmem:[%s1] sm:$0xff]
    %1592 = vrot.lane.b32.xlu0 %v1589, 32
    %v1593 = vpop.permute.xlu0 %1592
    %v1595 = vmul.f32 %v1590, %v1593
    %1597 = vrot.lane.b32.xlu0 %v1595, 32
    %v1598 = vpop.permute.xlu0 %1597
    %1600 = vst.msk [vmem:[#allocation3] sm:$0xff] %vm1000, %v1598
    %v1601 = vld [vmem:[#allocation3] sm:$0xff]
    %v1602 = vld [vmem:[#allocation3 + $0x8] sm:$0xff]
    %v1603 = vld [vmem:[#allocation3 + $0x10] sm:$0xff]
    %v1604 = vld [vmem:[#allocation3 + $0x18] sm:$0xff]
    %v1605 = vld [vmem:[#allocation3 + $0x20] sm:$0xff]
    %v1606 = vld [vmem:[#allocation3 + $0x28] sm:$0xff]
    %v1607 = vld [vmem:[#allocation3 + $0x30] sm:$0xff]
    %v1608 = vld [vmem:[#allocation3 + $0x38] sm:$0xff]
    %v1609 = vld [vmem:[%s6] sm:$0xff]
    %v1610 = vld [vmem:[%s6 + $0x8] sm:$0xff]
    %v1611 = vld [vmem:[%s6 + $0x10] sm:$0xff]
    %v1612 = vld [vmem:[%s6 + $0x18] sm:$0xff]
    %v1613 = vld [vmem:[%s6 + $0x20] sm:$0xff]
    %v1614 = vld [vmem:[%s6 + $0x28] sm:$0xff]
    %v1615 = vld [vmem:[%s6 + $0x30] sm:$0xff]
    %v1616 = vld [vmem:[%s6 + $0x38] sm:$0xff]
    %v1617 = vld [vmem:[%s6 + $0x40] sm:$0xff]
    %v1618 = vld [vmem:[%s6 + $0x48] sm:$0xff]
    %v1619 = vld [vmem:[%s6 + $0x50] sm:$0xff]
    %v1620 = vld [vmem:[%s6 + $0x58] sm:$0xff]
    %v1621 = vld [vmem:[%s6 + $0x60] sm:$0xff]
    %v1622 = vld [vmem:[%s6 + $0x68] sm:$0xff]
    %v1623 = vld [vmem:[%s6 + $0x70] sm:$0xff]
    %v1624 = vld [vmem:[%s6 + $0x78] sm:$0xff]
    %v1625 = vld [vmem:[%s7] sm:$0x3]
    %v1627 = vperm.slane %v1625, 0
    %v1628 = vperm.slane %v1625, 1
    %vm1631 = vcmask 523264
    %v1633 = vsel %vm1631, %v1601, 0
    %v1636 = vsel %vm1631, %v1602, 0
    %v1639 = vsel %vm1631, %v1603, 0
    %v1642 = vsel %vm1631, %v1604, 0
    %v1645 = vsel %vm1631, %v1605, 0
    %v1648 = vsel %vm1631, %v1606, 0
    %v1651 = vsel %vm1631, %v1607, 0
    %v1654 = vsel %vm1631, %v1608, 0
    %1656 = vmatpush.msra.mxu0 0.0
    %1657 = vmatpush.msra.mxu0 0.0
    %1658 = vmatpush.msra.mxu0 0.0
    %1659 = vmatpush.msra.mxu0 0.0
    %1660 = vmatpush.msra.mxu0 0.0
    %1661 = vmatpush.msra.mxu0 0.0
    %1662 = vmatpush.msra.mxu0 0.0
    %1663 = vmatpush.msra.mxu0 0.0
    %1664 = vmatpush.msra.mxu0 %v1623
    %1665 = vmatpush.msra.mxu0 %v1621
    %1666 = vmatpush.msra.mxu0 %v1619
    %1667 = vmatpush.msra.mxu0 %v1617
    %1668 = vmatpush.msra.mxu0 %v1615
    %1669 = vmatpush.msra.mxu0 %v1613
    %1670 = vmatpush.msra.mxu0 %v1611
    %1671 = vmatpush.msra.mxu0 %v1609
    %1672 = vmatmul.f32.gmra.mxu0 %v1633
    %v1673 = vpop.f32.mrf.mxu0
    %v1674 = vadd.f32 %v1627, %v1673
    %1675 = vmatmul.f32.gmra.mxu0 %v1636
    %v1676 = vpop.f32.mrf.mxu0
    %v1677 = vadd.f32 %v1627, %v1676
    %1678 = vmatmul.f32.gmra.mxu0 %v1639
    %v1679 = vpop.f32.mrf.mxu0
    %v1680 = vadd.f32 %v1627, %v1679
    %1681 = vmatmul.f32.gmra.mxu0 %v1642
    %v1682 = vpop.f32.mrf.mxu0
    %v1683 = vadd.f32 %v1627, %v1682
    %1684 = vmatmul.f32.gmra.mxu0 %v1645
    %v1685 = vpop.f32.mrf.mxu0
    %v1686 = vadd.f32 %v1627, %v1685
    %1687 = vmatmul.f32.gmra.mxu0 %v1648
    %v1688 = vpop.f32.mrf.mxu0
    %v1689 = vadd.f32 %v1627, %v1688
    %1690 = vmatmul.f32.gmra.mxu0 %v1651
    %v1691 = vpop.f32.mrf.mxu0
    %v1692 = vadd.f32 %v1627, %v1691
    %1693 = vmatmul.f32.gmra.mxu0 %v1654
    %v1694 = vpop.f32.mrf.mxu0
    %v1695 = vadd.f32 %v1627, %v1694
    %1696 = vdwg.mxu0
    %1697 = vmatpush.msra.mxu0 0.0
    %1698 = vmatpush.msra.mxu0 0.0
    %1699 = vmatpush.msra.mxu0 0.0
    %1700 = vmatpush.msra.mxu0 0.0
    %1701 = vmatpush.msra.mxu0 0.0
    %1702 = vmatpush.msra.mxu0 0.0
    %1703 = vmatpush.msra.mxu0 0.0
    %1704 = vmatpush.msra.mxu0 0.0
    %1705 = vmatpush.msra.mxu0 %v1624
    %1706 = vmatpush.msra.mxu0 %v1622
    %1707 = vmatpush.msra.mxu0 %v1620
    %1708 = vmatpush.msra.mxu0 %v1618
    %1709 = vmatpush.msra.mxu0 %v1616
    %1710 = vmatpush.msra.mxu0 %v1614
    %1711 = vmatpush.msra.mxu0 %v1612
    %1712 = vmatpush.msra.mxu0 %v1610
    %1713 = vmatmul.f32.gmra.mxu0 %v1633
    %v1714 = vpop.f32.mrf.mxu0
    %v1715 = vadd.f32 %v1628, %v1714
    %1716 = vmatmul.f32.gmra.mxu0 %v1636
    %v1717 = vpop.f32.mrf.mxu0
    %v1718 = vadd.f32 %v1628, %v1717
    %1719 = vmatmul.f32.gmra.mxu0 %v1639
    %v1720 = vpop.f32.mrf.mxu0
    %v1721 = vadd.f32 %v1628, %v1720
    %1722 = vmatmul.f32.gmra.mxu0 %v1642
    %v1723 = vpop.f32.mrf.mxu0
    %v1724 = vadd.f32 %v1628, %v1723
    %1725 = vmatmul.f32.gmra.mxu0 %v1645
    %v1726 = vpop.f32.mrf.mxu0
    %v1727 = vadd.f32 %v1628, %v1726
    %1728 = vmatmul.f32.gmra.mxu0 %v1648
    %v1729 = vpop.f32.mrf.mxu0
    %v1730 = vadd.f32 %v1628, %v1729
    %1731 = vmatmul.f32.gmra.mxu0 %v1651
    %v1732 = vpop.f32.mrf.mxu0
    %v1733 = vadd.f32 %v1628, %v1732
    %1734 = vmatmul.f32.gmra.mxu0 %v1654
    %v1735 = vpop.f32.mrf.mxu0
    %v1736 = vadd.f32 %v1628, %v1735
    %1737 = vdwg.mxu0
    %1738 = vst [vmem:[#allocation2] sm:$0xff] %v1674
    %1739 = vst [vmem:[#allocation2 + $0x8] sm:$0xff] %v1715
    %1740 = vst [vmem:[#allocation2 + $0x10] sm:$0xff] %v1677
    %1741 = vst [vmem:[#allocation2 + $0x18] sm:$0xff] %v1718
    %1742 = vst [vmem:[#allocation2 + $0x20] sm:$0xff] %v1680
    %1743 = vst [vmem:[#allocation2 + $0x28] sm:$0xff] %v1721
    %1744 = vst [vmem:[#allocation2 + $0x30] sm:$0xff] %v1683
    %1745 = vst [vmem:[#allocation2 + $0x38] sm:$0xff] %v1724
    %1746 = vst [vmem:[#allocation2 + $0x40] sm:$0xff] %v1686
    %1747 = vst [vmem:[#allocation2 + $0x48] sm:$0xff] %v1727
    %1748 = vst [vmem:[#allocation2 + $0x50] sm:$0xff] %v1689
    %1749 = vst [vmem:[#allocation2 + $0x58] sm:$0xff] %v1730
    %1750 = vst [vmem:[#allocation2 + $0x60] sm:$0xff] %v1692
    %1751 = vst [vmem:[#allocation2 + $0x68] sm:$0xff] %v1733
    %1752 = vst [vmem:[#allocation2 + $0x70] sm:$0xff] %v1695
    %1753 = vst [vmem:[#allocation2 + $0x78] sm:$0xff] %v1736
    %v1754 = vld [vmem:[#allocation9] sm:$0xff]
    %v1755 = vld [vmem:[#allocation9 + $0x8] sm:$0xff]
    %v1756 = vld [vmem:[#allocation9 + $0x10] sm:$0xff]
    %v1757 = vld [vmem:[#allocation9 + $0x18] sm:$0xff]
    %v1758 = vld [vmem:[#allocation2] sm:$0xff]
    %1759 = vmatpush.msra.mxu0 0.0
    %1760 = vmatpush.msra.mxu0 0.0
    %1761 = vmatpush.msra.mxu0 0.0
    %1762 = vmatpush.msra.mxu0 0.0
    %1763 = vmatpush.msra.mxu0 0.0
    %1764 = vmatpush.msra.mxu0 0.0
    %1765 = vmatpush.msra.mxu0 0.0
    %1766 = vmatpush.msra.mxu0 0.0
    %1767 = vmatpush.msra.mxu0 0.0
    %1768 = vmatpush.msra.mxu0 0.0
    %1769 = vmatpush.msra.mxu0 0.0
    %1770 = vmatpush.msra.mxu0 0.0
    %1771 = vmatpush.msra.mxu0 %v1757
    %1772 = vmatpush.msra.mxu0 %v1756
    %1773 = vmatpush.msra.mxu0 %v1755
    %1774 = vmatpush.msra.mxu0 %v1754
    %1775 = vmatmul.f32.gmra.mxu0 %v271
    %v1776 = vpop.f32.mrf.mxu0
    %v1777 = vadd.f32 0.0, %v1776
    %1778 = vdwg.mxu0
    %v1779 = vadd.f32 %v1758, %v1777
    %v1780 = vxor.u32 %v1779, 2147483648
    %v1781 = vmul.f32 %v1780, 1.442695
    %v1782 = vpow.pop %v1781
    %v1783 = vadd.f32 %v1782, 1.0
    %v1784 = vrcp.pop %v1783
    %v1785 = vmul.f32 %v1783, %v1784
    %v1786 = vsub.f32 1.0, %v1785
    %v1787 = vmul.f32 %v1784, %v1786
    %v1788 = vadd.f32 %v1784, %v1787
    %vm1789 = vweird.f32 %v1783
    %vm1790 = vweird.f32 %v1784
    %vm1791 = vmor %vm1789, %vm1790
    %v1792 = vsel %vm1791, %v1784, %v1788
    %v1793 = vand.u32 2147483647, %v1783
    %vm1794 = vcmp.eq.f32.partialorder %v1793, 8.507059e+37
    %v1795 = vand.u32 %v1783, 2147483648
    %v1796 = vor.u32 1.1754944e-38, %v1795
    %v1797 = vsel %vm1794, %v1796, %v1792
    %v1798 = vmul.f32 1.0, %v1797
    %v1799 = vtanh.pop %v1779
    %v1800 = vmul.f32 %v1798, 0.0
    %1802 = vrot.lane.b32.xlu0 %v1799, 64
    %v1803 = vpop.permute.xlu0 %1802
    %v1805 = vmul.f32 %v1798, %v1803
    %1807 = vrot.lane.b32.xlu0 %v1805, 32
    %v1808 = vpop.permute.xlu0 %1807
    %v1810 = vadd.f32 %v1800, %v1808
    %v1811 = vtanh.pop %v1810
    %1813 = vrot.lane.b32.xlu0 %v1811, 64
    %v1814 = vpop.permute.xlu0 %1813
    %v1816 = vmul.f32 %v1798, %v1814
    %v1817 = vld [vmem:[%s1] sm:$0xff]
    %1819 = vrot.lane.b32.xlu0 %v1816, 32
    %v1820 = vpop.permute.xlu0 %1819
    %v1822 = vmul.f32 %v1817, %v1820
    %v1823 = vsub.f32 1.0, %v1817
    %v1824 = vmul.f32 %v1823, 0.0
    %v1825 = vadd.f32 %v1822, %v1824
    %1827 = vrot.lane.b32.xlu0 %v1810, 96
    %v1828 = vpop.permute.xlu0 %1827
    %v1830 = vmul.f32 %v1817, %v1828
    %v1831 = vadd.f32 %v1830, %v1824
    %1832 = vst.msk [vmem:[#allocation3] sm:$0xff] %vm142, %v1822
    %v1833 = vld [vmem:[#allocation2 + $0x10] sm:$0xff]
    %v1835 = vsel %vm142, %v1825, 0
    %1837 = vmatpush.msra.mxu0 0.0
    %1838 = vmatpush.msra.mxu0 0.0
    %1839 = vmatpush.msra.mxu0 0.0
    %1840 = vmatpush.msra.mxu0 0.0
    %1841 = vmatpush.msra.mxu0 0.0
    %1842 = vmatpush.msra.mxu0 0.0
    %1843 = vmatpush.msra.mxu0 0.0
    %1844 = vmatpush.msra.mxu0 0.0
    %1845 = vmatpush.msra.mxu0 0.0
    %1846 = vmatpush.msra.mxu0 0.0
    %1847 = vmatpush.msra.mxu0 0.0
    %1848 = vmatpush.msra.mxu0 0.0
    %1849 = vmatpush.msra.mxu0 %v1757
    %1850 = vmatpush.msra.mxu0 %v1756
    %1851 = vmatpush.msra.mxu0 %v1755
    %1852 = vmatpush.msra.mxu0 %v1754
    %1853 = vmatmul.f32.gmra.mxu0 %v1835
    %v1854 = vpop.f32.mrf.mxu0
    %v1855 = vadd.f32 0.0, %v1854
    %1856 = vdwg.mxu0
    %v1857 = vadd.f32 %v1833, %v1855
    %v1858 = vxor.u32 %v1857, 2147483648
    %v1859 = vmul.f32 %v1858, 1.442695
    %v1860 = vpow.pop %v1859
    %v1861 = vadd.f32 %v1860, 1.0
    %v1862 = vrcp.pop %v1861
    %v1863 = vmul.f32 %v1861, %v1862
    %v1864 = vsub.f32 1.0, %v1863
    %v1865 = vmul.f32 %v1862, %v1864
    %v1866 = vadd.f32 %v1862, %v1865
    %vm1867 = vweird.f32 %v1861
    %vm1868 = vweird.f32 %v1862
    %vm1869 = vmor %vm1867, %vm1868
    %v1870 = vsel %vm1869, %v1862, %v1866
    %v1871 = vand.u32 2147483647, %v1861
    %vm1872 = vcmp.eq.f32.partialorder %v1871, 8.507059e+37
    %v1873 = vand.u32 %v1861, 2147483648
    %v1874 = vor.u32 1.1754944e-38, %v1873
    %v1875 = vsel %vm1872, %v1874, %v1870
    %v1876 = vmul.f32 1.0, %v1875
    %v1877 = vtanh.pop %v1857
    %1879 = vrot.lane.b32.xlu0 %v1831, 32
    %v1880 = vpop.permute.xlu0 %1879
    %v1882 = vmul.f32 %v1876, %v1880
    %1884 = vrot.lane.b32.xlu0 %v1877, 64
    %v1885 = vpop.permute.xlu0 %1884
    %v1887 = vmul.f32 %v1876, %v1885
    %1889 = vrot.lane.b32.xlu0 %v1887, 32
    %v1890 = vpop.permute.xlu0 %1889
    %v1892 = vadd.f32 %v1882, %v1890
    %v1893 = vtanh.pop %v1892
    %1895 = vrot.lane.b32.xlu0 %v1893, 64
    %v1896 = vpop.permute.xlu0 %1895
    %v1898 = vmul.f32 %v1876, %v1896
    %v1899 = vld [vmem:[%s1 + $0x8] sm:$0xff]
    %1901 = vrot.lane.b32.xlu0 %v1898, 32
    %v1902 = vpop.permute.xlu0 %1901
    %v1904 = vmul.f32 %v1899, %v1902
    %v1905 = vsub.f32 1.0, %v1899
    %v1906 = vmul.f32 %v1905, %v1825
    %v1907 = vadd.f32 %v1904, %v1906
    %1909 = vrot.lane.b32.xlu0 %v1892, 96
    %v1910 = vpop.permute.xlu0 %1909
    %v1912 = vmul.f32 %v1899, %v1910
    %v1913 = vmul.f32 %v1905, %v1831
    %v1914 = vadd.f32 %v1912, %v1913
    %1915 = vst.msk [vmem:[#allocation3 + $0x8] sm:$0xff] %vm142, %v1904
    %v1916 = vld [vmem:[#allocation2 + $0x20] sm:$0xff]
    %v1918 = vsel %vm142, %v1907, 0
    %1920 = vmatpush.msra.mxu0 0.0
    %1921 = vmatpush.msra.mxu0 0.0
    %1922 = vmatpush.msra.mxu0 0.0
    %1923 = vmatpush.msra.mxu0 0.0
    %1924 = vmatpush.msra.mxu0 0.0
    %1925 = vmatpush.msra.mxu0 0.0
    %1926 = vmatpush.msra.mxu0 0.0
    %1927 = vmatpush.msra.mxu0 0.0
    %1928 = vmatpush.msra.mxu0 0.0
    %1929 = vmatpush.msra.mxu0 0.0
    %1930 = vmatpush.msra.mxu0 0.0
    %1931 = vmatpush.msra.mxu0 0.0
    %1932 = vmatpush.msra.mxu0 %v1757
    %1933 = vmatpush.msra.mxu0 %v1756
    %1934 = vmatpush.msra.mxu0 %v1755
    %1935 = vmatpush.msra.mxu0 %v1754
    %1936 = vmatmul.f32.gmra.mxu0 %v1918
    %v1937 = vpop.f32.mrf.mxu0
    %v1938 = vadd.f32 0.0, %v1937
    %1939 = vdwg.mxu0
    %v1940 = vadd.f32 %v1916, %v1938
    %v1941 = vxor.u32 %v1940, 2147483648
    %v1942 = vmul.f32 %v1941, 1.442695
    %v1943 = vpow.pop %v1942
    %v1944 = vadd.f32 %v1943, 1.0
    %v1945 = vrcp.pop %v1944
    %v1946 = vmul.f32 %v1944, %v1945
    %v1947 = vsub.f32 1.0, %v1946
    %v1948 = vmul.f32 %v1945, %v1947
    %v1949 = vadd.f32 %v1945, %v1948
    %vm1950 = vweird.f32 %v1944
    %vm1951 = vweird.f32 %v1945
    %vm1952 = vmor %vm1950, %vm1951
    %v1953 = vsel %vm1952, %v1945, %v1949
    %v1954 = vand.u32 2147483647, %v1944
    %vm1955 = vcmp.eq.f32.partialorder %v1954, 8.507059e+37
    %v1956 = vand.u32 %v1944, 2147483648
    %v1957 = vor.u32 1.1754944e-38, %v1956
    %v1958 = vsel %vm1955, %v1957, %v1953
    %v1959 = vmul.f32 1.0, %v1958
    %v1960 = vtanh.pop %v1940
    %1962 = vrot.lane.b32.xlu0 %v1914, 32
    %v1963 = vpop.permute.xlu0 %1962
    %v1965 = vmul.f32 %v1959, %v1963
    %1967 = vrot.lane.b32.xlu0 %v1960, 64
    %v1968 = vpop.permute.xlu0 %1967
    %v1970 = vmul.f32 %v1959, %v1968
    %1972 = vrot.lane.b32.xlu0 %v1970, 32
    %v1973 = vpop.permute.xlu0 %1972
    %v1975 = vadd.f32 %v1965, %v1973
    %v1976 = vtanh.pop %v1975
    %1978 = vrot.lane.b32.xlu0 %v1976, 64
    %v1979 = vpop.permute.xlu0 %1978
    %v1981 = vmul.f32 %v1959, %v1979
    %v1982 = vld [vmem:[%s1 + $0x10] sm:$0xff]
    %1984 = vrot.lane.b32.xlu0 %v1981, 32
    %v1985 = vpop.permute.xlu0 %1984
    %v1987 = vmul.f32 %v1982, %v1985
    %v1988 = vsub.f32 1.0, %v1982
    %v1989 = vmul.f32 %v1988, %v1907
    %v1990 = vadd.f32 %v1987, %v1989
    %1992 = vrot.lane.b32.xlu0 %v1975, 96
    %v1993 = vpop.permute.xlu0 %1992
    %v1995 = vmul.f32 %v1982, %v1993
    %v1996 = vmul.f32 %v1988, %v1914
    %v1997 = vadd.f32 %v1995, %v1996
    %1998 = vst.msk [vmem:[#allocation3 + $0x10] sm:$0xff] %vm142, %v1987
    %v1999 = vld [vmem:[#allocation2 + $0x30] sm:$0xff]
    %v2001 = vsel %vm142, %v1990, 0
    %2003 = vmatpush.msra.mxu0 0.0
    %2004 = vmatpush.msra.mxu0 0.0
    %2005 = vmatpush.msra.mxu0 0.0
    %2006 = vmatpush.msra.mxu0 0.0
    %2007 = vmatpush.msra.mxu0 0.0
    %2008 = vmatpush.msra.mxu0 0.0
    %2009 = vmatpush.msra.mxu0 0.0
    %2010 = vmatpush.msra.mxu0 0.0
    %2011 = vmatpush.msra.mxu0 0.0
    %2012 = vmatpush.msra.mxu0 0.0
    %2013 = vmatpush.msra.mxu0 0.0
    %2014 = vmatpush.msra.mxu0 0.0
    %2015 = vmatpush.msra.mxu0 %v1757
    %2016 = vmatpush.msra.mxu0 %v1756
    %2017 = vmatpush.msra.mxu0 %v1755
    %2018 = vmatpush.msra.mxu0 %v1754
    %2019 = vmatmul.f32.gmra.mxu0 %v2001
    %v2020 = vpop.f32.mrf.mxu0
    %v2021 = vadd.f32 0.0, %v2020
    %2022 = vdwg.mxu0
    %v2023 = vadd.f32 %v1999, %v2021
    %v2024 = vxor.u32 %v2023, 2147483648
    %v2025 = vmul.f32 %v2024, 1.442695
    %v2026 = vpow.pop %v2025
    %v2027 = vadd.f32 %v2026, 1.0
    %v2028 = vrcp.pop %v2027
    %v2029 = vmul.f32 %v2027, %v2028
    %v2030 = vsub.f32 1.0, %v2029
    %v2031 = vmul.f32 %v2028, %v2030
    %v2032 = vadd.f32 %v2028, %v2031
    %vm2033 = vweird.f32 %v2027
    %vm2034 = vweird.f32 %v2028
    %vm2035 = vmor %vm2033, %vm2034
    %v2036 = vsel %vm2035, %v2028, %v2032
    %v2037 = vand.u32 2147483647, %v2027
    %vm2038 = vcmp.eq.f32.partialorder %v2037, 8.507059e+37
    %v2039 = vand.u32 %v2027, 2147483648
    %v2040 = vor.u32 1.1754944e-38, %v2039
    %v2041 = vsel %vm2038, %v2040, %v2036
    %v2042 = vmul.f32 1.0, %v2041
    %v2043 = vtanh.pop %v2023
    %2045 = vrot.lane.b32.xlu0 %v1997, 32
    %v2046 = vpop.permute.xlu0 %2045
    %v2048 = vmul.f32 %v2042, %v2046
    %2050 = vrot.lane.b32.xlu0 %v2043, 64
    %v2051 = vpop.permute.xlu0 %2050
    %v2053 = vmul.f32 %v2042, %v2051
    %2055 = vrot.lane.b32.xlu0 %v2053, 32
    %v2056 = vpop.permute.xlu0 %2055
    %v2058 = vadd.f32 %v2048, %v2056
    %v2059 = vtanh.pop %v2058
    %2061 = vrot.lane.b32.xlu0 %v2059, 64
    %v2062 = vpop.permute.xlu0 %2061
    %v2064 = vmul.f32 %v2042, %v2062
    %v2065 = vld [vmem:[%s1 + $0x18] sm:$0xff]
    %2067 = vrot.lane.b32.xlu0 %v2064, 32
    %v2068 = vpop.permute.xlu0 %2067
    %v2070 = vmul.f32 %v2065, %v2068
    %v2071 = vsub.f32 1.0, %v2065
    %v2072 = vmul.f32 %v2071, %v1990
    %v2073 = vadd.f32 %v2070, %v2072
    %2075 = vrot.lane.b32.xlu0 %v2058, 96
    %v2076 = vpop.permute.xlu0 %2075
    %v2078 = vmul.f32 %v2065, %v2076
    %v2079 = vmul.f32 %v2071, %v1997
    %v2080 = vadd.f32 %v2078, %v2079
    %2081 = vst.msk [vmem:[#allocation3 + $0x18] sm:$0xff] %vm142, %v2070
    %v2082 = vld [vmem:[#allocation2 + $0x40] sm:$0xff]
    %v2084 = vsel %vm142, %v2073, 0
    %2086 = vmatpush.msra.mxu0 0.0
    %2087 = vmatpush.msra.mxu0 0.0
    %2088 = vmatpush.msra.mxu0 0.0
    %2089 = vmatpush.msra.mxu0 0.0
    %2090 = vmatpush.msra.mxu0 0.0
    %2091 = vmatpush.msra.mxu0 0.0
    %2092 = vmatpush.msra.mxu0 0.0
    %2093 = vmatpush.msra.mxu0 0.0
    %2094 = vmatpush.msra.mxu0 0.0
    %2095 = vmatpush.msra.mxu0 0.0
    %2096 = vmatpush.msra.mxu0 0.0
    %2097 = vmatpush.msra.mxu0 0.0
    %2098 = vmatpush.msra.mxu0 %v1757
    %2099 = vmatpush.msra.mxu0 %v1756
    %2100 = vmatpush.msra.mxu0 %v1755
    %2101 = vmatpush.msra.mxu0 %v1754
    %2102 = vmatmul.f32.gmra.mxu0 %v2084
    %v2103 = vpop.f32.mrf.mxu0
    %v2104 = vadd.f32 0.0, %v2103
    %2105 = vdwg.mxu0
    %v2106 = vadd.f32 %v2082, %v2104
    %v2107 = vxor.u32 %v2106, 2147483648
    %v2108 = vmul.f32 %v2107, 1.442695
    %v2109 = vpow.pop %v2108
    %v2110 = vadd.f32 %v2109, 1.0
    %v2111 = vrcp.pop %v2110
    %v2112 = vmul.f32 %v2110, %v2111
    %v2113 = vsub.f32 1.0, %v2112
    %v2114 = vmul.f32 %v2111, %v2113
    %v2115 = vadd.f32 %v2111, %v2114
    %vm2116 = vweird.f32 %v2110
    %vm2117 = vweird.f32 %v2111
    %vm2118 = vmor %vm2116, %vm2117
    %v2119 = vsel %vm2118, %v2111, %v2115
    %v2120 = vand.u32 2147483647, %v2110
    %vm2121 = vcmp.eq.f32.partialorder %v2120, 8.507059e+37
    %v2122 = vand.u32 %v2110, 2147483648
    %v2123 = vor.u32 1.1754944e-38, %v2122
    %v2124 = vsel %vm2121, %v2123, %v2119
    %v2125 = vmul.f32 1.0, %v2124
    %v2126 = vtanh.pop %v2106
    %2128 = vrot.lane.b32.xlu0 %v2080, 32
    %v2129 = vpop.permute.xlu0 %2128
    %v2131 = vmul.f32 %v2125, %v2129
    %2133 = vrot.lane.b32.xlu0 %v2126, 64
    %v2134 = vpop.permute.xlu0 %2133
    %v2136 = vmul.f32 %v2125, %v2134
    %2138 = vrot.lane.b32.xlu0 %v2136, 32
    %v2139 = vpop.permute.xlu0 %2138
    %v2141 = vadd.f32 %v2131, %v2139
    %v2142 = vtanh.pop %v2141
    %2144 = vrot.lane.b32.xlu0 %v2142, 64
    %v2145 = vpop.permute.xlu0 %2144
    %v2147 = vmul.f32 %v2125, %v2145
    %v2148 = vld [vmem:[%s1 + $0x20] sm:$0xff]
    %2150 = vrot.lane.b32.xlu0 %v2147, 32
    %v2151 = vpop.permute.xlu0 %2150
    %v2153 = vmul.f32 %v2148, %v2151
    %v2154 = vsub.f32 1.0, %v2148
    %v2155 = vmul.f32 %v2154, %v2073
    %v2156 = vadd.f32 %v2153, %v2155
    %2158 = vrot.lane.b32.xlu0 %v2141, 96
    %v2159 = vpop.permute.xlu0 %2158
    %v2161 = vmul.f32 %v2148, %v2159
    %v2162 = vmul.f32 %v2154, %v2080
    %v2163 = vadd.f32 %v2161, %v2162
    %2164 = vst.msk [vmem:[#allocation3 + $0x20] sm:$0xff] %vm142, %v2153
    %v2165 = vld [vmem:[#allocation2 + $0x50] sm:$0xff]
    %v2167 = vsel %vm142, %v2156, 0
    %2169 = vmatpush.msra.mxu0 0.0
    %2170 = vmatpush.msra.mxu0 0.0
    %2171 = vmatpush.msra.mxu0 0.0
    %2172 = vmatpush.msra.mxu0 0.0
    %2173 = vmatpush.msra.mxu0 0.0
    %2174 = vmatpush.msra.mxu0 0.0
    %2175 = vmatpush.msra.mxu0 0.0
    %2176 = vmatpush.msra.mxu0 0.0
    %2177 = vmatpush.msra.mxu0 0.0
    %2178 = vmatpush.msra.mxu0 0.0
    %2179 = vmatpush.msra.mxu0 0.0
    %2180 = vmatpush.msra.mxu0 0.0
    %2181 = vmatpush.msra.mxu0 %v1757
    %2182 = vmatpush.msra.mxu0 %v1756
    %2183 = vmatpush.msra.mxu0 %v1755
    %2184 = vmatpush.msra.mxu0 %v1754
    %2185 = vmatmul.f32.gmra.mxu0 %v2167
    %v2186 = vpop.f32.mrf.mxu0
    %v2187 = vadd.f32 0.0, %v2186
    %2188 = vdwg.mxu0
    %v2189 = vadd.f32 %v2165, %v2187
    %v2190 = vxor.u32 %v2189, 2147483648
    %v2191 = vmul.f32 %v2190, 1.442695
    %v2192 = vpow.pop %v2191
    %v2193 = vadd.f32 %v2192, 1.0
    %v2194 = vrcp.pop %v2193
    %v2195 = vmul.f32 %v2193, %v2194
    %v2196 = vsub.f32 1.0, %v2195
    %v2197 = vmul.f32 %v2194, %v2196
    %v2198 = vadd.f32 %v2194, %v2197
    %vm2199 = vweird.f32 %v2193
    %vm2200 = vweird.f32 %v2194
    %vm2201 = vmor %vm2199, %vm2200
    %v2202 = vsel %vm2201, %v2194, %v2198
    %v2203 = vand.u32 2147483647, %v2193
    %vm2204 = vcmp.eq.f32.partialorder %v2203, 8.507059e+37
    %v2205 = vand.u32 %v2193, 2147483648
    %v2206 = vor.u32 1.1754944e-38, %v2205
    %v2207 = vsel %vm2204, %v2206, %v2202
    %v2208 = vmul.f32 1.0, %v2207
    %v2209 = vtanh.pop %v2189
    %2211 = vrot.lane.b32.xlu0 %v2163, 32
    %v2212 = vpop.permute.xlu0 %2211
    %v2214 = vmul.f32 %v2208, %v2212
    %2216 = vrot.lane.b32.xlu0 %v2209, 64
    %v2217 = vpop.permute.xlu0 %2216
    %v2219 = vmul.f32 %v2208, %v2217
    %2221 = vrot.lane.b32.xlu0 %v2219, 32
    %v2222 = vpop.permute.xlu0 %2221
    %v2224 = vadd.f32 %v2214, %v2222
    %v2225 = vtanh.pop %v2224
    %2227 = vrot.lane.b32.xlu0 %v2225, 64
    %v2228 = vpop.permute.xlu0 %2227
    %v2230 = vmul.f32 %v2208, %v2228
    %v2231 = vld [vmem:[%s1 + $0x28] sm:$0xff]
    %2233 = vrot.lane.b32.xlu0 %v2230, 32
    %v2234 = vpop.permute.xlu0 %2233
    %v2236 = vmul.f32 %v2231, %v2234
    %v2237 = vsub.f32 1.0, %v2231
    %v2238 = vmul.f32 %v2237, %v2156
    %v2239 = vadd.f32 %v2236, %v2238
    %2241 = vrot.lane.b32.xlu0 %v2224, 96
    %v2242 = vpop.permute.xlu0 %2241
    %v2244 = vmul.f32 %v2231, %v2242
    %v2245 = vmul.f32 %v2237, %v2163
    %v2246 = vadd.f32 %v2244, %v2245
    %2247 = vst.msk [vmem:[#allocation3 + $0x28] sm:$0xff] %vm142, %v2236
    %v2248 = vld [vmem:[#allocation2 + $0x60] sm:$0xff]
    %v2250 = vsel %vm142, %v2239, 0
    %2252 = vmatpush.msra.mxu0 0.0
    %2253 = vmatpush.msra.mxu0 0.0
    %2254 = vmatpush.msra.mxu0 0.0
    %2255 = vmatpush.msra.mxu0 0.0
    %2256 = vmatpush.msra.mxu0 0.0
    %2257 = vmatpush.msra.mxu0 0.0
    %2258 = vmatpush.msra.mxu0 0.0
    %2259 = vmatpush.msra.mxu0 0.0
    %2260 = vmatpush.msra.mxu0 0.0
    %2261 = vmatpush.msra.mxu0 0.0
    %2262 = vmatpush.msra.mxu0 0.0
    %2263 = vmatpush.msra.mxu0 0.0
    %2264 = vmatpush.msra.mxu0 %v1757
    %2265 = vmatpush.msra.mxu0 %v1756
    %2266 = vmatpush.msra.mxu0 %v1755
    %2267 = vmatpush.msra.mxu0 %v1754
    %2268 = vmatmul.f32.gmra.mxu0 %v2250
    %v2269 = vpop.f32.mrf.mxu0
    %v2270 = vadd.f32 0.0, %v2269
    %2271 = vdwg.mxu0
    %v2272 = vadd.f32 %v2248, %v2270
    %v2273 = vxor.u32 %v2272, 2147483648
    %v2274 = vmul.f32 %v2273, 1.442695
    %v2275 = vpow.pop %v2274
    %v2276 = vadd.f32 %v2275, 1.0
    %v2277 = vrcp.pop %v2276
    %v2278 = vmul.f32 %v2276, %v2277
    %v2279 = vsub.f32 1.0, %v2278
    %v2280 = vmul.f32 %v2277, %v2279
    %v2281 = vadd.f32 %v2277, %v2280
    %vm2282 = vweird.f32 %v2276
    %vm2283 = vweird.f32 %v2277
    %vm2284 = vmor %vm2282, %vm2283
    %v2285 = vsel %vm2284, %v2277, %v2281
    %v2286 = vand.u32 2147483647, %v2276
    %vm2287 = vcmp.eq.f32.partialorder %v2286, 8.507059e+37
    %v2288 = vand.u32 %v2276, 2147483648
    %v2289 = vor.u32 1.1754944e-38, %v2288
    %v2290 = vsel %vm2287, %v2289, %v2285
    %v2291 = vmul.f32 1.0, %v2290
    %v2292 = vtanh.pop %v2272
    %2294 = vrot.lane.b32.xlu0 %v2246, 32
    %v2295 = vpop.permute.xlu0 %2294
    %v2297 = vmul.f32 %v2291, %v2295
    %2299 = vrot.lane.b32.xlu0 %v2292, 64
    %v2300 = vpop.permute.xlu0 %2299
    %v2302 = vmul.f32 %v2291, %v2300
    %2304 = vrot.lane.b32.xlu0 %v2302, 32
    %v2305 = vpop.permute.xlu0 %2304
    %v2307 = vadd.f32 %v2297, %v2305
    %v2308 = vtanh.pop %v2307
    %2310 = vrot.lane.b32.xlu0 %v2308, 64
    %v2311 = vpop.permute.xlu0 %2310
    %v2313 = vmul.f32 %v2291, %v2311
    %v2314 = vld [vmem:[%s1 + $0x30] sm:$0xff]
    %2316 = vrot.lane.b32.xlu0 %v2313, 32
    %v2317 = vpop.permute.xlu0 %2316
    %v2319 = vmul.f32 %v2314, %v2317
    %v2320 = vsub.f32 1.0, %v2314
    %v2321 = vmul.f32 %v2320, %v2239
    %v2322 = vadd.f32 %v2319, %v2321
    %2324 = vrot.lane.b32.xlu0 %v2307, 96
    %v2325 = vpop.permute.xlu0 %2324
    %v2327 = vmul.f32 %v2314, %v2325
    %v2328 = vmul.f32 %v2320, %v2246
    %v2329 = vadd.f32 %v2327, %v2328
    %2330 = vst.msk [vmem:[#allocation3 + $0x30] sm:$0xff] %vm142, %v2319
    %v2331 = vld [vmem:[#allocation2 + $0x70] sm:$0xff]
    %v2333 = vsel %vm142, %v2322, 0
    %2335 = vmatpush.msra.mxu0 0.0
    %2336 = vmatpush.msra.mxu0 0.0
    %2337 = vmatpush.msra.mxu0 0.0
    %2338 = vmatpush.msra.mxu0 0.0
    %2339 = vmatpush.msra.mxu0 0.0
    %2340 = vmatpush.msra.mxu0 0.0
    %2341 = vmatpush.msra.mxu0 0.0
    %2342 = vmatpush.msra.mxu0 0.0
    %2343 = vmatpush.msra.mxu0 0.0
    %2344 = vmatpush.msra.mxu0 0.0
    %2345 = vmatpush.msra.mxu0 0.0
    %2346 = vmatpush.msra.mxu0 0.0
    %2347 = vmatpush.msra.mxu0 %v1757
    %2348 = vmatpush.msra.mxu0 %v1756
    %2349 = vmatpush.msra.mxu0 %v1755
    %2350 = vmatpush.msra.mxu0 %v1754
    %2351 = vmatmul.f32.gmra.mxu0 %v2333
    %v2352 = vpop.f32.mrf.mxu0
    %v2353 = vadd.f32 0.0, %v2352
    %2354 = vdwg.mxu0
    %v2355 = vadd.f32 %v2331, %v2353
    %v2356 = vxor.u32 %v2355, 2147483648
    %v2357 = vmul.f32 %v2356, 1.442695
    %v2358 = vpow.pop %v2357
    %v2359 = vadd.f32 %v2358, 1.0
    %v2360 = vrcp.pop %v2359
    %v2361 = vmul.f32 %v2359, %v2360
    %v2362 = vsub.f32 1.0, %v2361
    %v2363 = vmul.f32 %v2360, %v2362
    %v2364 = vadd.f32 %v2360, %v2363
    %vm2365 = vweird.f32 %v2359
    %vm2366 = vweird.f32 %v2360
    %vm2367 = vmor %vm2365, %vm2366
    %v2368 = vsel %vm2367, %v2360, %v2364
    %v2369 = vand.u32 2147483647, %v2359
    %vm2370 = vcmp.eq.f32.partialorder %v2369, 8.507059e+37
    %v2371 = vand.u32 %v2359, 2147483648
    %v2372 = vor.u32 1.1754944e-38, %v2371
    %v2373 = vsel %vm2370, %v2372, %v2368
    %v2374 = vmul.f32 1.0, %v2373
    %v2375 = vtanh.pop %v2355
    %2377 = vrot.lane.b32.xlu0 %v2329, 32
    %v2378 = vpop.permute.xlu0 %2377
    %v2380 = vmul.f32 %v2374, %v2378
    %2382 = vrot.lane.b32.xlu0 %v2375, 64
    %v2383 = vpop.permute.xlu0 %2382
    %v2385 = vmul.f32 %v2374, %v2383
    %2387 = vrot.lane.b32.xlu0 %v2385, 32
    %v2388 = vpop.permute.xlu0 %2387
    %v2390 = vadd.f32 %v2380, %v2388
    %v2391 = vtanh.pop %v2390
    %2393 = vrot.lane.b32.xlu0 %v2391, 64
    %v2394 = vpop.permute.xlu0 %2393
    %v2396 = vmul.f32 %v2374, %v2394
    %v2397 = vld [vmem:[%s1 + $0x38] sm:$0xff]
    %2399 = vrot.lane.b32.xlu0 %v2396, 32
    %v2400 = vpop.permute.xlu0 %2399
    %v2402 = vmul.f32 %v2397, %v2400
    %2403 = vst.msk [vmem:[#allocation3 + $0x38] sm:$0xff] %vm142, %v2402
    %v2404 = vld [vmem:[#allocation10] sm:$0xff]
    %v2405 = vld [vmem:[#allocation10 + $0x8] sm:$0xff]
    %v2406 = vld [vmem:[#allocation10 + $0x10] sm:$0xff]
    %v2407 = vld [vmem:[#allocation10 + $0x18] sm:$0xff]
    %v2408 = vld [vmem:[#allocation2 + $0x78] sm:$0xff]
    %2409 = vmatpush.msra.mxu0 0.0
    %2410 = vmatpush.msra.mxu0 0.0
    %2411 = vmatpush.msra.mxu0 0.0
    %2412 = vmatpush.msra.mxu0 0.0
    %2413 = vmatpush.msra.mxu0 0.0
    %2414 = vmatpush.msra.mxu0 0.0
    %2415 = vmatpush.msra.mxu0 0.0
    %2416 = vmatpush.msra.mxu0 0.0
    %2417 = vmatpush.msra.mxu0 0.0
    %2418 = vmatpush.msra.mxu0 0.0
    %2419 = vmatpush.msra.mxu0 0.0
    %2420 = vmatpush.msra.mxu0 0.0
    %2421 = vmatpush.msra.mxu0 %v2407
    %2422 = vmatpush.msra.mxu0 %v2406
    %2423 = vmatpush.msra.mxu0 %v2405
    %2424 = vmatpush.msra.mxu0 %v2404
    %2425 = vmatmul.f32.gmra.mxu0 %v271
    %v2426 = vpop.f32.mrf.mxu0
    %v2427 = vadd.f32 0.0, %v2426
    %2428 = vdwg.mxu0
    %v2429 = vadd.f32 %v2408, %v2427
    %v2430 = vxor.u32 %v2429, 2147483648
    %v2431 = vmul.f32 %v2430, 1.442695
    %v2432 = vpow.pop %v2431
    %v2433 = vadd.f32 %v2432, 1.0
    %v2434 = vrcp.pop %v2433
    %v2435 = vmul.f32 %v2433, %v2434
    %v2436 = vsub.f32 1.0, %v2435
    %v2437 = vmul.f32 %v2434, %v2436
    %v2438 = vadd.f32 %v2434, %v2437
    %vm2439 = vweird.f32 %v2433
    %vm2440 = vweird.f32 %v2434
    %vm2441 = vmor %vm2439, %vm2440
    %v2442 = vsel %vm2441, %v2434, %v2438
    %v2443 = vand.u32 2147483647, %v2433
    %vm2444 = vcmp.eq.f32.partialorder %v2443, 8.507059e+37
    %v2445 = vand.u32 %v2433, 2147483648
    %v2446 = vor.u32 1.1754944e-38, %v2445
    %v2447 = vsel %vm2444, %v2446, %v2442
    %v2448 = vmul.f32 1.0, %v2447
    %v2449 = vtanh.pop %v2429
    %v2450 = vmul.f32 %v2448, 0.0
    %2452 = vrot.lane.b32.xlu0 %v2449, 64
    %v2453 = vpop.permute.xlu0 %2452
    %v2455 = vmul.f32 %v2448, %v2453
    %2457 = vrot.lane.b32.xlu0 %v2455, 32
    %v2458 = vpop.permute.xlu0 %2457
    %v2460 = vadd.f32 %v2450, %v2458
    %v2461 = vtanh.pop %v2460
    %2463 = vrot.lane.b32.xlu0 %v2461, 64
    %v2464 = vpop.permute.xlu0 %2463
    %v2466 = vmul.f32 %v2448, %v2464
    %v2467 = vld [vmem:[%s1 + $0x38] sm:$0xff]
    %2469 = vrot.lane.b32.xlu0 %v2466, 32
    %v2470 = vpop.permute.xlu0 %2469
    %v2472 = vmul.f32 %v2467, %v2470
    %v2473 = vsub.f32 1.0, %v2467
    %v2474 = vmul.f32 %v2473, 0.0
    %v2475 = vadd.f32 %v2472, %v2474
    %2477 = vrot.lane.b32.xlu0 %v2460, 96
    %v2478 = vpop.permute.xlu0 %2477
    %v2480 = vmul.f32 %v2467, %v2478
    %v2481 = vadd.f32 %v2480, %v2474
    %2483 = vrot.lane.b32.xlu0 %v2472, 32
    %v2484 = vpop.permute.xlu0 %2483
    %2486 = vst.msk [vmem:[#allocation3 + $0x38] sm:$0xff] %vm1000, %v2484
    %v2487 = vld [vmem:[#allocation2 + $0x68] sm:$0xff]
    %v2489 = vsel %vm142, %v2475, 0
    %2491 = vmatpush.msra.mxu0 0.0
    %2492 = vmatpush.msra.mxu0 0.0
    %2493 = vmatpush.msra.mxu0 0.0
    %2494 = vmatpush.msra.mxu0 0.0
    %2495 = vmatpush.msra.mxu0 0.0
    %2496 = vmatpush.msra.mxu0 0.0
    %2497 = vmatpush.msra.mxu0 0.0
    %2498 = vmatpush.msra.mxu0 0.0
    %2499 = vmatpush.msra.mxu0 0.0
    %2500 = vmatpush.msra.mxu0 0.0
    %2501 = vmatpush.msra.mxu0 0.0
    %2502 = vmatpush.msra.mxu0 0.0
    %2503 = vmatpush.msra.mxu0 %v2407
    %2504 = vmatpush.msra.mxu0 %v2406
    %2505 = vmatpush.msra.mxu0 %v2405
    %2506 = vmatpush.msra.mxu0 %v2404
    %2507 = vmatmul.f32.gmra.mxu0 %v2489
    %v2508 = vpop.f32.mrf.mxu0
    %v2509 = vadd.f32 0.0, %v2508
    %2510 = vdwg.mxu0
    %v2511 = vadd.f32 %v2487, %v2509
    %v2512 = vxor.u32 %v2511, 2147483648
    %v2513 = vmul.f32 %v2512, 1.442695
    %v2514 = vpow.pop %v2513
    %v2515 = vadd.f32 %v2514, 1.0
    %v2516 = vrcp.pop %v2515
    %v2517 = vmul.f32 %v2515, %v2516
    %v2518 = vsub.f32 1.0, %v2517
    %v2519 = vmul.f32 %v2516, %v2518
    %v2520 = vadd.f32 %v2516, %v2519
    %vm2521 = vweird.f32 %v2515
    %vm2522 = vweird.f32 %v2516
    %vm2523 = vmor %vm2521, %vm2522
    %v2524 = vsel %vm2523, %v2516, %v2520
    %v2525 = vand.u32 2147483647, %v2515
    %vm2526 = vcmp.eq.f32.partialorder %v2525, 8.507059e+37
    %v2527 = vand.u32 %v2515, 2147483648
    %v2528 = vor.u32 1.1754944e-38, %v2527
    %v2529 = vsel %vm2526, %v2528, %v2524
    %v2530 = vmul.f32 1.0, %v2529
    %v2531 = vtanh.pop %v2511
    %2533 = vrot.lane.b32.xlu0 %v2481, 32
    %v2534 = vpop.permute.xlu0 %2533
    %v2536 = vmul.f32 %v2530, %v2534
    %2538 = vrot.lane.b32.xlu0 %v2531, 64
    %v2539 = vpop.permute.xlu0 %2538
    %v2541 = vmul.f32 %v2530, %v2539
    %2543 = vrot.lane.b32.xlu0 %v2541, 32
    %v2544 = vpop.permute.xlu0 %2543
    %v2546 = vadd.f32 %v2536, %v2544
    %v2547 = vtanh.pop %v2546
    %2549 = vrot.lane.b32.xlu0 %v2547, 64
    %v2550 = vpop.permute.xlu0 %2549
    %v2552 = vmul.f32 %v2530, %v2550
    %v2553 = vld [vmem:[%s1 + $0x30] sm:$0xff]
    %2555 = vrot.lane.b32.xlu0 %v2552, 32
    %v2556 = vpop.permute.xlu0 %2555
    %v2558 = vmul.f32 %v2553, %v2556
    %v2559 = vsub.f32 1.0, %v2553
    %v2560 = vmul.f32 %v2559, %v2475
    %v2561 = vadd.f32 %v2558, %v2560
    %2563 = vrot.lane.b32.xlu0 %v2546, 96
    %v2564 = vpop.permute.xlu0 %2563
    %v2566 = vmul.f32 %v2553, %v2564
    %v2567 = vmul.f32 %v2559, %v2481
    %v2568 = vadd.f32 %v2566, %v2567
    %2570 = vrot.lane.b32.xlu0 %v2558, 32
    %v2571 = vpop.permute.xlu0 %2570
    %2573 = vst.msk [vmem:[#allocation3 + $0x30] sm:$0xff] %vm1000, %v2571
    %v2574 = vld [vmem:[#allocation2 + $0x58] sm:$0xff]
    %v2576 = vsel %vm142, %v2561, 0
    %2578 = vmatpush.msra.mxu0 0.0
    %2579 = vmatpush.msra.mxu0 0.0
    %2580 = vmatpush.msra.mxu0 0.0
    %2581 = vmatpush.msra.mxu0 0.0
    %2582 = vmatpush.msra.mxu0 0.0
    %2583 = vmatpush.msra.mxu0 0.0
    %2584 = vmatpush.msra.mxu0 0.0
    %2585 = vmatpush.msra.mxu0 0.0
    %2586 = vmatpush.msra.mxu0 0.0
    %2587 = vmatpush.msra.mxu0 0.0
    %2588 = vmatpush.msra.mxu0 0.0
    %2589 = vmatpush.msra.mxu0 0.0
    %2590 = vmatpush.msra.mxu0 %v2407
    %2591 = vmatpush.msra.mxu0 %v2406
    %2592 = vmatpush.msra.mxu0 %v2405
    %2593 = vmatpush.msra.mxu0 %v2404
    %2594 = vmatmul.f32.gmra.mxu0 %v2576
    %v2595 = vpop.f32.mrf.mxu0
    %v2596 = vadd.f32 0.0, %v2595
    %2597 = vdwg.mxu0
    %v2598 = vadd.f32 %v2574, %v2596
    %v2599 = vxor.u32 %v2598, 2147483648
    %v2600 = vmul.f32 %v2599, 1.442695
    %v2601 = vpow.pop %v2600
    %v2602 = vadd.f32 %v2601, 1.0
    %v2603 = vrcp.pop %v2602
    %v2604 = vmul.f32 %v2602, %v2603
    %v2605 = vsub.f32 1.0, %v2604
    %v2606 = vmul.f32 %v2603, %v2605
    %v2607 = vadd.f32 %v2603, %v2606
    %vm2608 = vweird.f32 %v2602
    %vm2609 = vweird.f32 %v2603
    %vm2610 = vmor %vm2608, %vm2609
    %v2611 = vsel %vm2610, %v2603, %v2607
    %v2612 = vand.u32 2147483647, %v2602
    %vm2613 = vcmp.eq.f32.partialorder %v2612, 8.507059e+37
    %v2614 = vand.u32 %v2602, 2147483648
    %v2615 = vor.u32 1.1754944e-38, %v2614
    %v2616 = vsel %vm2613, %v2615, %v2611
    %v2617 = vmul.f32 1.0, %v2616
    %v2618 = vtanh.pop %v2598
    %2620 = vrot.lane.b32.xlu0 %v2568, 32
    %v2621 = vpop.permute.xlu0 %2620
    %v2623 = vmul.f32 %v2617, %v2621
    %2625 = vrot.lane.b32.xlu0 %v2618, 64
    %v2626 = vpop.permute.xlu0 %2625
    %v2628 = vmul.f32 %v2617, %v2626
    %2630 = vrot.lane.b32.xlu0 %v2628, 32
    %v2631 = vpop.permute.xlu0 %2630
    %v2633 = vadd.f32 %v2623, %v2631
    %v2634 = vtanh.pop %v2633
    %2636 = vrot.lane.b32.xlu0 %v2634, 64
    %v2637 = vpop.permute.xlu0 %2636
    %v2639 = vmul.f32 %v2617, %v2637
    %v2640 = vld [vmem:[%s1 + $0x28] sm:$0xff]
    %2642 = vrot.lane.b32.xlu0 %v2639, 32
    %v2643 = vpop.permute.xlu0 %2642
    %v2645 = vmul.f32 %v2640, %v2643
    %v2646 = vsub.f32 1.0, %v2640
    %v2647 = vmul.f32 %v2646, %v2561
    %v2648 = vadd.f32 %v2645, %v2647
    %2650 = vrot.lane.b32.xlu0 %v2633, 96
    %v2651 = vpop.permute.xlu0 %2650
    %v2653 = vmul.f32 %v2640, %v2651
    %v2654 = vmul.f32 %v2646, %v2568
    %v2655 = vadd.f32 %v2653, %v2654
    %2657 = vrot.lane.b32.xlu0 %v2645, 32
    %v2658 = vpop.permute.xlu0 %2657
    %2660 = vst.msk [vmem:[#allocation3 + $0x28] sm:$0xff] %vm1000, %v2658
    %v2661 = vld [vmem:[#allocation2 + $0x48] sm:$0xff]
    %v2663 = vsel %vm142, %v2648, 0
    %2665 = vmatpush.msra.mxu0 0.0
    %2666 = vmatpush.msra.mxu0 0.0
    %2667 = vmatpush.msra.mxu0 0.0
    %2668 = vmatpush.msra.mxu0 0.0
    %2669 = vmatpush.msra.mxu0 0.0
    %2670 = vmatpush.msra.mxu0 0.0
    %2671 = vmatpush.msra.mxu0 0.0
    %2672 = vmatpush.msra.mxu0 0.0
    %2673 = vmatpush.msra.mxu0 0.0
    %2674 = vmatpush.msra.mxu0 0.0
    %2675 = vmatpush.msra.mxu0 0.0
    %2676 = vmatpush.msra.mxu0 0.0
    %2677 = vmatpush.msra.mxu0 %v2407
    %2678 = vmatpush.msra.mxu0 %v2406
    %2679 = vmatpush.msra.mxu0 %v2405
    %2680 = vmatpush.msra.mxu0 %v2404
    %2681 = vmatmul.f32.gmra.mxu0 %v2663
    %v2682 = vpop.f32.mrf.mxu0
    %v2683 = vadd.f32 0.0, %v2682
    %2684 = vdwg.mxu0
    %v2685 = vadd.f32 %v2661, %v2683
    %v2686 = vxor.u32 %v2685, 2147483648
    %v2687 = vmul.f32 %v2686, 1.442695
    %v2688 = vpow.pop %v2687
    %v2689 = vadd.f32 %v2688, 1.0
    %v2690 = vrcp.pop %v2689
    %v2691 = vmul.f32 %v2689, %v2690
    %v2692 = vsub.f32 1.0, %v2691
    %v2693 = vmul.f32 %v2690, %v2692
    %v2694 = vadd.f32 %v2690, %v2693
    %vm2695 = vweird.f32 %v2689
    %vm2696 = vweird.f32 %v2690
    %vm2697 = vmor %vm2695, %vm2696
    %v2698 = vsel %vm2697, %v2690, %v2694
    %v2699 = vand.u32 2147483647, %v2689
    %vm2700 = vcmp.eq.f32.partialorder %v2699, 8.507059e+37
    %v2701 = vand.u32 %v2689, 2147483648
    %v2702 = vor.u32 1.1754944e-38, %v2701
    %v2703 = vsel %vm2700, %v2702, %v2698
    %v2704 = vmul.f32 1.0, %v2703
    %v2705 = vtanh.pop %v2685
    %2707 = vrot.lane.b32.xlu0 %v2655, 32
    %v2708 = vpop.permute.xlu0 %2707
    %v2710 = vmul.f32 %v2704, %v2708
    %2712 = vrot.lane.b32.xlu0 %v2705, 64
    %v2713 = vpop.permute.xlu0 %2712
    %v2715 = vmul.f32 %v2704, %v2713
    %2717 = vrot.lane.b32.xlu0 %v2715, 32
    %v2718 = vpop.permute.xlu0 %2717
    %v2720 = vadd.f32 %v2710, %v2718
    %v2721 = vtanh.pop %v2720
    %2723 = vrot.lane.b32.xlu0 %v2721, 64
    %v2724 = vpop.permute.xlu0 %2723
    %v2726 = vmul.f32 %v2704, %v2724
    %v2727 = vld [vmem:[%s1 + $0x20] sm:$0xff]
    %2729 = vrot.lane.b32.xlu0 %v2726, 32
    %v2730 = vpop.permute.xlu0 %2729
    %v2732 = vmul.f32 %v2727, %v2730
    %v2733 = vsub.f32 1.0, %v2727
    %v2734 = vmul.f32 %v2733, %v2648
    %v2735 = vadd.f32 %v2732, %v2734
    %2737 = vrot.lane.b32.xlu0 %v2720, 96
    %v2738 = vpop.permute.xlu0 %2737
    %v2740 = vmul.f32 %v2727, %v2738
    %v2741 = vmul.f32 %v2733, %v2655
    %v2742 = vadd.f32 %v2740, %v2741
    %2744 = vrot.lane.b32.xlu0 %v2732, 32
    %v2745 = vpop.permute.xlu0 %2744
    %2747 = vst.msk [vmem:[#allocation3 + $0x20] sm:$0xff] %vm1000, %v2745
    %v2748 = vld [vmem:[#allocation2 + $0x38] sm:$0xff]
    %v2750 = vsel %vm142, %v2735, 0
    %2752 = vmatpush.msra.mxu0 0.0
    %2753 = vmatpush.msra.mxu0 0.0
    %2754 = vmatpush.msra.mxu0 0.0
    %2755 = vmatpush.msra.mxu0 0.0
    %2756 = vmatpush.msra.mxu0 0.0
    %2757 = vmatpush.msra.mxu0 0.0
    %2758 = vmatpush.msra.mxu0 0.0
    %2759 = vmatpush.msra.mxu0 0.0
    %2760 = vmatpush.msra.mxu0 0.0
    %2761 = vmatpush.msra.mxu0 0.0
    %2762 = vmatpush.msra.mxu0 0.0
    %2763 = vmatpush.msra.mxu0 0.0
    %2764 = vmatpush.msra.mxu0 %v2407
    %2765 = vmatpush.msra.mxu0 %v2406
    %2766 = vmatpush.msra.mxu0 %v2405
    %2767 = vmatpush.msra.mxu0 %v2404
    %2768 = vmatmul.f32.gmra.mxu0 %v2750
    %v2769 = vpop.f32.mrf.mxu0
    %v2770 = vadd.f32 0.0, %v2769
    %2771 = vdwg.mxu0
    %v2772 = vadd.f32 %v2748, %v2770
    %v2773 = vxor.u32 %v2772, 2147483648
    %v2774 = vmul.f32 %v2773, 1.442695
    %v2775 = vpow.pop %v2774
    %v2776 = vadd.f32 %v2775, 1.0
    %v2777 = vrcp.pop %v2776
    %v2778 = vmul.f32 %v2776, %v2777
    %v2779 = vsub.f32 1.0, %v2778
    %v2780 = vmul.f32 %v2777, %v2779
    %v2781 = vadd.f32 %v2777, %v2780
    %vm2782 = vweird.f32 %v2776
    %vm2783 = vweird.f32 %v2777
    %vm2784 = vmor %vm2782, %vm2783
    %v2785 = vsel %vm2784, %v2777, %v2781
    %v2786 = vand.u32 2147483647, %v2776
    %vm2787 = vcmp.eq.f32.partialorder %v2786, 8.507059e+37
    %v2788 = vand.u32 %v2776, 2147483648
    %v2789 = vor.u32 1.1754944e-38, %v2788
    %v2790 = vsel %vm2787, %v2789, %v2785
    %v2791 = vmul.f32 1.0, %v2790
    %v2792 = vtanh.pop %v2772
    %2794 = vrot.lane.b32.xlu0 %v2742, 32
    %v2795 = vpop.permute.xlu0 %2794
    %v2797 = vmul.f32 %v2791, %v2795
    %2799 = vrot.lane.b32.xlu0 %v2792, 64
    %v2800 = vpop.permute.xlu0 %2799
    %v2802 = vmul.f32 %v2791, %v2800
    %2804 = vrot.lane.b32.xlu0 %v2802, 32
    %v2805 = vpop.permute.xlu0 %2804
    %v2807 = vadd.f32 %v2797, %v2805
    %v2808 = vtanh.pop %v2807
    %2810 = vrot.lane.b32.xlu0 %v2808, 64
    %v2811 = vpop.permute.xlu0 %2810
    %v2813 = vmul.f32 %v2791, %v2811
    %v2814 = vld [vmem:[%s1 + $0x18] sm:$0xff]
    %2816 = vrot.lane.b32.xlu0 %v2813, 32
    %v2817 = vpop.permute.xlu0 %2816
    %v2819 = vmul.f32 %v2814, %v2817
    %v2820 = vsub.f32 1.0, %v2814
    %v2821 = vmul.f32 %v2820, %v2735
    %v2822 = vadd.f32 %v2819, %v2821
    %2824 = vrot.lane.b32.xlu0 %v2807, 96
    %v2825 = vpop.permute.xlu0 %2824
    %v2827 = vmul.f32 %v2814, %v2825
    %v2828 = vmul.f32 %v2820, %v2742
    %v2829 = vadd.f32 %v2827, %v2828
    %2831 = vrot.lane.b32.xlu0 %v2819, 32
    %v2832 = vpop.permute.xlu0 %2831
    %2834 = vst.msk [vmem:[#allocation3 + $0x18] sm:$0xff] %vm1000, %v2832
    %v2835 = vld [vmem:[#allocation2 + $0x28] sm:$0xff]
    %v2837 = vsel %vm142, %v2822, 0
    %2839 = vmatpush.msra.mxu0 0.0
    %2840 = vmatpush.msra.mxu0 0.0
    %2841 = vmatpush.msra.mxu0 0.0
    %2842 = vmatpush.msra.mxu0 0.0
    %2843 = vmatpush.msra.mxu0 0.0
    %2844 = vmatpush.msra.mxu0 0.0
    %2845 = vmatpush.msra.mxu0 0.0
    %2846 = vmatpush.msra.mxu0 0.0
    %2847 = vmatpush.msra.mxu0 0.0
    %2848 = vmatpush.msra.mxu0 0.0
    %2849 = vmatpush.msra.mxu0 0.0
    %2850 = vmatpush.msra.mxu0 0.0
    %2851 = vmatpush.msra.mxu0 %v2407
    %2852 = vmatpush.msra.mxu0 %v2406
    %2853 = vmatpush.msra.mxu0 %v2405
    %2854 = vmatpush.msra.mxu0 %v2404
    %2855 = vmatmul.f32.gmra.mxu0 %v2837
    %v2856 = vpop.f32.mrf.mxu0
    %v2857 = vadd.f32 0.0, %v2856
    %2858 = vdwg.mxu0
    %v2859 = vadd.f32 %v2835, %v2857
    %v2860 = vxor.u32 %v2859, 2147483648
    %v2861 = vmul.f32 %v2860, 1.442695
    %v2862 = vpow.pop %v2861
    %v2863 = vadd.f32 %v2862, 1.0
    %v2864 = vrcp.pop %v2863
    %v2865 = vmul.f32 %v2863, %v2864
    %v2866 = vsub.f32 1.0, %v2865
    %v2867 = vmul.f32 %v2864, %v2866
    %v2868 = vadd.f32 %v2864, %v2867
    %vm2869 = vweird.f32 %v2863
    %vm2870 = vweird.f32 %v2864
    %vm2871 = vmor %vm2869, %vm2870
    %v2872 = vsel %vm2871, %v2864, %v2868
    %v2873 = vand.u32 2147483647, %v2863
    %vm2874 = vcmp.eq.f32.partialorder %v2873, 8.507059e+37
    %v2875 = vand.u32 %v2863, 2147483648
    %v2876 = vor.u32 1.1754944e-38, %v2875
    %v2877 = vsel %vm2874, %v2876, %v2872
    %v2878 = vmul.f32 1.0, %v2877
    %v2879 = vtanh.pop %v2859
    %2881 = vrot.lane.b32.xlu0 %v2829, 32
    %v2882 = vpop.permute.xlu0 %2881
    %v2884 = vmul.f32 %v2878, %v2882
    %2886 = vrot.lane.b32.xlu0 %v2879, 64
    %v2887 = vpop.permute.xlu0 %2886
    %v2889 = vmul.f32 %v2878, %v2887
    %2891 = vrot.lane.b32.xlu0 %v2889, 32
    %v2892 = vpop.permute.xlu0 %2891
    %v2894 = vadd.f32 %v2884, %v2892
    %v2895 = vtanh.pop %v2894
    %2897 = vrot.lane.b32.xlu0 %v2895, 64
    %v2898 = vpop.permute.xlu0 %2897
    %v2900 = vmul.f32 %v2878, %v2898
    %v2901 = vld [vmem:[%s1 + $0x10] sm:$0xff]
    %2903 = vrot.lane.b32.xlu0 %v2900, 32
    %v2904 = vpop.permute.xlu0 %2903
    %v2906 = vmul.f32 %v2901, %v2904
    %v2907 = vsub.f32 1.0, %v2901
    %v2908 = vmul.f32 %v2907, %v2822
    %v2909 = vadd.f32 %v2906, %v2908
    %2911 = vrot.lane.b32.xlu0 %v2894, 96
    %v2912 = vpop.permute.xlu0 %2911
    %v2914 = vmul.f32 %v2901, %v2912
    %v2915 = vmul.f32 %v2907, %v2829
    %v2916 = vadd.f32 %v2914, %v2915
    %2918 = vrot.lane.b32.xlu0 %v2906, 32
    %v2919 = vpop.permute.xlu0 %2918
    %2921 = vst.msk [vmem:[#allocation3 + $0x10] sm:$0xff] %vm1000, %v2919
    %v2922 = vld [vmem:[#allocation2 + $0x18] sm:$0xff]
    %v2924 = vsel %vm142, %v2909, 0
    %2926 = vmatpush.msra.mxu0 0.0
    %2927 = vmatpush.msra.mxu0 0.0
    %2928 = vmatpush.msra.mxu0 0.0
    %2929 = vmatpush.msra.mxu0 0.0
    %2930 = vmatpush.msra.mxu0 0.0
    %2931 = vmatpush.msra.mxu0 0.0
    %2932 = vmatpush.msra.mxu0 0.0
    %2933 = vmatpush.msra.mxu0 0.0
    %2934 = vmatpush.msra.mxu0 0.0
    %2935 = vmatpush.msra.mxu0 0.0
    %2936 = vmatpush.msra.mxu0 0.0
    %2937 = vmatpush.msra.mxu0 0.0
    %2938 = vmatpush.msra.mxu0 %v2407
    %2939 = vmatpush.msra.mxu0 %v2406
    %2940 = vmatpush.msra.mxu0 %v2405
    %2941 = vmatpush.msra.mxu0 %v2404
    %2942 = vmatmul.f32.gmra.mxu0 %v2924
    %v2943 = vpop.f32.mrf.mxu0
    %v2944 = vadd.f32 0.0, %v2943
    %2945 = vdwg.mxu0
    %v2946 = vadd.f32 %v2922, %v2944
    %v2947 = vxor.u32 %v2946, 2147483648
    %v2948 = vmul.f32 %v2947, 1.442695
    %v2949 = vpow.pop %v2948
    %v2950 = vadd.f32 %v2949, 1.0
    %v2951 = vrcp.pop %v2950
    %v2952 = vmul.f32 %v2950, %v2951
    %v2953 = vsub.f32 1.0, %v2952
    %v2954 = vmul.f32 %v2951, %v2953
    %v2955 = vadd.f32 %v2951, %v2954
    %vm2956 = vweird.f32 %v2950
    %vm2957 = vweird.f32 %v2951
    %vm2958 = vmor %vm2956, %vm2957
    %v2959 = vsel %vm2958, %v2951, %v2955
    %v2960 = vand.u32 2147483647, %v2950
    %vm2961 = vcmp.eq.f32.partialorder %v2960, 8.507059e+37
    %v2962 = vand.u32 %v2950, 2147483648
    %v2963 = vor.u32 1.1754944e-38, %v2962
    %v2964 = vsel %vm2961, %v2963, %v2959
    %v2965 = vmul.f32 1.0, %v2964
    %v2966 = vtanh.pop %v2946
    %2968 = vrot.lane.b32.xlu0 %v2916, 32
    %v2969 = vpop.permute.xlu0 %2968
    %v2971 = vmul.f32 %v2965, %v2969
    %2973 = vrot.lane.b32.xlu0 %v2966, 64
    %v2974 = vpop.permute.xlu0 %2973
    %v2976 = vmul.f32 %v2965, %v2974
    %2978 = vrot.lane.b32.xlu0 %v2976, 32
    %v2979 = vpop.permute.xlu0 %2978
    %v2981 = vadd.f32 %v2971, %v2979
    %v2982 = vtanh.pop %v2981
    %2984 = vrot.lane.b32.xlu0 %v2982, 64
    %v2985 = vpop.permute.xlu0 %2984
    %v2987 = vmul.f32 %v2965, %v2985
    %v2988 = vld [vmem:[%s1 + $0x8] sm:$0xff]
    %2990 = vrot.lane.b32.xlu0 %v2987, 32
    %v2991 = vpop.permute.xlu0 %2990
    %v2993 = vmul.f32 %v2988, %v2991
    %v2994 = vsub.f32 1.0, %v2988
    %v2995 = vmul.f32 %v2994, %v2909
    %v2996 = vadd.f32 %v2993, %v2995
    %2998 = vrot.lane.b32.xlu0 %v2981, 96
    %v2999 = vpop.permute.xlu0 %2998
    %v3001 = vmul.f32 %v2988, %v2999
    %v3002 = vmul.f32 %v2994, %v2916
    %v3003 = vadd.f32 %v3001, %v3002
    %3005 = vrot.lane.b32.xlu0 %v2993, 32
    %v3006 = vpop.permute.xlu0 %3005
    %3008 = vst.msk [vmem:[#allocation3 + $0x8] sm:$0xff] %vm1000, %v3006
    %v3009 = vld [vmem:[#allocation2 + $0x8] sm:$0xff]
    %v3011 = vsel %vm142, %v2996, 0
    %3013 = vmatpush.msra.mxu0 0.0
    %3014 = vmatpush.msra.mxu0 0.0
    %3015 = vmatpush.msra.mxu0 0.0
    %3016 = vmatpush.msra.mxu0 0.0
    %3017 = vmatpush.msra.mxu0 0.0
    %3018 = vmatpush.msra.mxu0 0.0
    %3019 = vmatpush.msra.mxu0 0.0
    %3020 = vmatpush.msra.mxu0 0.0
    %3021 = vmatpush.msra.mxu0 0.0
    %3022 = vmatpush.msra.mxu0 0.0
    %3023 = vmatpush.msra.mxu0 0.0
    %3024 = vmatpush.msra.mxu0 0.0
    %3025 = vmatpush.msra.mxu0 %v2407
    %3026 = vmatpush.msra.mxu0 %v2406
    %3027 = vmatpush.msra.mxu0 %v2405
    %3028 = vmatpush.msra.mxu0 %v2404
    %3029 = vmatmul.f32.gmra.mxu0 %v3011
    %v3030 = vpop.f32.mrf.mxu0
    %v3031 = vadd.f32 0.0, %v3030
    %3032 = vdwg.mxu0
    %v3033 = vadd.f32 %v3009, %v3031
    %v3034 = vxor.u32 %v3033, 2147483648
    %v3035 = vmul.f32 %v3034, 1.442695
    %v3036 = vpow.pop %v3035
    %v3037 = vadd.f32 %v3036, 1.0
    %v3038 = vrcp.pop %v3037
    %v3039 = vmul.f32 %v3037, %v3038
    %v3040 = vsub.f32 1.0, %v3039
    %v3041 = vmul.f32 %v3038, %v3040
    %v3042 = vadd.f32 %v3038, %v3041
    %vm3043 = vweird.f32 %v3037
    %vm3044 = vweird.f32 %v3038
    %vm3045 = vmor %vm3043, %vm3044
    %v3046 = vsel %vm3045, %v3038, %v3042
    %v3047 = vand.u32 2147483647, %v3037
    %vm3048 = vcmp.eq.f32.partialorder %v3047, 8.507059e+37
    %v3049 = vand.u32 %v3037, 2147483648
    %v3050 = vor.u32 1.1754944e-38, %v3049
    %v3051 = vsel %vm3048, %v3050, %v3046
    %v3052 = vmul.f32 1.0, %v3051
    %v3053 = vtanh.pop %v3033
    %3055 = vrot.lane.b32.xlu0 %v3003, 32
    %v3056 = vpop.permute.xlu0 %3055
    %v3058 = vmul.f32 %v3052, %v3056
    %3060 = vrot.lane.b32.xlu0 %v3053, 64
    %v3061 = vpop.permute.xlu0 %3060
    %v3063 = vmul.f32 %v3052, %v3061
    %3065 = vrot.lane.b32.xlu0 %v3063, 32
    %v3066 = vpop.permute.xlu0 %3065
    %v3068 = vadd.f32 %v3058, %v3066
    %v3069 = vtanh.pop %v3068
    %3071 = vrot.lane.b32.xlu0 %v3069, 64
    %v3072 = vpop.permute.xlu0 %3071
    %v3074 = vmul.f32 %v3052, %v3072
    %v3075 = vld [vmem:[%s1] sm:$0xff]
    %3077 = vrot.lane.b32.xlu0 %v3074, 32
    %v3078 = vpop.permute.xlu0 %3077
    %v3080 = vmul.f32 %v3075, %v3078
    %3082 = vrot.lane.b32.xlu0 %v3080, 32
    %v3083 = vpop.permute.xlu0 %3082
    %3085 = vst.msk [vmem:[#allocation3] sm:$0xff] %vm1000, %v3083
    %v3086 = vld [vmem:[#allocation3] sm:$0xff]
    %v3087 = vld [vmem:[#allocation3 + $0x8] sm:$0xff]
    %v3088 = vld [vmem:[#allocation3 + $0x10] sm:$0xff]
    %v3089 = vld [vmem:[#allocation3 + $0x18] sm:$0xff]
    %v3090 = vld [vmem:[#allocation3 + $0x20] sm:$0xff]
    %v3091 = vld [vmem:[#allocation3 + $0x28] sm:$0xff]
    %v3092 = vld [vmem:[#allocation3 + $0x30] sm:$0xff]
    %v3093 = vld [vmem:[#allocation3 + $0x38] sm:$0xff]
    %v3094 = vld [vmem:[#allocation12] sm:$0xff]
    %v3095 = vld [vmem:[#allocation12 + $0x8] sm:$0xff]
    %v3096 = vld [vmem:[#allocation12 + $0x10] sm:$0xff]
    %v3097 = vld [vmem:[#allocation12 + $0x18] sm:$0xff]
    %v3098 = vld [vmem:[#allocation12 + $0x20] sm:$0xff]
    %v3099 = vld [vmem:[#allocation12 + $0x28] sm:$0xff]
    %v3100 = vld [vmem:[#allocation12 + $0x30] sm:$0xff]
    %v3101 = vld [vmem:[#allocation12 + $0x38] sm:$0xff]
    %v3102 = vld [vmem:[%s11] sm:$0x1]
    %v3104 = vperm.slane %v3102, 0
    %v3107 = vsel %vm1631, %v3086, 0
    %v3110 = vsel %vm1631, %v3087, 0
    %v3113 = vsel %vm1631, %v3088, 0
    %v3116 = vsel %vm1631, %v3089, 0
    %v3119 = vsel %vm1631, %v3090, 0
    %v3122 = vsel %vm1631, %v3091, 0
    %v3125 = vsel %vm1631, %v3092, 0
    %v3128 = vsel %vm1631, %v3093, 0
    %3130 = vmatpush.msra.mxu0 0.0
    %3131 = vmatpush.msra.mxu0 0.0
    %3132 = vmatpush.msra.mxu0 0.0
    %3133 = vmatpush.msra.mxu0 0.0
    %3134 = vmatpush.msra.mxu0 0.0
    %3135 = vmatpush.msra.mxu0 0.0
    %3136 = vmatpush.msra.mxu0 0.0
    %3137 = vmatpush.msra.mxu0 0.0
    %3138 = vmatpush.msra.mxu0 %v3101
    %3139 = vmatpush.msra.mxu0 %v3100
    %3140 = vmatpush.msra.mxu0 %v3099
    %3141 = vmatpush.msra.mxu0 %v3098
    %3142 = vmatpush.msra.mxu0 %v3097
    %3143 = vmatpush.msra.mxu0 %v3096
    %3144 = vmatpush.msra.mxu0 %v3095
    %3145 = vmatpush.msra.mxu0 %v3094
    %3146 = vmatmul.f32.gmra.mxu0 %v3107
    %v3147 = vpop.f32.mrf.mxu0
    %v3148 = vadd.f32 %v3104, %v3147
    %3149 = vmatmul.f32.gmra.mxu0 %v3110
    %v3150 = vpop.f32.mrf.mxu0
    %v3151 = vadd.f32 %v3104, %v3150
    %3152 = vmatmul.f32.gmra.mxu0 %v3113
    %v3153 = vpop.f32.mrf.mxu0
    %v3154 = vadd.f32 %v3104, %v3153
    %3155 = vmatmul.f32.gmra.mxu0 %v3116
    %v3156 = vpop.f32.mrf.mxu0
    %v3157 = vadd.f32 %v3104, %v3156
    %3158 = vmatmul.f32.gmra.mxu0 %v3119
    %v3159 = vpop.f32.mrf.mxu0
    %v3160 = vadd.f32 %v3104, %v3159
    %3161 = vmatmul.f32.gmra.mxu0 %v3122
    %v3162 = vpop.f32.mrf.mxu0
    %v3163 = vadd.f32 %v3104, %v3162
    %3164 = vmatmul.f32.gmra.mxu0 %v3125
    %v3165 = vpop.f32.mrf.mxu0
    %v3166 = vadd.f32 %v3104, %v3165
    %3167 = vmatmul.f32.gmra.mxu0 %v3128
    %v3168 = vpop.f32.mrf.mxu0
    %v3169 = vadd.f32 %v3104, %v3168
    %3170 = vdwg.mxu0
    %3171 = vmax.xlane.f32.xlu0 %v3148
    %v3172 = vpop.xlane.xlu0 %3171
    %3173 = vmax.xlane.f32.xlu0 %v3151
    %v3174 = vpop.xlane.xlu0 %3173
    %3175 = vmax.xlane.f32.xlu0 %v3154
    %v3176 = vpop.xlane.xlu0 %3175
    %3177 = vmax.xlane.f32.xlu0 %v3157
    %v3178 = vpop.xlane.xlu0 %3177
    %3179 = vmax.xlane.f32.xlu0 %v3160
    %v3180 = vpop.xlane.xlu0 %3179
    %3181 = vmax.xlane.f32.xlu0 %v3163
    %v3182 = vpop.xlane.xlu0 %3181
    %3183 = vmax.xlane.f32.xlu0 %v3166
    %v3184 = vpop.xlane.xlu0 %3183
    %3185 = vmax.xlane.f32.xlu0 %v3169
    %v3186 = vpop.xlane.xlu0 %3185
    %v3187 = vsub.f32 %v3148, %v3172
    %v3188 = vsub.f32 %v3151, %v3174
    %v3189 = vsub.f32 %v3154, %v3176
    %v3190 = vsub.f32 %v3157, %v3178
    %v3191 = vsub.f32 %v3160, %v3180
    %v3192 = vsub.f32 %v3163, %v3182
    %v3193 = vsub.f32 %v3166, %v3184
    %v3194 = vsub.f32 %v3169, %v3186
    %v3195 = vmul.f32 %v3187, 1.442695
    %v3196 = vpow.pop %v3195
    %v3197 = vmul.f32 %v3188, 1.442695
    %v3198 = vpow.pop %v3197
    %v3199 = vmul.f32 %v3189, 1.442695
    %v3200 = vpow.pop %v3199
    %v3201 = vmul.f32 %v3190, 1.442695
    %v3202 = vpow.pop %v3201
    %v3203 = vmul.f32 %v3191, 1.442695
    %v3204 = vpow.pop %v3203
    %v3205 = vmul.f32 %v3192, 1.442695
    %v3206 = vpow.pop %v3205
    %v3207 = vmul.f32 %v3193, 1.442695
    %v3208 = vpow.pop %v3207
    %v3209 = vmul.f32 %v3194, 1.442695
    %v3210 = vpow.pop %v3209
    %3211 = vadd.xlane.f32.xlu0 %v3196
    %v3212 = vpop.xlane.xlu0 %3211
    %3213 = vadd.xlane.f32.xlu0 %v3198
    %v3214 = vpop.xlane.xlu0 %3213
    %3215 = vadd.xlane.f32.xlu0 %v3200
    %v3216 = vpop.xlane.xlu0 %3215
    %3217 = vadd.xlane.f32.xlu0 %v3202
    %v3218 = vpop.xlane.xlu0 %3217
    %3219 = vadd.xlane.f32.xlu0 %v3204
    %v3220 = vpop.xlane.xlu0 %3219
    %3221 = vadd.xlane.f32.xlu0 %v3206
    %v3222 = vpop.xlane.xlu0 %3221
    %3223 = vadd.xlane.f32.xlu0 %v3208
    %v3224 = vpop.xlane.xlu0 %3223
    %3225 = vadd.xlane.f32.xlu0 %v3210
    %v3226 = vpop.xlane.xlu0 %3225
    %v3227 = vlog2.pop %v3212
    %v3228 = vmul.f32 %v3227, 0.6931472
    %v3229 = vlog2.pop %v3214
    %v3230 = vmul.f32 %v3229, 0.6931472
    %v3231 = vlog2.pop %v3216
    %v3232 = vmul.f32 %v3231, 0.6931472
    %v3233 = vlog2.pop %v3218
    %v3234 = vmul.f32 %v3233, 0.6931472
    %v3235 = vlog2.pop %v3220
    %v3236 = vmul.f32 %v3235, 0.6931472
    %v3237 = vlog2.pop %v3222
    %v3238 = vmul.f32 %v3237, 0.6931472
    %v3239 = vlog2.pop %v3224
    %v3240 = vmul.f32 %v3239, 0.6931472
    %v3241 = vlog2.pop %v3226
    %v3242 = vmul.f32 %v3241, 0.6931472
    %v3243 = vadd.f32 %v3228, %v3172
    %v3244 = vadd.f32 %v3230, %v3174
    %v3245 = vadd.f32 %v3232, %v3176
    %v3246 = vadd.f32 %v3234, %v3178
    %v3247 = vadd.f32 %v3236, %v3180
    %v3248 = vadd.f32 %v3238, %v3182
    %v3249 = vadd.f32 %v3240, %v3184
    %v3250 = vadd.f32 %v3242, %v3186
    %v3251 = vsub.f32 %v3148, %v3243
    %v3252 = vsub.f32 %v3151, %v3244
    %v3253 = vsub.f32 %v3154, %v3245
    %v3254 = vsub.f32 %v3157, %v3246
    %v3255 = vsub.f32 %v3160, %v3247
    %v3256 = vsub.f32 %v3163, %v3248
    %v3257 = vsub.f32 %v3166, %v3249
    %v3258 = vsub.f32 %v3169, %v3250
    %3259 = vst [vmem:[#allocation13] sm:$0xff] %v3251
    %3260 = vst [vmem:[#allocation13 + $0x8] sm:$0xff] %v3252
    %3261 = vst [vmem:[#allocation13 + $0x10] sm:$0xff] %v3253
    %3262 = vst [vmem:[#allocation13 + $0x18] sm:$0xff] %v3254
    %3263 = vst [vmem:[#allocation13 + $0x20] sm:$0xff] %v3255
    %3264 = vst [vmem:[#allocation13 + $0x28] sm:$0xff] %v3256
    %3265 = vst [vmem:[#allocation13 + $0x30] sm:$0xff] %v3257
    %3266 = vst [vmem:[#allocation13 + $0x38] sm:$0xff] %v3258
    // Predicated region
    $region70: #{tpu_custom_call.1} parent=1 // pred_check
      _
    $region71: #{tpu_custom_call.1} parent=1 // pred_check_branch
      %3268 = sbr.rel (0) target = $region73
    $region72: #{tpu_custom_call.1} parent=1 // pred_region
      %3270 = vsyncadd [#allocation6], 0
      %s3271 = sshll.u32 [#allocation13], 4
      %s3272 = int_to_ptr.vmem [resolvable:$true] %s3271
      %s3273 = sshll.u32 %s12, 4
      %s3274 = int_to_ptr.hbm [resolvable:$true] %s3273
      %3279 = dma.vmem_to_hbm [thread:$0]  %s3272, 1024, %s3274, [#allocation6], 128, 128, 8
    $region73: #{tpu_custom_call.1} parent=1 // pred_fallthru
      _
    // Predicated region
    $region74: #{tpu_custom_call.1} parent=1 // pred_check
      _
    $region75: #{tpu_custom_call.1} parent=1 // pred_check_branch
      %3281 = sbr.rel (0) target = $region77
    $region76: #{tpu_custom_call.1} parent=1 // pred_region
      %3283 = dma.done [#allocation6], 1024
    $region77: #{tpu_custom_call.1} parent=1 // pred_fallthru
      _
    %3284 = vsyncpa [#allocation5], 1
    %3285 = vsyncpa [#allocation8], 1
    %3286 = vsyncpa [#allocation11], 1
    %3287 = vsyncpa [#allocation6], 1

</llo_original>
